<compile_context>
chip_gen: v7x
topology: tpu7x:2x2x1
jax: 0.10.0
libtpu: 0.0.40
codegen_flags: <defaults>
</compile_context>

<pallas_src>
import jax
import jax.numpy as jnp
import numpy as np
from jax.experimental import pallas as pl
from jax.experimental.pallas import tpu as pltpu

# Pin f32 matmul precision so the XLA reference and the Mosaic kernel agree to ~1e-5.
jax.config.update("jax_default_matmul_precision", "highest")

# ---- model dimensions ----
B_TOTAL = 16          # folded clips x per-clip batch (amortizes pallas_call / DMA overhead)
C, T, H, W = 3, 16, 8, 8
D = 32                # SSM hidden width
S = 8                 # wavelet scales for the PRV module
BB = 8                # samples per grid step -> per-time-step slices are sublane aligned

# packed-parameter slab row offsets
_R_WDT = 0
_R_WG = D
_R_BDT = 2 * D
_R_A = 2 * D + 1
_R_WO = 2 * D + 2
P_ROWS = 2 * D + 8    # padded to a sublane multiple (rows 67..71 unused)


def physmamba_prv_kernel(u_ref, p_ref, wav_ref, out_ref):
    """One grid step = BB samples x T frames.  u rows are time-major: row = t*BB + b."""
    u = u_ref[...]                                                       # (T*BB, D)

    # Packed params: static ref slices are free (pure address offsets).
    wdt = p_ref[_R_WDT:_R_WDT + D, :]                                    # (D, D)
    wg = p_ref[_R_WG:_R_WG + D, :]                                       # (D, D)
    bdt = p_ref[_R_BDT:_R_BDT + 1, :]                                    # (1, D)
    a_neg = p_ref[_R_A:_R_A + 1, :]                                      # (1, D)  = -exp(a_log)
    wo = p_ref[_R_WO:_R_WO + 1, :]                                       # (1, D)

    # Selective projections: two small dots (MXU is otherwise idle; no lane slicing needed).
    delta = jax.nn.softplus(jnp.dot(u, wdt, preferred_element_type=jnp.float32) + bdt)
    gate = jax.nn.sigmoid(jnp.dot(u, wg, preferred_element_type=jnp.float32))

    # Input-dependent diagonal SSM discretization (kept as SSA values, no scratch).
    a_all = jnp.exp(delta * a_neg)                                       # (T*BB, D) per-step decay
    b_all = delta * u                                                    # (T*BB, D) per-step input

    # Causal temporal scan, statically unrolled; every slice start is a multiple of 8 sublanes.
    h = jnp.zeros((BB, D), jnp.float32)
    hs = []
    for t in range(T):                                                   # static unroll (T=16)
        lo = t * BB
        h = a_all[lo:lo + BB, :] * h + b_all[lo:lo + BB, :]              # (BB, D)
        hs.append(h)

    # Collapsed readout: one stack, one elementwise multiply, ONE cross-lane reduction,
    # ONE small (T, BB) -> (BB, T) transpose (instead of 16 reduces + 16 lane inserts).
    ys = jnp.concatenate(hs, axis=0)                                     # (T*BB, D)
    y = ys * gate * wo                                                   # (T*BB, D)
    r_tm = jnp.sum(y.reshape(T, BB, D), axis=-1)                         # (T, BB)  one XLU pass
    rppg = jnp.transpose(r_tm)                                           # (BB, T)  lane-dense
    rppg = rppg - jnp.mean(rppg, axis=-1, keepdims=True)                 # zero-mean per sample

    # Wavelet PRV head: fused real|imag Morlet bank, power per scale, normalized.
    ri = jnp.dot(rppg, wav_ref[...], preferred_element_type=jnp.float32)  # (BB, 2S)
    re = ri[:, :S]
    im = ri[:, S:]
    power = re * re + im * im                                            # (BB, S)
    prv = power / (jnp.sum(power, axis=-1, keepdims=True) + 1e-6)

    # Single fused output slab; split back into (rPPG, prv) in the wrapper.
    out_ref[...] = jnp.concatenate([rppg, prv], axis=1)                  # (BB, T + S)


def make_params():
    """Deterministic synthetic parameters, pre-packed for the kernel."""
    k = jax.random.PRNGKey(0)
    ks = jax.random.split(k, 6)
    wp = 0.3 * jax.random.normal(ks[0], (C, D), jnp.float32)
    bp = 0.05 * jax.random.normal(ks[1], (1, D), jnp.float32)
    a_log = jnp.log(jnp.linspace(0.5, 2.0, D, dtype=jnp.float32)).reshape(1, D)
    wdt = 0.2 * jax.random.normal(ks[2], (D, D), jnp.float32)
    bdt = 0.05 * jax.random.normal(ks[3], (1, D), jnp.float32)
    wg = 0.2 * jax.random.normal(ks[4], (D, D), jnp.float32)
    wo = 0.3 * jax.random.normal(ks[5], (1, D), jnp.float32)

    # Pack every small SSM parameter into ONE (P_ROWS, D) slab -> one input DMA instead of five.
    pslab = jnp.zeros((P_ROWS, D), jnp.float32)
    pslab = pslab.at[_R_WDT:_R_WDT + D].set(wdt)
    pslab = pslab.at[_R_WG:_R_WG + D].set(wg)
    pslab = pslab.at[_R_BDT].set(bdt[0])
    pslab = pslab.at[_R_A].set(-jnp.exp(a_log[0]))        # pre-compute A = -exp(a_log)
    pslab = pslab.at[_R_WO].set(wo[0])

    # Morlet wavelet filter bank, real & imag stacked, pre-transposed to (T, 2S).
    t_ax = np.arange(T, dtype=np.float32) - (T - 1) / 2.0
    scales = np.geomspace(1.5, T / 2.0, S).astype(np.float32)
    env = np.exp(-(t_ax[None, :] ** 2) / (2.0 * scales[:, None] ** 2))
    wav_r = env * np.cos(5.0 * t_ax[None, :] / scales[:, None])
    wav_i = env * np.sin(5.0 * t_ax[None, :] / scales[:, None])
    norm = np.sqrt((wav_r ** 2 + wav_i ** 2).sum(-1, keepdims=True)) + 1e-6
    wav = jnp.asarray(
        np.concatenate([(wav_r / norm).T, (wav_i / norm).T], axis=1), jnp.float32)  # (T, 2S)
    return wp, bp, pslab, wav


def physmamba_with_prv(x_ncthw, params):
    """x_ncthw: (B, C, T, H, W) float32.  Returns (rPPG (B, T), prv (B, S))."""
    wp, bp, pslab, wav = params
    bt = x_ncthw.shape[0]

    # Spatial pooling + input projection hoisted to XLA (fuses with the mean-reduce; drops
    # three kernel operands and the <3%-of-an-MXU-tile K=3 matmul from the kernel).
    pooled = jnp.mean(x_ncthw.astype(jnp.float32), axis=(3, 4))           # (B, C, T)
    u = jnp.tanh(jnp.transpose(pooled, (0, 2, 1)) @ wp + bp)              # (B, T, D)

    # Tile samples into groups of BB=8 (zero-pad if needed) and lay each group out time-major
    # so the kernel's per-time-step scan slices are full 8-sublane groups.
    g = pl.cdiv(bt, BB)
    pad = g * BB - bt
    if pad:
        u = jnp.pad(u, ((0, pad), (0, 0), (0, 0)))
    u_tm = jnp.transpose(u.reshape(g, BB, T, D), (0, 2, 1, 3)).reshape(g * T * BB, D)

    cost = pl.CostEstimate(
        flops=g * (2 * 2 * (T * BB) * D * D + 2 * BB * T * (2 * S) + 12 * (T * BB) * D),
        transcendentals=g * 4 * (T * BB) * D,
        bytes_accessed=4 * (g * T * BB * D + P_ROWS * D + T * 2 * S + g * BB * (T + S)),
    )

    # 3 inputs + 1 fused output; VMEM working set is a few KB (fine vs 64 MiB on v7x).
    out = pl.pallas_call(
        physmamba_prv_kernel,
        grid_spec=pltpu.PrefetchScalarGridSpec(
            num_scalar_prefetch=0,
            grid=(g,),
            in_specs=[
                pl.BlockSpec((T * BB, D), lambda i: (i, 0),
                             memory_space=pltpu.MemorySpace.VMEM),
                pl.BlockSpec((P_ROWS, D), lambda i: (0, 0),
                             memory_space=pltpu.MemorySpace.VMEM),
                pl.BlockSpec((T, 2 * S), lambda i: (0, 0),
                             memory_space=pltpu.MemorySpace.VMEM),
            ],
            out_specs=pl.BlockSpec((BB, T + S), lambda i: (i, 0),
                                   memory_space=pltpu.MemorySpace.VMEM),
        ),
        out_shape=jax.ShapeDtypeStruct((g * BB, T + S), jnp.float32),
        compiler_params=pltpu.CompilerParams(
            dimension_semantics=("parallel",),   # both TensorCores on v7x; harmless elsewhere
        ),
        cost_estimate=cost,
    )(u_tm, pslab, wav)

    out = out[:bt]                               # drop padded samples (they are the last rows)
    return out[:, :T], out[:, T:]                # matches the PyTorch forward: (rPPG, prv)


def reference_forward(x_ncthw, params):
    """Pure-JAX reference of the same simplified forward (for correctness checking)."""
    wp, bp, pslab, wav = params
    wdt = pslab[_R_WDT:_R_WDT + D]
    wg = pslab[_R_WG:_R_WG + D]
    bdt = pslab[_R_BDT:_R_BDT + 1]
    a_neg = pslab[_R_A:_R_A + 1]
    wo = pslab[_R_WO:_R_WO + 1]

    pooled = jnp.mean(x_ncthw.astype(jnp.float32), axis=(3, 4))           # (B, C, T)
    u = jnp.tanh(jnp.transpose(pooled, (0, 2, 1)) @ wp + bp)              # (B, T, D)
    delta = jax.nn.softplus(u @ wdt + bdt)
    gate = jax.nn.sigmoid(u @ wg)
    a = jnp.exp(delta * a_neg)
    b_in = delta * u

    def step(h, ab):
        a_t, b_t = ab
        h = a_t * h + b_t
        return h, h

    _, ys = jax.lax.scan(step, jnp.zeros((x_ncthw.shape[0], D), jnp.float32),
                         (jnp.swapaxes(a, 0, 1), jnp.swapaxes(b_in, 0, 1)))
    y = jnp.swapaxes(ys, 0, 1)                                            # (B, T, D)
    rppg = jnp.sum(y * gate * wo, axis=-1)                                # (B, T)
    rppg = rppg - jnp.mean(rppg, axis=-1, keepdims=True)
    ri = rppg @ wav                                                       # (B, 2S)
    re, im = ri[:, :S], ri[:, S:]
    power = re * re + im * im
    prv = power / (jnp.sum(power, axis=-1, keepdims=True) + 1e-6)
    return rppg, prv


if __name__ == "__main__":
    key = jax.random.PRNGKey(0)
    # Folded clip x batch video tensor (NCTHW per sample), e.g. 8 clips of batch 2.
    x = jax.random.normal(key, (B_TOTAL, C, T, H, W), jnp.float32)
    params = make_params()

    fwd = jax.jit(lambda xx: physmamba_with_prv(xx, params))
    rppg, prv = fwd(x)
    jax.block_until_ready((rppg, prv))

    assert rppg.shape == (B_TOTAL, T) and prv.shape == (B_TOTAL, S)
    assert bool(jnp.all(jnp.isfinite(rppg))) and bool(jnp.all(jnp.isfinite(prv)))

    # Sanity-check the fused kernel against a pure-JAX reference.
    rppg_ref, prv_ref = jax.jit(lambda xx: reference_forward(xx, params))(x)
    err_r = float(jnp.max(jnp.abs(rppg - rppg_ref)))
    err_p = float(jnp.max(jnp.abs(prv - prv_ref)))
    # Tightened from 1e-2 per review: all-f32 math with pinned matmul precision.
    assert err_r < 5e-4 and err_p < 5e-4, (err_r, err_p)

    print("KERNEL_OK")
</pallas_src>

<mosaic_0001>
module attributes {stable_mosaic.version = 11 : i64} {
  func.func @physmamba_prv_kernel(%arg0: i32, %arg1: memref<128x32xf32, #tpu.memory_space<vmem>>, %arg2: memref<72x32xf32, #tpu.memory_space<vmem>>, %arg3: memref<16x16xf32, #tpu.memory_space<vmem>>, %arg4: memref<8x24xf32, #tpu.memory_space<vmem>>) attributes {dimension_semantics = [#tpu.dimension_semantics<parallel>], iteration_bounds = array<i64: 2>, scalar_prefetch = 0 : i64, scratch_operands = 0 : i64, tpu.core_type = #tpu.core_type<tc>, window_params = [{transform_indices = @transform_0, window_bounds = array<i64: 128, 32>}, {pipeline_mode = #tpu.pipeline_mode<synchronous>, transform_indices = @transform_1, window_bounds = array<i64: 72, 32>}, {pipeline_mode = #tpu.pipeline_mode<synchronous>, transform_indices = @transform_2, window_bounds = array<i64: 16, 16>}, {transform_indices = @transform_3, window_bounds = array<i64: 8, 24>}]} {
    %c0 = arith.constant 0 : index
    %c0_0 = arith.constant 0 : index
    %0 = vector.load %arg1[%c0, %c0_0] : memref<128x32xf32, #tpu.memory_space<vmem>>, vector<128x32xf32>
    %c0_1 = arith.constant 0 : index
    %c0_2 = arith.constant 0 : index
    %1 = vector.load %arg2[%c0_1, %c0_2] : memref<72x32xf32, #tpu.memory_space<vmem>>, vector<32x32xf32>
    %c32 = arith.constant 32 : index
    %c0_3 = arith.constant 0 : index
    %2 = vector.load %arg2[%c32, %c0_3] : memref<72x32xf32, #tpu.memory_space<vmem>>, vector<32x32xf32>
    %c64 = arith.constant 64 : index
    %c0_4 = arith.constant 0 : index
    %3 = vector.load %arg2[%c64, %c0_4] : memref<72x32xf32, #tpu.memory_space<vmem>>, vector<1x32xf32>
    %c65 = arith.constant 65 : index
    %c0_5 = arith.constant 0 : index
    %4 = vector.load %arg2[%c65, %c0_5] : memref<72x32xf32, #tpu.memory_space<vmem>>, vector<1x32xf32>
    %c66 = arith.constant 66 : index
    %c0_6 = arith.constant 0 : index
    %5 = vector.load %arg2[%c66, %c0_6] : memref<72x32xf32, #tpu.memory_space<vmem>>, vector<1x32xf32>
    %cst = arith.constant dense<0.000000e+00> : vector<128x32xf32>
    %6 = tpu.matmul %0, %1, %cst {dimension_numbers = #tpu.dot_dimension_numbers<[1], [0], [0], [1], [0, 0, 1, 1], [], []>, precision = #tpu.contract_precision<fp32>} : vector<128x32xf32>, vector<32x32xf32>, vector<128x32xf32> -> vector<128x32xf32>
    %7 = vector.broadcast %3 : vector<1x32xf32> to vector<128x32xf32>
    %8 = arith.addf %6, %7 : vector<128x32xf32>
    %cst_7 = arith.constant 0.000000e+00 : f32
    %9 = vector.broadcast %cst_7 : f32 to vector<128x32xf32>
    %10 = arith.maximumf %8, %9 : vector<128x32xf32>
    %11 = vector.broadcast %cst_7 : f32 to vector<128x32xf32>
    %12 = arith.subf %8, %11 : vector<128x32xf32>
    %13 = arith.cmpf one, %12, %12 : vector<128x32xf32>
    %14 = vector.broadcast %cst_7 : f32 to vector<128x32xf32>
    %15 = arith.addf %8, %14 : vector<128x32xf32>
    %16 = math.absf %12 : vector<128x32xf32>
    %cst_8 = arith.constant 0.000000e+00 : f32
    %17 = vector.broadcast %cst_8 : f32 to vector<128x32xf32>
    %18 = arith.subf %17, %16 : vector<128x32xf32>
    %19 = math.exp %18 : vector<128x32xf32>
    %20 = math.log1p %19 : vector<128x32xf32>
    %21 = arith.addf %10, %20 : vector<128x32xf32>
    %22 = arith.select %13, %15, %21 : vector<128x32xi1>, vector<128x32xf32>
    %cst_9 = arith.constant dense<0.000000e+00> : vector<128x32xf32>
    %23 = tpu.matmul %0, %2, %cst_9 {dimension_numbers = #tpu.dot_dimension_numbers<[1], [0], [0], [1], [0, 0, 1, 1], [], []>, precision = #tpu.contract_precision<fp32>} : vector<128x32xf32>, vector<32x32xf32>, vector<128x32xf32> -> vector<128x32xf32>
    %24 = arith.negf %23 : vector<128x32xf32>
    %25 = math.exp %24 : vector<128x32xf32>
    %cst_10 = arith.constant 1.000000e+00 : f32
    %26 = vector.broadcast %cst_10 : f32 to vector<128x32xf32>
    %27 = arith.addf %26, %25 : vector<128x32xf32>
    %28 = arith.divf %26, %27 : vector<128x32xf32>
    %29 = vector.broadcast %4 : vector<1x32xf32> to vector<128x32xf32>
    %30 = arith.mulf %22, %29 : vector<128x32xf32>
    %31 = math.exp %30 : vector<128x32xf32>
    %32 = arith.mulf %22, %0 : vector<128x32xf32>
    %cst_11 = arith.constant 0.000000e+00 : f32
    %33 = vector.broadcast %cst_11 : f32 to vector<8x32xf32>
    %34 = vector.extract_strided_slice %31 {offsets = [0, 0], sizes = [8, 32], strides = [1, 1]} : vector<128x32xf32> to vector<8x32xf32>
    %35 = arith.mulf %34, %33 : vector<8x32xf32>
    %36 = vector.extract_strided_slice %32 {offsets = [0, 0], sizes = [8, 32], strides = [1, 1]} : vector<128x32xf32> to vector<8x32xf32>
    %37 = arith.addf %35, %36 : vector<8x32xf32>
    %38 = vector.extract_strided_slice %31 {offsets = [8, 0], sizes = [8, 32], strides = [1, 1]} : vector<128x32xf32> to vector<8x32xf32>
    %39 = arith.mulf %38, %37 : vector<8x32xf32>
    %40 = vector.extract_strided_slice %32 {offsets = [8, 0], sizes = [8, 32], strides = [1, 1]} : vector<128x32xf32> to vector<8x32xf32>
    %41 = arith.addf %39, %40 : vector<8x32xf32>
    %42 = vector.extract_strided_slice %31 {offsets = [16, 0], sizes = [8, 32], strides = [1, 1]} : vector<128x32xf32> to vector<8x32xf32>
    %43 = arith.mulf %42, %41 : vector<8x32xf32>
    %44 = vector.extract_strided_slice %32 {offsets = [16, 0], sizes = [8, 32], strides = [1, 1]} : vector<128x32xf32> to vector<8x32xf32>
    %45 = arith.addf %43, %44 : vector<8x32xf32>
    %46 = vector.extract_strided_slice %31 {offsets = [24, 0], sizes = [8, 32], strides = [1, 1]} : vector<128x32xf32> to vector<8x32xf32>
    %47 = arith.mulf %46, %45 : vector<8x32xf32>
    %48 = vector.extract_strided_slice %32 {offsets = [24, 0], sizes = [8, 32], strides = [1, 1]} : vector<128x32xf32> to vector<8x32xf32>
    %49 = arith.addf %47, %48 : vector<8x32xf32>
    %50 = vector.extract_strided_slice %31 {offsets = [32, 0], sizes = [8, 32], strides = [1, 1]} : vector<128x32xf32> to vector<8x32xf32>
    %51 = arith.mulf %50, %49 : vector<8x32xf32>
    %52 = vector.extract_strided_slice %32 {offsets = [32, 0], sizes = [8, 32], strides = [1, 1]} : vector<128x32xf32> to vector<8x32xf32>
    %53 = arith.addf %51, %52 : vector<8x32xf32>
    %54 = vector.extract_strided_slice %31 {offsets = [40, 0], sizes = [8, 32], strides = [1, 1]} : vector<128x32xf32> to vector<8x32xf32>
    %55 = arith.mulf %54, %53 : vector<8x32xf32>
    %56 = vector.extract_strided_slice %32 {offsets = [40, 0], sizes = [8, 32], strides = [1, 1]} : vector<128x32xf32> to vector<8x32xf32>
    %57 = arith.addf %55, %56 : vector<8x32xf32>
    %58 = vector.extract_strided_slice %31 {offsets = [48, 0], sizes = [8, 32], strides = [1, 1]} : vector<128x32xf32> to vector<8x32xf32>
    %59 = arith.mulf %58, %57 : vector<8x32xf32>
    %60 = vector.extract_strided_slice %32 {offsets = [48, 0], sizes = [8, 32], strides = [1, 1]} : vector<128x32xf32> to vector<8x32xf32>
    %61 = arith.addf %59, %60 : vector<8x32xf32>
    %62 = vector.extract_strided_slice %31 {offsets = [56, 0], sizes = [8, 32], strides = [1, 1]} : vector<128x32xf32> to vector<8x32xf32>
    %63 = arith.mulf %62, %61 : vector<8x32xf32>
    %64 = vector.extract_strided_slice %32 {offsets = [56, 0], sizes = [8, 32], strides = [1, 1]} : vector<128x32xf32> to vector<8x32xf32>
    %65 = arith.addf %63, %64 : vector<8x32xf32>
    %66 = vector.extract_strided_slice %31 {offsets = [64, 0], sizes = [8, 32], strides = [1, 1]} : vector<128x32xf32> to vector<8x32xf32>
    %67 = arith.mulf %66, %65 : vector<8x32xf32>
    %68 = vector.extract_strided_slice %32 {offsets = [64, 0], sizes = [8, 32], strides = [1, 1]} : vector<128x32xf32> to vector<8x32xf32>
    %69 = arith.addf %67, %68 : vector<8x32xf32>
    %70 = vector.extract_strided_slice %31 {offsets = [72, 0], sizes = [8, 32], strides = [1, 1]} : vector<128x32xf32> to vector<8x32xf32>
    %71 = arith.mulf %70, %69 : vector<8x32xf32>
    %72 = vector.extract_strided_slice %32 {offsets = [72, 0], sizes = [8, 32], strides = [1, 1]} : vector<128x32xf32> to vector<8x32xf32>
    %73 = arith.addf %71, %72 : vector<8x32xf32>
    %74 = vector.extract_strided_slice %31 {offsets = [80, 0], sizes = [8, 32], strides = [1, 1]} : vector<128x32xf32> to vector<8x32xf32>
    %75 = arith.mulf %74, %73 : vector<8x32xf32>
    %76 = vector.extract_strided_slice %32 {offsets = [80, 0], sizes = [8, 32], strides = [1, 1]} : vector<128x32xf32> to vector<8x32xf32>
    %77 = arith.addf %75, %76 : vector<8x32xf32>
    %78 = vector.extract_strided_slice %31 {offsets = [88, 0], sizes = [8, 32], strides = [1, 1]} : vector<128x32xf32> to vector<8x32xf32>
    %79 = arith.mulf %78, %77 : vector<8x32xf32>
    %80 = vector.extract_strided_slice %32 {offsets = [88, 0], sizes = [8, 32], strides = [1, 1]} : vector<128x32xf32> to vector<8x32xf32>
    %81 = arith.addf %79, %80 : vector<8x32xf32>
    %82 = vector.extract_strided_slice %31 {offsets = [96, 0], sizes = [8, 32], strides = [1, 1]} : vector<128x32xf32> to vector<8x32xf32>
    %83 = arith.mulf %82, %81 : vector<8x32xf32>
    %84 = vector.extract_strided_slice %32 {offsets = [96, 0], sizes = [8, 32], strides = [1, 1]} : vector<128x32xf32> to vector<8x32xf32>
    %85 = arith.addf %83, %84 : vector<8x32xf32>
    %86 = vector.extract_strided_slice %31 {offsets = [104, 0], sizes = [8, 32], strides = [1, 1]} : vector<128x32xf32> to vector<8x32xf32>
    %87 = arith.mulf %86, %85 : vector<8x32xf32>
    %88 = vector.extract_strided_slice %32 {offsets = [104, 0], sizes = [8, 32], strides = [1, 1]} : vector<128x32xf32> to vector<8x32xf32>
    %89 = arith.addf %87, %88 : vector<8x32xf32>
    %90 = vector.extract_strided_slice %31 {offsets = [112, 0], sizes = [8, 32], strides = [1, 1]} : vector<128x32xf32> to vector<8x32xf32>
    %91 = arith.mulf %90, %89 : vector<8x32xf32>
    %92 = vector.extract_strided_slice %32 {offsets = [112, 0], sizes = [8, 32], strides = [1, 1]} : vector<128x32xf32> to vector<8x32xf32>
    %93 = arith.addf %91, %92 : vector<8x32xf32>
    %94 = vector.extract_strided_slice %31 {offsets = [120, 0], sizes = [8, 32], strides = [1, 1]} : vector<128x32xf32> to vector<8x32xf32>
    %95 = arith.mulf %94, %93 : vector<8x32xf32>
    %96 = vector.extract_strided_slice %32 {offsets = [120, 0], sizes = [8, 32], strides = [1, 1]} : vector<128x32xf32> to vector<8x32xf32>
    %97 = arith.addf %95, %96 : vector<8x32xf32>
    %98 = tpu.concatenate %37, %41, %45, %49, %53, %57, %61, %65, %69, %73, %77, %81, %85, %89, %93, %97 in 0 : vector<8x32xf32>, vector<8x32xf32>, vector<8x32xf32>, vector<8x32xf32>, vector<8x32xf32>, vector<8x32xf32>, vector<8x32xf32>, vector<8x32xf32>, vector<8x32xf32>, vector<8x32xf32>, vector<8x32xf32>, vector<8x32xf32>, vector<8x32xf32>, vector<8x32xf32>, vector<8x32xf32>, vector<8x32xf32> -> vector<128x32xf32>
    %99 = arith.mulf %98, %28 : vector<128x32xf32>
    %100 = vector.broadcast %5 : vector<1x32xf32> to vector<128x32xf32>
    %101 = arith.mulf %99, %100 : vector<128x32xf32>
    %102 = vector.shape_cast %101 : vector<128x32xf32> to vector<16x8x32xf32>
    %cst_12 = arith.constant dense<0.000000e+00> : vector<16x8xf32>
    %103 = vector.multi_reduction <add>, %102, %cst_12 [2] : vector<16x8x32xf32> to vector<16x8xf32>
    %104 = tpu.transpose %103, [1, 0] : vector<16x8xf32> -> vector<8x16xf32>
    %cst_13 = arith.constant dense<0.000000e+00> : vector<8xf32>
    %105 = vector.multi_reduction <add>, %104, %cst_13 [1] : vector<8x16xf32> to vector<8xf32>
    %106 = vector.shape_cast %105 : vector<8xf32> to vector<8x1xf32>
    %cst_14 = arith.constant 1.600000e+01 : f32
    %107 = vector.broadcast %cst_14 : f32 to vector<8x1xf32>
    %108 = arith.divf %106, %107 : vector<8x1xf32>
    %109 = vector.broadcast %108 : vector<8x1xf32> to vector<8x16xf32>
    %110 = arith.subf %104, %109 : vector<8x16xf32>
    %c0_15 = arith.constant 0 : index
    %c0_16 = arith.constant 0 : index
    %111 = vector.load %arg3[%c0_15, %c0_16] : memref<16x16xf32, #tpu.memory_space<vmem>>, vector<16x16xf32>
    %cst_17 = arith.constant dense<0.000000e+00> : vector<8x16xf32>
    %112 = tpu.matmul %110, %111, %cst_17 {dimension_numbers = #tpu.dot_dimension_numbers<[1], [0], [0], [1], [0, 0, 1, 1], [], []>, precision = #tpu.contract_precision<fp32>} : vector<8x16xf32>, vector<16x16xf32>, vector<8x16xf32> -> vector<8x16xf32>
    %113 = vector.extract_strided_slice %112 {offsets = [0, 0], sizes = [8, 8], strides = [1, 1]} : vector<8x16xf32> to vector<8x8xf32>
    %114 = vector.extract_strided_slice %112 {offsets = [0, 8], sizes = [8, 8], strides = [1, 1]} : vector<8x16xf32> to vector<8x8xf32>
    %115 = arith.mulf %113, %113 : vector<8x8xf32>
    %116 = arith.mulf %114, %114 : vector<8x8xf32>
    %117 = arith.addf %115, %116 : vector<8x8xf32>
    %cst_18 = arith.constant dense<0.000000e+00> : vector<8xf32>
    %118 = vector.multi_reduction <add>, %117, %cst_18 [1] : vector<8x8xf32> to vector<8xf32>
    %119 = vector.shape_cast %118 : vector<8xf32> to vector<8x1xf32>
    %cst_19 = arith.constant 9.99999997E-7 : f32
    %120 = vector.broadcast %cst_19 : f32 to vector<8x1xf32>
    %121 = arith.addf %119, %120 : vector<8x1xf32>
    %122 = vector.broadcast %121 : vector<8x1xf32> to vector<8x8xf32>
    %123 = arith.divf %117, %122 : vector<8x8xf32>
    %124 = tpu.concatenate %110, %123 in 1 : vector<8x16xf32>, vector<8x8xf32> -> vector<8x24xf32>
    %c0_20 = arith.constant 0 : index
    %c0_21 = arith.constant 0 : index
    %125 = vector.load %arg4[%c0_20, %c0_21] : memref<8x24xf32, #tpu.memory_space<vmem>>, vector<8x24xf32>
    tpu.vector_store %arg4[%c0_20, %c0_21], %124 {strides = array<i32>} : memref<8x24xf32, #tpu.memory_space<vmem>>, vector<8x24xf32>,
    return
  }
  func.func @transform_0(%arg0: i32) -> (i32, i32) {
    %c0_i32 = arith.constant 0 : i32
    %c0_i32_0 = arith.constant 0 : i32
    return %arg0, %c0_i32 : i32, i32
  }
  func.func @transform_1(%arg0: i32) -> (i32, i32) {
    %c0_i32 = arith.constant 0 : i32
    %c0_i32_0 = arith.constant 0 : i32
    %c0_i32_1 = arith.constant 0 : i32
    return %c0_i32, %c0_i32_0 : i32, i32
  }
  func.func @transform_2(%arg0: i32) -> (i32, i32) {
    %c0_i32 = arith.constant 0 : i32
    %c0_i32_0 = arith.constant 0 : i32
    %c0_i32_1 = arith.constant 0 : i32
    return %c0_i32, %c0_i32_0 : i32, i32
  }
  func.func @transform_3(%arg0: i32) -> (i32, i32) {
    %c0_i32 = arith.constant 0 : i32
    %c0_i32_0 = arith.constant 0 : i32
    return %arg0, %c0_i32 : i32, i32
  }
}

</mosaic_0001>

<llo_original>
// kernel: _lambda_.1
$region0: #{_lambda_.1}
  #allocation0 [shape = 'u32[]', space=smem, size = 0x4, offset = 0x4, fixed_abs, tag = 'smem constant byte address 0x4 - core index']
  #allocation1 [shape = 'u32[144,128]{1,0:T(1,128)}', space=vmem, size = 0x12000, scoped, tag = 'internal scratch']
  %s0 = inlined_call_operand.vmem [shape: f32[256,32], index: 0, kind: input, shape index: {}]
  %s1 = inlined_call_operand.vmem [shape: f32[72,32], index: 1, kind: input, shape index: {}]
  %s2 = inlined_call_operand.vmem [shape: f32[16,16], index: 2, kind: input, shape index: {}]
  %s3 = inlined_call_operand.vmem [shape: f32[16,24], index: 3, kind: output, shape index: {}]
  %s4 = sld [smem:[#allocation0]]
  $region45: #{_lambda_.1} parent=0
    _
  %s6 = ssub.s32 1, %s4
  %s7 = scalar_select 0, %s6, %s4
  loop: start=0, step=1, limit=4
  $region2: #{_lambda_.1} parent=0 // loop_pre_header
    _
  $region3: #{_lambda_.1} parent=0 // loop_header
    %s9 = sphi 0, %s13
    %p10 = scmp.ge.s32.totalorder %s9, 4
    %s19 = sphi 0, %s21
    %s22 = sphi 0, %s19
    %s23 = sphi 0, %s22
    %s39 = sphi 0, %s23
    %s43 = sphi 0, %s43
    %s45 = sphi 0, %s43
    %s46 = sphi 0, %s45
    %s60 = sphi 0, %s46
    %s64 = sphi 0, %s64
    %s66 = sphi 0, %s64
    %s67 = sphi 0, %s66
    %s81 = sphi 0, %s67
    %s87 = sphi 0, %s89
    %s90 = sphi 0, %s87
    %s91 = sphi 0, %s90
    %s107 = sphi 0, %s91
  $region4: #{_lambda_.1} parent=0 // loop_header_branch
    %12 = sbr.rel (%p10) target = $region8
  $region5: #{_lambda_.1} parent=0 // loop_body
    %s14 = ssub.s32 %s9, 1
    %s15 = ssub.s32 %s9, 2
    %s16 = sadd.s32 %s9, 1
    %s17 = ssub.s32 %s9, %s16
    %p18 = scmp.eq.s32.totalorder %s17, 0
    %s20 = sadd.s32 %s19, 1
    %s21 = scalar_select %p18, %s19, %s20
    %p24 = pneg %p18
    %p25 = scmp.eq.s32.totalorder %s9, 1
    %p26 = por %p24, %p25
    %p27 = scmp.ne.s32.totalorder %s19, %s22
    %p28 = scmp.eq.s32.totalorder %s9, 0
    %p29 = por %p27, %p28
    %p30 = scmp.ne.s32.totalorder %s19, %s22
    %p31 = scmp.eq.s32.totalorder %s14, 1
    %p32 = por %p30, %p31
    %p33 = scmp.ne.s32.totalorder %s22, %s23
    %p34 = scmp.eq.s32.totalorder %s14, 0
    %p35 = por %p33, %p34
    %p36 = scmp.ne.s32.totalorder %s22, %s23
    %p37 = scmp.eq.s32.totalorder %s15, 1
    %p38 = por %p36, %p37
    %p40 = scmp.ne.s32.totalorder %s23, %s39
    %p41 = scmp.eq.s32.totalorder %s15, 0
    %p42 = por %p40, %p41
    %s44 = sadd.s32 %s43, 1
    %p47 = scmp.eq.s32.totalorder %s9, 1
    %p48 = scmp.ne.s32.totalorder %s43, %s45
    %p49 = scmp.eq.s32.totalorder %s9, 0
    %p50 = por %p48, %p49
    %p51 = scmp.ne.s32.totalorder %s43, %s45
    %p52 = scmp.eq.s32.totalorder %s14, 1
    %p53 = por %p51, %p52
    %p54 = scmp.ne.s32.totalorder %s45, %s46
    %p55 = scmp.eq.s32.totalorder %s14, 0
    %p56 = por %p54, %p55
    %p57 = scmp.ne.s32.totalorder %s45, %s46
    %p58 = scmp.eq.s32.totalorder %s15, 1
    %p59 = por %p57, %p58
    %p61 = scmp.ne.s32.totalorder %s46, %s60
    %p62 = scmp.eq.s32.totalorder %s15, 0
    %p63 = por %p61, %p62
    %s65 = sadd.s32 %s64, 1
    %p68 = scmp.eq.s32.totalorder %s9, 1
    %p69 = scmp.ne.s32.totalorder %s64, %s66
    %p70 = scmp.eq.s32.totalorder %s9, 0
    %p71 = por %p69, %p70
    %p72 = scmp.ne.s32.totalorder %s64, %s66
    %p73 = scmp.eq.s32.totalorder %s14, 1
    %p74 = por %p72, %p73
    %p75 = scmp.ne.s32.totalorder %s66, %s67
    %p76 = scmp.eq.s32.totalorder %s14, 0
    %p77 = por %p75, %p76
    %p78 = scmp.ne.s32.totalorder %s66, %s67
    %p79 = scmp.eq.s32.totalorder %s15, 1
    %p80 = por %p78, %p79
    %p82 = scmp.ne.s32.totalorder %s67, %s81
    %p83 = scmp.eq.s32.totalorder %s15, 0
    %p84 = por %p82, %p83
    %s85 = ssub.s32 %s9, %s16
    %p86 = scmp.eq.s32.totalorder %s85, 0
    %s88 = sadd.s32 %s87, 1
    %s89 = scalar_select %p86, %s87, %s88
    %p92 = pneg %p86
    %p93 = scmp.eq.s32.totalorder %s9, 1
    %p94 = por %p92, %p93
    %p95 = scmp.ne.s32.totalorder %s87, %s90
    %p96 = scmp.eq.s32.totalorder %s9, 0
    %p97 = por %p95, %p96
    %p98 = scmp.ne.s32.totalorder %s87, %s90
    %p99 = scmp.eq.s32.totalorder %s14, 1
    %p100 = por %p98, %p99
    %p101 = scmp.ne.s32.totalorder %s90, %s91
    %p102 = scmp.eq.s32.totalorder %s14, 0
    %p103 = por %p101, %p102
    %p104 = scmp.ne.s32.totalorder %s90, %s91
    %p105 = scmp.eq.s32.totalorder %s15, 1
    %p106 = por %p104, %p105
    %p108 = scmp.ne.s32.totalorder %s91, %s107
    %p109 = scmp.eq.s32.totalorder %s15, 0
    %p110 = por %p108, %p109
    %p111 = scmp.le.s32.totalorder 1, %s9
    %p112 = scmp.lt.s32.totalorder %s9, 3
    %p113 = pnand %p111, %p112
    %p114 = pneg %p113
    // Predicated region
    $region9: #{_lambda_.1} parent=5 // pred_check
      _
    $region10: #{_lambda_.1} parent=5 // pred_check_branch
      %116 = sbr.rel (%p113) target = $region12
    $region11: #{_lambda_.1} parent=5 // pred_region
      %s117 = ssub.s32 %s9, 1
      // Predicated region
      $region13: #{_lambda_.1} parent=11 // pred_check
        %p118 = pneg %p56
      $region14: #{_lambda_.1} parent=11 // pred_check_branch
        %120 = sbr.rel (%p118) target = $region16
      $region15: #{_lambda_.1} parent=11 // pred_region
        _
      $region16: #{_lambda_.1} parent=11 // pred_fallthru
        _
      // Predicated region
      $region17: #{_lambda_.1} parent=11 // pred_check
        %p121 = pneg %p77
      $region18: #{_lambda_.1} parent=11 // pred_check_branch
        %123 = sbr.rel (%p121) target = $region20
      $region19: #{_lambda_.1} parent=11 // pred_region
        _
      $region20: #{_lambda_.1} parent=11 // pred_fallthru
        _
    $region12: #{_lambda_.1} parent=5 // pred_fallthru
      _
    %p124 = scmp.lt.s32.totalorder %s9, 2
    // Predicated region
    $region21: #{_lambda_.1} parent=5 // pred_check
      %p125 = pneg %p124
    $region22: #{_lambda_.1} parent=5 // pred_check_branch
      %127 = sbr.rel (%p125) target = $region24
    $region23: #{_lambda_.1} parent=5 // pred_region
      // Predicated region
      $region25: #{_lambda_.1} parent=23 // pred_check
        %p128 = pneg %p29
      $region26: #{_lambda_.1} parent=23 // pred_check_branch
        %130 = sbr.rel (%p128) target = $region28
      $region27: #{_lambda_.1} parent=23 // pred_region
        %s131 = smul.u32 16, %s9
        %p132 = scmp.lt.s32.totalorder %s131, 31
        %s133 = scalar_select %p132, %s131, 31
        %s134 = smul.addr %s133, 8
        %s135 = scalar_lea.vmem %s0, %s134
        %s136 = smul.u32 16, %s9
      $region28: #{_lambda_.1} parent=23 // pred_fallthru
        _
    $region24: #{_lambda_.1} parent=5 // pred_fallthru
      _
    %p137 = scmp.le.s32.totalorder 1, %s9
    %p138 = scmp.lt.s32.totalorder %s9, 3
    %p139 = pnand %p137, %p138
    %p140 = pneg %p139
    // Predicated region
    $region29: #{_lambda_.1} parent=5 // pred_check
      _
    $region30: #{_lambda_.1} parent=5 // pred_check_branch
      %142 = sbr.rel (%p139) target = $region32
    $region31: #{_lambda_.1} parent=5 // pred_region
      %s143 = ssub.s32 %s9, 1
      %s144 = smul.u32 16, %s14
      %p145 = scmp.lt.s32.totalorder %s144, 31
      %s146 = scalar_select %p145, %s144, 31
      %s147 = smul.addr %s146, 8
      %s148 = scalar_lea.vmem %s0, %s147
      %p149 = pneg %p35
      %p150 = pneg %p32
      %p151 = pneg %p56
      %p152 = pneg %p53
      %p153 = pneg %p77
      %p154 = pneg %p74
      %p155 = pneg %p103
      %p156 = pneg %p100
      %p157 = scmp.lt.s32.totalorder %s14, 1
      %s158 = scalar_select %p157, %s14, 1
      %s159 = smul.addr %s158, 8
      %s160 = scalar_lea.vmem %s3, %s159
      %s161 = smul.u32 16, %s14
      %p162 = scmp.lt.s32.totalorder %s161, 31
      %s163 = scalar_select %p162, %s161, 31
      %s164 = smul.addr %s163, 8
      %s165 = scalar_lea.vmem %s0, %s164
      %s166 = smul.u32 16, %s14
      %p167 = scmp.lt.s32.totalorder %s14, 1
      %s168 = scalar_select %p167, %s14, 1
      %s169 = smul.addr %s168, 8
      %s170 = scalar_lea.vmem %s3, %s169
      %v171 = vld [vmem:[%s165] sm:$0xff]
      %v172 = vld [vmem:[%s165 + $0x8] sm:$0xff]
      %v173 = vld [vmem:[%s165 + $0x10] sm:$0xff]
      %v174 = vld [vmem:[%s165 + $0x18] sm:$0xff]
      %v175 = vld [vmem:[%s165 + $0x20] sm:$0xff]
      %v176 = vld [vmem:[%s165 + $0x28] sm:$0xff]
      %v177 = vld [vmem:[%s165 + $0x30] sm:$0xff]
      %v178 = vld [vmem:[%s165 + $0x38] sm:$0xff]
      %v179 = vld [vmem:[%s165 + $0x40] sm:$0xff]
      %v180 = vld [vmem:[%s165 + $0x48] sm:$0xff]
      %v181 = vld [vmem:[%s165 + $0x50] sm:$0xff]
      %v182 = vld [vmem:[%s165 + $0x58] sm:$0xff]
      %v183 = vld [vmem:[%s165 + $0x60] sm:$0xff]
      %v184 = vld [vmem:[%s165 + $0x68] sm:$0xff]
      %v185 = vld [vmem:[%s165 + $0x70] sm:$0xff]
      %v186 = vld [vmem:[%s165 + $0x78] sm:$0xff]
      %v187 = vld [vmem:[%s1] sm:$0xff]
      %v188 = vld [vmem:[%s1 + $0x8] sm:$0xff]
      %v189 = vld [vmem:[%s1 + $0x10] sm:$0xff]
      %v190 = vld [vmem:[%s1 + $0x18] sm:$0xff]
      %v191 = vld [vmem:[%s1 + $0x20] sm:$0xff]
      %v192 = vld [vmem:[%s1 + $0x28] sm:$0xff]
      %v193 = vld [vmem:[%s1 + $0x30] sm:$0xff]
      %v194 = vld [vmem:[%s1 + $0x38] sm:$0xff]
      %v195 = vld [vmem:[%s1 + $0x40] sm:$0x1]
      %v196 = vld [vmem:[%s1 + $0x41] sm:$0x1]
      %v197 = vld [vmem:[%s1 + $0x42] sm:$0x1]
      %v198 = vlaneseq
      %v199 = vshrl.u32 %v198, 7
      %v200 = vsub.s32 0, %v199
      %v201 = vrot.slane %v195, %v200
      %vm202 = vcmask 261120
      %v204 = vsel %vm202, %v171, 0
      %v207 = vsel %vm202, %v172, 0
      %v210 = vsel %vm202, %v173, 0
      %v213 = vsel %vm202, %v174, 0
      %v216 = vsel %vm202, %v175, 0
      %v219 = vsel %vm202, %v176, 0
      %v222 = vsel %vm202, %v177, 0
      %v225 = vsel %vm202, %v178, 0
      %v228 = vsel %vm202, %v179, 0
      %v231 = vsel %vm202, %v180, 0
      %v234 = vsel %vm202, %v181, 0
      %v237 = vsel %vm202, %v182, 0
      %v240 = vsel %vm202, %v183, 0
      %v243 = vsel %vm202, %v184, 0
      %v246 = vsel %vm202, %v185, 0
      %v249 = vsel %vm202, %v186, 0
      %251 = vmatprep.subr.mxu0 0.0
      %v252 = vand.u32 %v187, 4294901760
      %253 = vmatpush1.msra.mxu0 %v252
      %254 = vmatprep.subr.mxu0 0.0
      %v255 = vand.u32 %v188, 4294901760
      %256 = vmatpush1.msra.mxu0 %v255
      %257 = vmatprep.subr.mxu0 0.0
      %v258 = vand.u32 %v189, 4294901760
      %259 = vmatpush1.msra.mxu0 %v258
      %260 = vmatprep.subr.mxu0 0.0
      %v261 = vand.u32 %v190, 4294901760
      %262 = vmatpush1.msra.mxu0 %v261
      %263 = vmatprep.subr.mxu0 0.0
      %264 = vmatpush1.msra.mxu0 0.0
      %265 = vmatprep.subr.mxu0 0.0
      %266 = vmatpush1.msra.mxu0 0.0
      %267 = vmatprep.subr.mxu0 0.0
      %268 = vmatpush1.msra.mxu0 0.0
      %269 = vmatprep.subr.mxu0 0.0
      %270 = vmatpush1.msra.mxu0 0.0
      %271 = vmatprep.subr.mxu0 0.0
      %272 = vmatpush1.msra.mxu0 0.0
      %273 = vmatprep.subr.mxu0 0.0
      %274 = vmatpush1.msra.mxu0 0.0
      %275 = vmatprep.subr.mxu0 0.0
      %276 = vmatpush1.msra.mxu0 0.0
      %277 = vmatprep.subr.mxu0 0.0
      %278 = vmatpush1.msra.mxu0 0.0
      %279 = vmatprep.subr.mxu0 0.0
      %280 = vmatpush1.msra.mxu0 0.0
      %281 = vmatprep.subr.mxu0 0.0
      %282 = vmatpush1.msra.mxu0 0.0
      %283 = vmatprep.subr.mxu0 0.0
      %284 = vmatpush1.msra.mxu0 0.0
      %285 = vmatprep.subr.mxu0 0.0
      %286 = vmatpush1.msra.mxu0 0.0
      %287 = vmatprep.subr.mxu0 0.0
      %288 = vmatpush1.msra.mxu0 0.0
      %289 = vmatprep.subr.mxu0 0.0
      %290 = vmatpush1.msra.mxu0 0.0
      %291 = vmatprep.subr.mxu0 0.0
      %292 = vmatpush1.msra.mxu0 0.0
      %293 = vmatprep.subr.mxu0 0.0
      %294 = vmatpush1.msra.mxu0 0.0
      %295 = vmatprep.subr.mxu0 0.0
      %296 = vmatpush1.msra.mxu0 0.0
      %297 = vmatprep.subr.mxu0 0.0
      %298 = vmatpush1.msra.mxu0 0.0
      %299 = vmatprep.subr.mxu0 0.0
      %300 = vmatpush1.msra.mxu0 0.0
      %301 = vmatprep.subr.mxu0 0.0
      %302 = vmatpush1.msra.mxu0 0.0
      %303 = vmatprep.subr.mxu0 0.0
      %304 = vmatpush1.msra.mxu0 0.0
      %305 = vmatprep.subr.mxu0 0.0
      %306 = vmatpush1.msra.mxu0 0.0
      %307 = vmatprep.subr.mxu0 0.0
      %308 = vmatpush1.msra.mxu0 0.0
      %309 = vmatprep.subr.mxu0 0.0
      %310 = vmatpush1.msra.mxu0 0.0
      %311 = vmatprep.subr.mxu0 0.0
      %312 = vmatpush1.msra.mxu0 0.0
      %313 = vmatprep.subr.mxu0 0.0
      %314 = vmatpush1.msra.mxu0 0.0
      %315 = vmatprep.subr.mxu0 0.0
      %316 = vmatpush1.msra.mxu0 0.0
      %317 = vmatprep.subr.mxu0 0.0
      %318 = vmatpush1.msra.mxu0 0.0
      %319 = vmatprep.mubr.f32.mxu0 0.0
      %v320 = vand.u32 %v204, 4294901760
      %v321 = vsub.f32 %v204, %v320
      %v322 = vand.u32 %v321, 4294901760
      %v323 = vsub.f32 %v321, %v322
      %v324 = vand.u32 %v323, 4294901760
      %325 = vmatmul.mubr.f32.gmra.mrb[0].mxu0 %v324
      %v326 = vpop.f32.mrb[0].mxu0
      %v327 = vadd.f32 %v201, %v326
      %v328 = vpop.f32.mrb[0].mxu0
      %329 = vmatprep.mubr.f32.mxu0 0.0
      %v330 = vand.u32 %v207, 4294901760
      %v331 = vsub.f32 %v207, %v330
      %v332 = vand.u32 %v331, 4294901760
      %v333 = vsub.f32 %v331, %v332
      %v334 = vand.u32 %v333, 4294901760
      %335 = vmatmul.mubr.f32.gmra.mrb[0].mxu0 %v334
      %v336 = vpop.f32.mrb[0].mxu0
      %v337 = vadd.f32 %v201, %v336
      %v338 = vpop.f32.mrb[0].mxu0
      %339 = vmatprep.mubr.f32.mxu0 0.0
      %v340 = vand.u32 %v210, 4294901760
      %v341 = vsub.f32 %v210, %v340
      %v342 = vand.u32 %v341, 4294901760
      %v343 = vsub.f32 %v341, %v342
      %v344 = vand.u32 %v343, 4294901760
      %345 = vmatmul.mubr.f32.gmra.mrb[0].mxu0 %v344
      %v346 = vpop.f32.mrb[0].mxu0
      %v347 = vadd.f32 %v201, %v346
      %v348 = vpop.f32.mrb[0].mxu0
      %349 = vmatprep.mubr.f32.mxu0 0.0
      %v350 = vand.u32 %v213, 4294901760
      %v351 = vsub.f32 %v213, %v350
      %v352 = vand.u32 %v351, 4294901760
      %v353 = vsub.f32 %v351, %v352
      %v354 = vand.u32 %v353, 4294901760
      %355 = vmatmul.mubr.f32.gmra.mrb[0].mxu0 %v354
      %v356 = vpop.f32.mrb[0].mxu0
      %v357 = vadd.f32 %v201, %v356
      %v358 = vpop.f32.mrb[0].mxu0
      %359 = vmatprep.mubr.f32.mxu0 0.0
      %v360 = vand.u32 %v216, 4294901760
      %v361 = vsub.f32 %v216, %v360
      %v362 = vand.u32 %v361, 4294901760
      %v363 = vsub.f32 %v361, %v362
      %v364 = vand.u32 %v363, 4294901760
      %365 = vmatmul.mubr.f32.gmra.mrb[0].mxu0 %v364
      %v366 = vpop.f32.mrb[0].mxu0
      %v367 = vadd.f32 %v201, %v366
      %v368 = vpop.f32.mrb[0].mxu0
      %369 = vmatprep.mubr.f32.mxu0 0.0
      %v370 = vand.u32 %v219, 4294901760
      %v371 = vsub.f32 %v219, %v370
      %v372 = vand.u32 %v371, 4294901760
      %v373 = vsub.f32 %v371, %v372
      %v374 = vand.u32 %v373, 4294901760
      %375 = vmatmul.mubr.f32.gmra.mrb[0].mxu0 %v374
      %v376 = vpop.f32.mrb[0].mxu0
      %v377 = vadd.f32 %v201, %v376
      %v378 = vpop.f32.mrb[0].mxu0
      %379 = vmatprep.mubr.f32.mxu0 0.0
      %v380 = vand.u32 %v222, 4294901760
      %v381 = vsub.f32 %v222, %v380
      %v382 = vand.u32 %v381, 4294901760
      %v383 = vsub.f32 %v381, %v382
      %v384 = vand.u32 %v383, 4294901760
      %385 = vmatmul.mubr.f32.gmra.mrb[0].mxu0 %v384
      %v386 = vpop.f32.mrb[0].mxu0
      %v387 = vadd.f32 %v201, %v386
      %v388 = vpop.f32.mrb[0].mxu0
      %389 = vmatprep.mubr.f32.mxu0 0.0
      %v390 = vand.u32 %v225, 4294901760
      %v391 = vsub.f32 %v225, %v390
      %v392 = vand.u32 %v391, 4294901760
      %v393 = vsub.f32 %v391, %v392
      %v394 = vand.u32 %v393, 4294901760
      %395 = vmatmul.mubr.f32.gmra.mrb[0].mxu0 %v394
      %v396 = vpop.f32.mrb[0].mxu0
      %v397 = vadd.f32 %v201, %v396
      %v398 = vpop.f32.mrb[0].mxu0
      %399 = vmatprep.mubr.f32.mxu0 0.0
      %v400 = vand.u32 %v228, 4294901760
      %v401 = vsub.f32 %v228, %v400
      %v402 = vand.u32 %v401, 4294901760
      %v403 = vsub.f32 %v401, %v402
      %v404 = vand.u32 %v403, 4294901760
      %405 = vmatmul.mubr.f32.gmra.mrb[0].mxu0 %v404
      %v406 = vpop.f32.mrb[0].mxu0
      %v407 = vadd.f32 %v201, %v406
      %v408 = vpop.f32.mrb[0].mxu0
      %409 = vmatprep.mubr.f32.mxu0 0.0
      %v410 = vand.u32 %v231, 4294901760
      %v411 = vsub.f32 %v231, %v410
      %v412 = vand.u32 %v411, 4294901760
      %v413 = vsub.f32 %v411, %v412
      %v414 = vand.u32 %v413, 4294901760
      %415 = vmatmul.mubr.f32.gmra.mrb[0].mxu0 %v414
      %v416 = vpop.f32.mrb[0].mxu0
      %v417 = vadd.f32 %v201, %v416
      %v418 = vpop.f32.mrb[0].mxu0
      %419 = vmatprep.mubr.f32.mxu0 0.0
      %v420 = vand.u32 %v234, 4294901760
      %v421 = vsub.f32 %v234, %v420
      %v422 = vand.u32 %v421, 4294901760
      %v423 = vsub.f32 %v421, %v422
      %v424 = vand.u32 %v423, 4294901760
      %425 = vmatmul.mubr.f32.gmra.mrb[0].mxu0 %v424
      %v426 = vpop.f32.mrb[0].mxu0
      %v427 = vadd.f32 %v201, %v426
      %v428 = vpop.f32.mrb[0].mxu0
      %429 = vmatprep.mubr.f32.mxu0 0.0
      %v430 = vand.u32 %v237, 4294901760
      %v431 = vsub.f32 %v237, %v430
      %v432 = vand.u32 %v431, 4294901760
      %v433 = vsub.f32 %v431, %v432
      %v434 = vand.u32 %v433, 4294901760
      %435 = vmatmul.mubr.f32.gmra.mrb[0].mxu0 %v434
      %v436 = vpop.f32.mrb[0].mxu0
      %v437 = vadd.f32 %v201, %v436
      %v438 = vpop.f32.mrb[0].mxu0
      %439 = vmatprep.mubr.f32.mxu0 0.0
      %v440 = vand.u32 %v240, 4294901760
      %v441 = vsub.f32 %v240, %v440
      %v442 = vand.u32 %v441, 4294901760
      %v443 = vsub.f32 %v441, %v442
      %v444 = vand.u32 %v443, 4294901760
      %445 = vmatmul.mubr.f32.gmra.mrb[0].mxu0 %v444
      %v446 = vpop.f32.mrb[0].mxu0
      %v447 = vadd.f32 %v201, %v446
      %v448 = vpop.f32.mrb[0].mxu0
      %449 = vmatprep.mubr.f32.mxu0 0.0
      %v450 = vand.u32 %v243, 4294901760
      %v451 = vsub.f32 %v243, %v450
      %v452 = vand.u32 %v451, 4294901760
      %v453 = vsub.f32 %v451, %v452
      %v454 = vand.u32 %v453, 4294901760
      %455 = vmatmul.mubr.f32.gmra.mrb[0].mxu0 %v454
      %v456 = vpop.f32.mrb[0].mxu0
      %v457 = vadd.f32 %v201, %v456
      %v458 = vpop.f32.mrb[0].mxu0
      %459 = vmatprep.mubr.f32.mxu0 0.0
      %v460 = vand.u32 %v246, 4294901760
      %v461 = vsub.f32 %v246, %v460
      %v462 = vand.u32 %v461, 4294901760
      %v463 = vsub.f32 %v461, %v462
      %v464 = vand.u32 %v463, 4294901760
      %465 = vmatmul.mubr.f32.gmra.mrb[0].mxu0 %v464
      %v466 = vpop.f32.mrb[0].mxu0
      %v467 = vadd.f32 %v201, %v466
      %v468 = vpop.f32.mrb[0].mxu0
      %469 = vmatprep.mubr.f32.mxu0 0.0
      %v470 = vand.u32 %v249, 4294901760
      %v471 = vsub.f32 %v249, %v470
      %v472 = vand.u32 %v471, 4294901760
      %v473 = vsub.f32 %v471, %v472
      %v474 = vand.u32 %v473, 4294901760
      %475 = vmatmul.mubr.f32.gmra.mrb[0].mxu0 %v474
      %v476 = vpop.f32.mrb[0].mxu0
      %v477 = vadd.f32 %v201, %v476
      %v478 = vpop.f32.mrb[0].mxu0
      %479 = vdwg.mxu0
      %480 = vmatprep.subr.mxu0 0.0
      %v481 = vand.u32 %v187, 4294901760
      %v482 = vsub.f32 %v187, %v481
      %v483 = vand.u32 %v482, 4294901760
      %v484 = vsub.f32 %v482, %v483
      %v485 = vand.u32 %v484, 4294901760
      %486 = vmatpush1.msra.mxu0 %v485
      %487 = vmatprep.subr.mxu0 0.0
      %v488 = vand.u32 %v188, 4294901760
      %v489 = vsub.f32 %v188, %v488
      %v490 = vand.u32 %v489, 4294901760
      %v491 = vsub.f32 %v489, %v490
      %v492 = vand.u32 %v491, 4294901760
      %493 = vmatpush1.msra.mxu0 %v492
      %494 = vmatprep.subr.mxu0 0.0
      %v495 = vand.u32 %v189, 4294901760
      %v496 = vsub.f32 %v189, %v495
      %v497 = vand.u32 %v496, 4294901760
      %v498 = vsub.f32 %v496, %v497
      %v499 = vand.u32 %v498, 4294901760
      %500 = vmatpush1.msra.mxu0 %v499
      %501 = vmatprep.subr.mxu0 0.0
      %v502 = vand.u32 %v190, 4294901760
      %v503 = vsub.f32 %v190, %v502
      %v504 = vand.u32 %v503, 4294901760
      %v505 = vsub.f32 %v503, %v504
      %v506 = vand.u32 %v505, 4294901760
      %507 = vmatpush1.msra.mxu0 %v506
      %508 = vmatprep.subr.mxu0 0.0
      %509 = vmatpush1.msra.mxu0 0.0
      %510 = vmatprep.subr.mxu0 0.0
      %511 = vmatpush1.msra.mxu0 0.0
      %512 = vmatprep.subr.mxu0 0.0
      %513 = vmatpush1.msra.mxu0 0.0
      %514 = vmatprep.subr.mxu0 0.0
      %515 = vmatpush1.msra.mxu0 0.0
      %516 = vmatprep.subr.mxu0 0.0
      %517 = vmatpush1.msra.mxu0 0.0
      %518 = vmatprep.subr.mxu0 0.0
      %519 = vmatpush1.msra.mxu0 0.0
      %520 = vmatprep.subr.mxu0 0.0
      %521 = vmatpush1.msra.mxu0 0.0
      %522 = vmatprep.subr.mxu0 0.0
      %523 = vmatpush1.msra.mxu0 0.0
      %524 = vmatprep.subr.mxu0 0.0
      %525 = vmatpush1.msra.mxu0 0.0
      %526 = vmatprep.subr.mxu0 0.0
      %527 = vmatpush1.msra.mxu0 0.0
      %528 = vmatprep.subr.mxu0 0.0
      %529 = vmatpush1.msra.mxu0 0.0
      %530 = vmatprep.subr.mxu0 0.0
      %531 = vmatpush1.msra.mxu0 0.0
      %532 = vmatprep.subr.mxu0 0.0
      %533 = vmatpush1.msra.mxu0 0.0
      %534 = vmatprep.subr.mxu0 0.0
      %535 = vmatpush1.msra.mxu0 0.0
      %536 = vmatprep.subr.mxu0 0.0
      %537 = vmatpush1.msra.mxu0 0.0
      %538 = vmatprep.subr.mxu0 0.0
      %539 = vmatpush1.msra.mxu0 0.0
      %540 = vmatprep.subr.mxu0 0.0
      %541 = vmatpush1.msra.mxu0 0.0
      %542 = vmatprep.subr.mxu0 0.0
      %543 = vmatpush1.msra.mxu0 0.0
      %544 = vmatprep.subr.mxu0 0.0
      %545 = vmatpush1.msra.mxu0 0.0
      %546 = vmatprep.subr.mxu0 0.0
      %547 = vmatpush1.msra.mxu0 0.0
      %548 = vmatprep.subr.mxu0 0.0
      %549 = vmatpush1.msra.mxu0 0.0
      %550 = vmatprep.subr.mxu0 0.0
      %551 = vmatpush1.msra.mxu0 0.0
      %552 = vmatprep.subr.mxu0 0.0
      %553 = vmatpush1.msra.mxu0 0.0
      %554 = vmatprep.subr.mxu0 0.0
      %555 = vmatpush1.msra.mxu0 0.0
      %556 = vmatprep.subr.mxu0 0.0
      %557 = vmatpush1.msra.mxu0 0.0
      %558 = vmatprep.subr.mxu0 0.0
      %559 = vmatpush1.msra.mxu0 0.0
      %560 = vmatprep.subr.mxu0 0.0
      %561 = vmatpush1.msra.mxu0 0.0
      %562 = vmatprep.subr.mxu0 0.0
      %563 = vmatpush1.msra.mxu0 0.0
      %564 = vmatprep.mubr.f32.mxu0 0.0
      %v565 = vand.u32 %v204, 4294901760
      %566 = vmatmul.mubr.f32.gmra.mrb[0].mxu0 %v565
      %v567 = vpop.f32.mrb[0].mxu0
      %v568 = vadd.f32 %v327, %v567
      %v569 = vpop.f32.mrb[0].mxu0
      %570 = vmatprep.mubr.f32.mxu0 0.0
      %v571 = vand.u32 %v207, 4294901760
      %572 = vmatmul.mubr.f32.gmra.mrb[0].mxu0 %v571
      %v573 = vpop.f32.mrb[0].mxu0
      %v574 = vadd.f32 %v337, %v573
      %v575 = vpop.f32.mrb[0].mxu0
      %576 = vmatprep.mubr.f32.mxu0 0.0
      %v577 = vand.u32 %v210, 4294901760
      %578 = vmatmul.mubr.f32.gmra.mrb[0].mxu0 %v577
      %v579 = vpop.f32.mrb[0].mxu0
      %v580 = vadd.f32 %v347, %v579
      %v581 = vpop.f32.mrb[0].mxu0
      %582 = vmatprep.mubr.f32.mxu0 0.0
      %v583 = vand.u32 %v213, 4294901760
      %584 = vmatmul.mubr.f32.gmra.mrb[0].mxu0 %v583
      %v585 = vpop.f32.mrb[0].mxu0
      %v586 = vadd.f32 %v357, %v585
      %v587 = vpop.f32.mrb[0].mxu0
      %588 = vmatprep.mubr.f32.mxu0 0.0
      %v589 = vand.u32 %v216, 4294901760
      %590 = vmatmul.mubr.f32.gmra.mrb[0].mxu0 %v589
      %v591 = vpop.f32.mrb[0].mxu0
      %v592 = vadd.f32 %v367, %v591
      %v593 = vpop.f32.mrb[0].mxu0
      %594 = vmatprep.mubr.f32.mxu0 0.0
      %v595 = vand.u32 %v219, 4294901760
      %596 = vmatmul.mubr.f32.gmra.mrb[0].mxu0 %v595
      %v597 = vpop.f32.mrb[0].mxu0
      %v598 = vadd.f32 %v377, %v597
      %v599 = vpop.f32.mrb[0].mxu0
      %600 = vmatprep.mubr.f32.mxu0 0.0
      %v601 = vand.u32 %v222, 4294901760
      %602 = vmatmul.mubr.f32.gmra.mrb[0].mxu0 %v601
      %v603 = vpop.f32.mrb[0].mxu0
      %v604 = vadd.f32 %v387, %v603
      %v605 = vpop.f32.mrb[0].mxu0
      %606 = vmatprep.mubr.f32.mxu0 0.0
      %v607 = vand.u32 %v225, 4294901760
      %608 = vmatmul.mubr.f32.gmra.mrb[0].mxu0 %v607
      %v609 = vpop.f32.mrb[0].mxu0
      %v610 = vadd.f32 %v397, %v609
      %v611 = vpop.f32.mrb[0].mxu0
      %612 = vmatprep.mubr.f32.mxu0 0.0
      %v613 = vand.u32 %v228, 4294901760
      %614 = vmatmul.mubr.f32.gmra.mrb[0].mxu0 %v613
      %v615 = vpop.f32.mrb[0].mxu0
      %v616 = vadd.f32 %v407, %v615
      %v617 = vpop.f32.mrb[0].mxu0
      %618 = vmatprep.mubr.f32.mxu0 0.0
      %v619 = vand.u32 %v231, 4294901760
      %620 = vmatmul.mubr.f32.gmra.mrb[0].mxu0 %v619
      %v621 = vpop.f32.mrb[0].mxu0
      %v622 = vadd.f32 %v417, %v621
      %v623 = vpop.f32.mrb[0].mxu0
      %624 = vmatprep.mubr.f32.mxu0 0.0
      %v625 = vand.u32 %v234, 4294901760
      %626 = vmatmul.mubr.f32.gmra.mrb[0].mxu0 %v625
      %v627 = vpop.f32.mrb[0].mxu0
      %v628 = vadd.f32 %v427, %v627
      %v629 = vpop.f32.mrb[0].mxu0
      %630 = vmatprep.mubr.f32.mxu0 0.0
      %v631 = vand.u32 %v237, 4294901760
      %632 = vmatmul.mubr.f32.gmra.mrb[0].mxu0 %v631
      %v633 = vpop.f32.mrb[0].mxu0
      %v634 = vadd.f32 %v437, %v633
      %v635 = vpop.f32.mrb[0].mxu0
      %636 = vmatprep.mubr.f32.mxu0 0.0
      %v637 = vand.u32 %v240, 4294901760
      %638 = vmatmul.mubr.f32.gmra.mrb[0].mxu0 %v637
      %v639 = vpop.f32.mrb[0].mxu0
      %v640 = vadd.f32 %v447, %v639
      %v641 = vpop.f32.mrb[0].mxu0
      %642 = vmatprep.mubr.f32.mxu0 0.0
      %v643 = vand.u32 %v243, 4294901760
      %644 = vmatmul.mubr.f32.gmra.mrb[0].mxu0 %v643
      %v645 = vpop.f32.mrb[0].mxu0
      %v646 = vadd.f32 %v457, %v645
      %v647 = vpop.f32.mrb[0].mxu0
      %648 = vmatprep.mubr.f32.mxu0 0.0
      %v649 = vand.u32 %v246, 4294901760
      %650 = vmatmul.mubr.f32.gmra.mrb[0].mxu0 %v649
      %v651 = vpop.f32.mrb[0].mxu0
      %v652 = vadd.f32 %v467, %v651
      %v653 = vpop.f32.mrb[0].mxu0
      %654 = vmatprep.mubr.f32.mxu0 0.0
      %v655 = vand.u32 %v249, 4294901760
      %656 = vmatmul.mubr.f32.gmra.mrb[0].mxu0 %v655
      %v657 = vpop.f32.mrb[0].mxu0
      %v658 = vadd.f32 %v477, %v657
      %v659 = vpop.f32.mrb[0].mxu0
      %660 = vdwg.mxu0
      %661 = vmatprep.subr.mxu0 0.0
      %v662 = vand.u32 %v187, 4294901760
      %v663 = vsub.f32 %v187, %v662
      %664 = vmatpush1.msra.mxu0 %v663
      %665 = vmatprep.subr.mxu0 0.0
      %v666 = vand.u32 %v188, 4294901760
      %v667 = vsub.f32 %v188, %v666
      %668 = vmatpush1.msra.mxu0 %v667
      %669 = vmatprep.subr.mxu0 0.0
      %v670 = vand.u32 %v189, 4294901760
      %v671 = vsub.f32 %v189, %v670
      %672 = vmatpush1.msra.mxu0 %v671
      %673 = vmatprep.subr.mxu0 0.0
      %v674 = vand.u32 %v190, 4294901760
      %v675 = vsub.f32 %v190, %v674
      %676 = vmatpush1.msra.mxu0 %v675
      %677 = vmatprep.subr.mxu0 0.0
      %678 = vmatpush1.msra.mxu0 0.0
      %679 = vmatprep.subr.mxu0 0.0
      %680 = vmatpush1.msra.mxu0 0.0
      %681 = vmatprep.subr.mxu0 0.0
      %682 = vmatpush1.msra.mxu0 0.0
      %683 = vmatprep.subr.mxu0 0.0
      %684 = vmatpush1.msra.mxu0 0.0
      %685 = vmatprep.subr.mxu0 0.0
      %686 = vmatpush1.msra.mxu0 0.0
      %687 = vmatprep.subr.mxu0 0.0
      %688 = vmatpush1.msra.mxu0 0.0
      %689 = vmatprep.subr.mxu0 0.0
      %690 = vmatpush1.msra.mxu0 0.0
      %691 = vmatprep.subr.mxu0 0.0
      %692 = vmatpush1.msra.mxu0 0.0
      %693 = vmatprep.subr.mxu0 0.0
      %694 = vmatpush1.msra.mxu0 0.0
      %695 = vmatprep.subr.mxu0 0.0
      %696 = vmatpush1.msra.mxu0 0.0
      %697 = vmatprep.subr.mxu0 0.0
      %698 = vmatpush1.msra.mxu0 0.0
      %699 = vmatprep.subr.mxu0 0.0
      %700 = vmatpush1.msra.mxu0 0.0
      %701 = vmatprep.subr.mxu0 0.0
      %702 = vmatpush1.msra.mxu0 0.0
      %703 = vmatprep.subr.mxu0 0.0
      %704 = vmatpush1.msra.mxu0 0.0
      %705 = vmatprep.subr.mxu0 0.0
      %706 = vmatpush1.msra.mxu0 0.0
      %707 = vmatprep.subr.mxu0 0.0
      %708 = vmatpush1.msra.mxu0 0.0
      %709 = vmatprep.subr.mxu0 0.0
      %710 = vmatpush1.msra.mxu0 0.0
      %711 = vmatprep.subr.mxu0 0.0
      %712 = vmatpush1.msra.mxu0 0.0
      %713 = vmatprep.subr.mxu0 0.0
      %714 = vmatpush1.msra.mxu0 0.0
      %715 = vmatprep.subr.mxu0 0.0
      %716 = vmatpush1.msra.mxu0 0.0
      %717 = vmatprep.subr.mxu0 0.0
      %718 = vmatpush1.msra.mxu0 0.0
      %719 = vmatprep.subr.mxu0 0.0
      %720 = vmatpush1.msra.mxu0 0.0
      %721 = vmatprep.subr.mxu0 0.0
      %722 = vmatpush1.msra.mxu0 0.0
      %723 = vmatprep.subr.mxu0 0.0
      %724 = vmatpush1.msra.mxu0 0.0
      %725 = vmatprep.subr.mxu0 0.0
      %726 = vmatpush1.msra.mxu0 0.0
      %727 = vmatprep.subr.mxu0 0.0
      %728 = vmatpush1.msra.mxu0 0.0
      %729 = vmatprep.subr.mxu0 0.0
      %730 = vmatpush1.msra.mxu0 0.0
      %731 = vmatprep.subr.mxu0 0.0
      %732 = vmatpush1.msra.mxu0 0.0
      %733 = vmatprep.mubr.f32.mxu0 0.0
      %v734 = vand.u32 %v204, 4294901760
      %v735 = vsub.f32 %v204, %v734
      %736 = vmatmul.mubr.f32.gmra.mrb[0].mxu0 %v735
      %v737 = vpop.f32.mrb[0].mxu0
      %v738 = vadd.f32 %v568, %v737
      %v739 = vpop.f32.mrb[0].mxu0
      %740 = vmatprep.mubr.f32.mxu0 0.0
      %v741 = vand.u32 %v207, 4294901760
      %v742 = vsub.f32 %v207, %v741
      %743 = vmatmul.mubr.f32.gmra.mrb[0].mxu0 %v742
      %v744 = vpop.f32.mrb[0].mxu0
      %v745 = vadd.f32 %v574, %v744
      %v746 = vpop.f32.mrb[0].mxu0
      %747 = vmatprep.mubr.f32.mxu0 0.0
      %v748 = vand.u32 %v210, 4294901760
      %v749 = vsub.f32 %v210, %v748
      %750 = vmatmul.mubr.f32.gmra.mrb[0].mxu0 %v749
      %v751 = vpop.f32.mrb[0].mxu0
      %v752 = vadd.f32 %v580, %v751
      %v753 = vpop.f32.mrb[0].mxu0
      %754 = vmatprep.mubr.f32.mxu0 0.0
      %v755 = vand.u32 %v213, 4294901760
      %v756 = vsub.f32 %v213, %v755
      %757 = vmatmul.mubr.f32.gmra.mrb[0].mxu0 %v756
      %v758 = vpop.f32.mrb[0].mxu0
      %v759 = vadd.f32 %v586, %v758
      %v760 = vpop.f32.mrb[0].mxu0
      %761 = vmatprep.mubr.f32.mxu0 0.0
      %v762 = vand.u32 %v216, 4294901760
      %v763 = vsub.f32 %v216, %v762
      %764 = vmatmul.mubr.f32.gmra.mrb[0].mxu0 %v763
      %v765 = vpop.f32.mrb[0].mxu0
      %v766 = vadd.f32 %v592, %v765
      %v767 = vpop.f32.mrb[0].mxu0
      %768 = vmatprep.mubr.f32.mxu0 0.0
      %v769 = vand.u32 %v219, 4294901760
      %v770 = vsub.f32 %v219, %v769
      %771 = vmatmul.mubr.f32.gmra.mrb[0].mxu0 %v770
      %v772 = vpop.f32.mrb[0].mxu0
      %v773 = vadd.f32 %v598, %v772
      %v774 = vpop.f32.mrb[0].mxu0
      %775 = vmatprep.mubr.f32.mxu0 0.0
      %v776 = vand.u32 %v222, 4294901760
      %v777 = vsub.f32 %v222, %v776
      %778 = vmatmul.mubr.f32.gmra.mrb[0].mxu0 %v777
      %v779 = vpop.f32.mrb[0].mxu0
      %v780 = vadd.f32 %v604, %v779
      %v781 = vpop.f32.mrb[0].mxu0
      %782 = vmatprep.mubr.f32.mxu0 0.0
      %v783 = vand.u32 %v225, 4294901760
      %v784 = vsub.f32 %v225, %v783
      %785 = vmatmul.mubr.f32.gmra.mrb[0].mxu0 %v784
      %v786 = vpop.f32.mrb[0].mxu0
      %v787 = vadd.f32 %v610, %v786
      %v788 = vpop.f32.mrb[0].mxu0
      %789 = vmatprep.mubr.f32.mxu0 0.0
      %v790 = vand.u32 %v228, 4294901760
      %v791 = vsub.f32 %v228, %v790
      %792 = vmatmul.mubr.f32.gmra.mrb[0].mxu0 %v791
      %v793 = vpop.f32.mrb[0].mxu0
      %v794 = vadd.f32 %v616, %v793
      %v795 = vpop.f32.mrb[0].mxu0
      %796 = vmatprep.mubr.f32.mxu0 0.0
      %v797 = vand.u32 %v231, 4294901760
      %v798 = vsub.f32 %v231, %v797
      %799 = vmatmul.mubr.f32.gmra.mrb[0].mxu0 %v798
      %v800 = vpop.f32.mrb[0].mxu0
      %v801 = vadd.f32 %v622, %v800
      %v802 = vpop.f32.mrb[0].mxu0
      %803 = vmatprep.mubr.f32.mxu0 0.0
      %v804 = vand.u32 %v234, 4294901760
      %v805 = vsub.f32 %v234, %v804
      %806 = vmatmul.mubr.f32.gmra.mrb[0].mxu0 %v805
      %v807 = vpop.f32.mrb[0].mxu0
      %v808 = vadd.f32 %v628, %v807
      %v809 = vpop.f32.mrb[0].mxu0
      %810 = vmatprep.mubr.f32.mxu0 0.0
      %v811 = vand.u32 %v237, 4294901760
      %v812 = vsub.f32 %v237, %v811
      %813 = vmatmul.mubr.f32.gmra.mrb[0].mxu0 %v812
      %v814 = vpop.f32.mrb[0].mxu0
      %v815 = vadd.f32 %v634, %v814
      %v816 = vpop.f32.mrb[0].mxu0
      %817 = vmatprep.mubr.f32.mxu0 0.0
      %v818 = vand.u32 %v240, 4294901760
      %v819 = vsub.f32 %v240, %v818
      %820 = vmatmul.mubr.f32.gmra.mrb[0].mxu0 %v819
      %v821 = vpop.f32.mrb[0].mxu0
      %v822 = vadd.f32 %v640, %v821
      %v823 = vpop.f32.mrb[0].mxu0
      %824 = vmatprep.mubr.f32.mxu0 0.0
      %v825 = vand.u32 %v243, 4294901760
      %v826 = vsub.f32 %v243, %v825
      %827 = vmatmul.mubr.f32.gmra.mrb[0].mxu0 %v826
      %v828 = vpop.f32.mrb[0].mxu0
      %v829 = vadd.f32 %v646, %v828
      %v830 = vpop.f32.mrb[0].mxu0
      %831 = vmatprep.mubr.f32.mxu0 0.0
      %v832 = vand.u32 %v246, 4294901760
      %v833 = vsub.f32 %v246, %v832
      %834 = vmatmul.mubr.f32.gmra.mrb[0].mxu0 %v833
      %v835 = vpop.f32.mrb[0].mxu0
      %v836 = vadd.f32 %v652, %v835
      %v837 = vpop.f32.mrb[0].mxu0
      %838 = vmatprep.mubr.f32.mxu0 0.0
      %v839 = vand.u32 %v249, 4294901760
      %v840 = vsub.f32 %v249, %v839
      %841 = vmatmul.mubr.f32.gmra.mrb[0].mxu0 %v840
      %v842 = vpop.f32.mrb[0].mxu0
      %v843 = vadd.f32 %v658, %v842
      %v844 = vpop.f32.mrb[0].mxu0
      %845 = vdwg.mxu0
      %846 = vmatprep.subr.mxu0 0.0
      %v847 = vand.u32 %v187, 4294901760
      %848 = vmatpush1.msra.mxu0 %v847
      %849 = vmatprep.subr.mxu0 0.0
      %v850 = vand.u32 %v188, 4294901760
      %851 = vmatpush1.msra.mxu0 %v850
      %852 = vmatprep.subr.mxu0 0.0
      %v853 = vand.u32 %v189, 4294901760
      %854 = vmatpush1.msra.mxu0 %v853
      %855 = vmatprep.subr.mxu0 0.0
      %v856 = vand.u32 %v190, 4294901760
      %857 = vmatpush1.msra.mxu0 %v856
      %858 = vmatprep.subr.mxu0 0.0
      %859 = vmatpush1.msra.mxu0 0.0
      %860 = vmatprep.subr.mxu0 0.0
      %861 = vmatpush1.msra.mxu0 0.0
      %862 = vmatprep.subr.mxu0 0.0
      %863 = vmatpush1.msra.mxu0 0.0
      %864 = vmatprep.subr.mxu0 0.0
      %865 = vmatpush1.msra.mxu0 0.0
      %866 = vmatprep.subr.mxu0 0.0
      %867 = vmatpush1.msra.mxu0 0.0
      %868 = vmatprep.subr.mxu0 0.0
      %869 = vmatpush1.msra.mxu0 0.0
      %870 = vmatprep.subr.mxu0 0.0
      %871 = vmatpush1.msra.mxu0 0.0
      %872 = vmatprep.subr.mxu0 0.0
      %873 = vmatpush1.msra.mxu0 0.0
      %874 = vmatprep.subr.mxu0 0.0
      %875 = vmatpush1.msra.mxu0 0.0
      %876 = vmatprep.subr.mxu0 0.0
      %877 = vmatpush1.msra.mxu0 0.0
      %878 = vmatprep.subr.mxu0 0.0
      %879 = vmatpush1.msra.mxu0 0.0
      %880 = vmatprep.subr.mxu0 0.0
      %881 = vmatpush1.msra.mxu0 0.0
      %882 = vmatprep.subr.mxu0 0.0
      %883 = vmatpush1.msra.mxu0 0.0
      %884 = vmatprep.subr.mxu0 0.0
      %885 = vmatpush1.msra.mxu0 0.0
      %886 = vmatprep.subr.mxu0 0.0
      %887 = vmatpush1.msra.mxu0 0.0
      %888 = vmatprep.subr.mxu0 0.0
      %889 = vmatpush1.msra.mxu0 0.0
      %890 = vmatprep.subr.mxu0 0.0
      %891 = vmatpush1.msra.mxu0 0.0
      %892 = vmatprep.subr.mxu0 0.0
      %893 = vmatpush1.msra.mxu0 0.0
      %894 = vmatprep.subr.mxu0 0.0
      %895 = vmatpush1.msra.mxu0 0.0
      %896 = vmatprep.subr.mxu0 0.0
      %897 = vmatpush1.msra.mxu0 0.0
      %898 = vmatprep.subr.mxu0 0.0
      %899 = vmatpush1.msra.mxu0 0.0
      %900 = vmatprep.subr.mxu0 0.0
      %901 = vmatpush1.msra.mxu0 0.0
      %902 = vmatprep.subr.mxu0 0.0
      %903 = vmatpush1.msra.mxu0 0.0
      %904 = vmatprep.subr.mxu0 0.0
      %905 = vmatpush1.msra.mxu0 0.0
      %906 = vmatprep.subr.mxu0 0.0
      %907 = vmatpush1.msra.mxu0 0.0
      %908 = vmatprep.subr.mxu0 0.0
      %909 = vmatpush1.msra.mxu0 0.0
      %910 = vmatprep.subr.mxu0 0.0
      %911 = vmatpush1.msra.mxu0 0.0
      %912 = vmatprep.subr.mxu0 0.0
      %913 = vmatpush1.msra.mxu0 0.0
      %914 = vmatprep.mubr.f32.mxu0 0.0
      %v915 = vand.u32 %v204, 4294901760
      %v916 = vsub.f32 %v204, %v915
      %v917 = vand.u32 %v916, 4294901760
      %918 = vmatmul.mubr.f32.gmra.mrb[0].mxu0 %v917
      %v919 = vpop.f32.mrb[0].mxu0
      %v920 = vadd.f32 %v738, %v919
      %v921 = vpop.f32.mrb[0].mxu0
      %922 = vmatprep.mubr.f32.mxu0 0.0
      %v923 = vand.u32 %v207, 4294901760
      %v924 = vsub.f32 %v207, %v923
      %v925 = vand.u32 %v924, 4294901760
      %926 = vmatmul.mubr.f32.gmra.mrb[0].mxu0 %v925
      %v927 = vpop.f32.mrb[0].mxu0
      %v928 = vadd.f32 %v745, %v927
      %v929 = vpop.f32.mrb[0].mxu0
      %930 = vmatprep.mubr.f32.mxu0 0.0
      %v931 = vand.u32 %v210, 4294901760
      %v932 = vsub.f32 %v210, %v931
      %v933 = vand.u32 %v932, 4294901760
      %934 = vmatmul.mubr.f32.gmra.mrb[0].mxu0 %v933
      %v935 = vpop.f32.mrb[0].mxu0
      %v936 = vadd.f32 %v752, %v935
      %v937 = vpop.f32.mrb[0].mxu0
      %938 = vmatprep.mubr.f32.mxu0 0.0
      %v939 = vand.u32 %v213, 4294901760
      %v940 = vsub.f32 %v213, %v939
      %v941 = vand.u32 %v940, 4294901760
      %942 = vmatmul.mubr.f32.gmra.mrb[0].mxu0 %v941
      %v943 = vpop.f32.mrb[0].mxu0
      %v944 = vadd.f32 %v759, %v943
      %v945 = vpop.f32.mrb[0].mxu0
      %946 = vmatprep.mubr.f32.mxu0 0.0
      %v947 = vand.u32 %v216, 4294901760
      %v948 = vsub.f32 %v216, %v947
      %v949 = vand.u32 %v948, 4294901760
      %950 = vmatmul.mubr.f32.gmra.mrb[0].mxu0 %v949
      %v951 = vpop.f32.mrb[0].mxu0
      %v952 = vadd.f32 %v766, %v951
      %v953 = vpop.f32.mrb[0].mxu0
      %954 = vmatprep.mubr.f32.mxu0 0.0
      %v955 = vand.u32 %v219, 4294901760
      %v956 = vsub.f32 %v219, %v955
      %v957 = vand.u32 %v956, 4294901760
      %958 = vmatmul.mubr.f32.gmra.mrb[0].mxu0 %v957
      %v959 = vpop.f32.mrb[0].mxu0
      %v960 = vadd.f32 %v773, %v959
      %v961 = vpop.f32.mrb[0].mxu0
      %962 = vmatprep.mubr.f32.mxu0 0.0
      %v963 = vand.u32 %v222, 4294901760
      %v964 = vsub.f32 %v222, %v963
      %v965 = vand.u32 %v964, 4294901760
      %966 = vmatmul.mubr.f32.gmra.mrb[0].mxu0 %v965
      %v967 = vpop.f32.mrb[0].mxu0
      %v968 = vadd.f32 %v780, %v967
      %v969 = vpop.f32.mrb[0].mxu0
      %970 = vmatprep.mubr.f32.mxu0 0.0
      %v971 = vand.u32 %v225, 4294901760
      %v972 = vsub.f32 %v225, %v971
      %v973 = vand.u32 %v972, 4294901760
      %974 = vmatmul.mubr.f32.gmra.mrb[0].mxu0 %v973
      %v975 = vpop.f32.mrb[0].mxu0
      %v976 = vadd.f32 %v787, %v975
      %v977 = vpop.f32.mrb[0].mxu0
      %978 = vmatprep.mubr.f32.mxu0 0.0
      %v979 = vand.u32 %v228, 4294901760
      %v980 = vsub.f32 %v228, %v979
      %v981 = vand.u32 %v980, 4294901760
      %982 = vmatmul.mubr.f32.gmra.mrb[0].mxu0 %v981
      %v983 = vpop.f32.mrb[0].mxu0
      %v984 = vadd.f32 %v794, %v983
      %v985 = vpop.f32.mrb[0].mxu0
      %986 = vmatprep.mubr.f32.mxu0 0.0
      %v987 = vand.u32 %v231, 4294901760
      %v988 = vsub.f32 %v231, %v987
      %v989 = vand.u32 %v988, 4294901760
      %990 = vmatmul.mubr.f32.gmra.mrb[0].mxu0 %v989
      %v991 = vpop.f32.mrb[0].mxu0
      %v992 = vadd.f32 %v801, %v991
      %v993 = vpop.f32.mrb[0].mxu0
      %994 = vmatprep.mubr.f32.mxu0 0.0
      %v995 = vand.u32 %v234, 4294901760
      %v996 = vsub.f32 %v234, %v995
      %v997 = vand.u32 %v996, 4294901760
      %998 = vmatmul.mubr.f32.gmra.mrb[0].mxu0 %v997
      %v999 = vpop.f32.mrb[0].mxu0
      %v1000 = vadd.f32 %v808, %v999
      %v1001 = vpop.f32.mrb[0].mxu0
      %1002 = vmatprep.mubr.f32.mxu0 0.0
      %v1003 = vand.u32 %v237, 4294901760
      %v1004 = vsub.f32 %v237, %v1003
      %v1005 = vand.u32 %v1004, 4294901760
      %1006 = vmatmul.mubr.f32.gmra.mrb[0].mxu0 %v1005
      %v1007 = vpop.f32.mrb[0].mxu0
      %v1008 = vadd.f32 %v815, %v1007
      %v1009 = vpop.f32.mrb[0].mxu0
      %1010 = vmatprep.mubr.f32.mxu0 0.0
      %v1011 = vand.u32 %v240, 4294901760
      %v1012 = vsub.f32 %v240, %v1011
      %v1013 = vand.u32 %v1012, 4294901760
      %1014 = vmatmul.mubr.f32.gmra.mrb[0].mxu0 %v1013
      %v1015 = vpop.f32.mrb[0].mxu0
      %v1016 = vadd.f32 %v822, %v1015
      %v1017 = vpop.f32.mrb[0].mxu0
      %1018 = vmatprep.mubr.f32.mxu0 0.0
      %v1019 = vand.u32 %v243, 4294901760
      %v1020 = vsub.f32 %v243, %v1019
      %v1021 = vand.u32 %v1020, 4294901760
      %1022 = vmatmul.mubr.f32.gmra.mrb[0].mxu0 %v1021
      %v1023 = vpop.f32.mrb[0].mxu0
      %v1024 = vadd.f32 %v829, %v1023
      %v1025 = vpop.f32.mrb[0].mxu0
      %1026 = vmatprep.mubr.f32.mxu0 0.0
      %v1027 = vand.u32 %v246, 4294901760
      %v1028 = vsub.f32 %v246, %v1027
      %v1029 = vand.u32 %v1028, 4294901760
      %1030 = vmatmul.mubr.f32.gmra.mrb[0].mxu0 %v1029
      %v1031 = vpop.f32.mrb[0].mxu0
      %v1032 = vadd.f32 %v836, %v1031
      %v1033 = vpop.f32.mrb[0].mxu0
      %1034 = vmatprep.mubr.f32.mxu0 0.0
      %v1035 = vand.u32 %v249, 4294901760
      %v1036 = vsub.f32 %v249, %v1035
      %v1037 = vand.u32 %v1036, 4294901760
      %1038 = vmatmul.mubr.f32.gmra.mrb[0].mxu0 %v1037
      %v1039 = vpop.f32.mrb[0].mxu0
      %v1040 = vadd.f32 %v843, %v1039
      %v1041 = vpop.f32.mrb[0].mxu0
      %1042 = vdwg.mxu0
      %1043 = vmatprep.subr.mxu0 0.0
      %v1044 = vand.u32 %v187, 4294901760
      %v1045 = vsub.f32 %v187, %v1044
      %v1046 = vand.u32 %v1045, 4294901760
      %1047 = vmatpush1.msra.mxu0 %v1046
      %1048 = vmatprep.subr.mxu0 0.0
      %v1049 = vand.u32 %v188, 4294901760
      %v1050 = vsub.f32 %v188, %v1049
      %v1051 = vand.u32 %v1050, 4294901760
      %1052 = vmatpush1.msra.mxu0 %v1051
      %1053 = vmatprep.subr.mxu0 0.0
      %v1054 = vand.u32 %v189, 4294901760
      %v1055 = vsub.f32 %v189, %v1054
      %v1056 = vand.u32 %v1055, 4294901760
      %1057 = vmatpush1.msra.mxu0 %v1056
      %1058 = vmatprep.subr.mxu0 0.0
      %v1059 = vand.u32 %v190, 4294901760
      %v1060 = vsub.f32 %v190, %v1059
      %v1061 = vand.u32 %v1060, 4294901760
      %1062 = vmatpush1.msra.mxu0 %v1061
      %1063 = vmatprep.subr.mxu0 0.0
      %1064 = vmatpush1.msra.mxu0 0.0
      %1065 = vmatprep.subr.mxu0 0.0
      %1066 = vmatpush1.msra.mxu0 0.0
      %1067 = vmatprep.subr.mxu0 0.0
      %1068 = vmatpush1.msra.mxu0 0.0
      %1069 = vmatprep.subr.mxu0 0.0
      %1070 = vmatpush1.msra.mxu0 0.0
      %1071 = vmatprep.subr.mxu0 0.0
      %1072 = vmatpush1.msra.mxu0 0.0
      %1073 = vmatprep.subr.mxu0 0.0
      %1074 = vmatpush1.msra.mxu0 0.0
      %1075 = vmatprep.subr.mxu0 0.0
      %1076 = vmatpush1.msra.mxu0 0.0
      %1077 = vmatprep.subr.mxu0 0.0
      %1078 = vmatpush1.msra.mxu0 0.0
      %1079 = vmatprep.subr.mxu0 0.0
      %1080 = vmatpush1.msra.mxu0 0.0
      %1081 = vmatprep.subr.mxu0 0.0
      %1082 = vmatpush1.msra.mxu0 0.0
      %1083 = vmatprep.subr.mxu0 0.0
      %1084 = vmatpush1.msra.mxu0 0.0
      %1085 = vmatprep.subr.mxu0 0.0
      %1086 = vmatpush1.msra.mxu0 0.0
      %1087 = vmatprep.subr.mxu0 0.0
      %1088 = vmatpush1.msra.mxu0 0.0
      %1089 = vmatprep.subr.mxu0 0.0
      %1090 = vmatpush1.msra.mxu0 0.0
      %1091 = vmatprep.subr.mxu0 0.0
      %1092 = vmatpush1.msra.mxu0 0.0
      %1093 = vmatprep.subr.mxu0 0.0
      %1094 = vmatpush1.msra.mxu0 0.0
      %1095 = vmatprep.subr.mxu0 0.0
      %1096 = vmatpush1.msra.mxu0 0.0
      %1097 = vmatprep.subr.mxu0 0.0
      %1098 = vmatpush1.msra.mxu0 0.0
      %1099 = vmatprep.subr.mxu0 0.0
      %1100 = vmatpush1.msra.mxu0 0.0
      %1101 = vmatprep.subr.mxu0 0.0
      %1102 = vmatpush1.msra.mxu0 0.0
      %1103 = vmatprep.subr.mxu0 0.0
      %1104 = vmatpush1.msra.mxu0 0.0
      %1105 = vmatprep.subr.mxu0 0.0
      %1106 = vmatpush1.msra.mxu0 0.0
      %1107 = vmatprep.subr.mxu0 0.0
      %1108 = vmatpush1.msra.mxu0 0.0
      %1109 = vmatprep.subr.mxu0 0.0
      %1110 = vmatpush1.msra.mxu0 0.0
      %1111 = vmatprep.subr.mxu0 0.0
      %1112 = vmatpush1.msra.mxu0 0.0
      %1113 = vmatprep.subr.mxu0 0.0
      %1114 = vmatpush1.msra.mxu0 0.0
      %1115 = vmatprep.subr.mxu0 0.0
      %1116 = vmatpush1.msra.mxu0 0.0
      %1117 = vmatprep.subr.mxu0 0.0
      %1118 = vmatpush1.msra.mxu0 0.0
      %1119 = vmatprep.mubr.f32.mxu0 0.0
      %v1120 = vand.u32 %v204, 4294901760
      %1121 = vmatmul.mubr.f32.gmra.mrb[0].mxu0 %v1120
      %v1122 = vpop.f32.mrb[0].mxu0
      %v1123 = vadd.f32 %v920, %v1122
      %v1124 = vpop.f32.mrb[0].mxu0
      %1125 = vmatprep.mubr.f32.mxu0 0.0
      %v1126 = vand.u32 %v207, 4294901760
      %1127 = vmatmul.mubr.f32.gmra.mrb[0].mxu0 %v1126
      %v1128 = vpop.f32.mrb[0].mxu0
      %v1129 = vadd.f32 %v928, %v1128
      %v1130 = vpop.f32.mrb[0].mxu0
      %1131 = vmatprep.mubr.f32.mxu0 0.0
      %v1132 = vand.u32 %v210, 4294901760
      %1133 = vmatmul.mubr.f32.gmra.mrb[0].mxu0 %v1132
      %v1134 = vpop.f32.mrb[0].mxu0
      %v1135 = vadd.f32 %v936, %v1134
      %v1136 = vpop.f32.mrb[0].mxu0
      %1137 = vmatprep.mubr.f32.mxu0 0.0
      %v1138 = vand.u32 %v213, 4294901760
      %1139 = vmatmul.mubr.f32.gmra.mrb[0].mxu0 %v1138
      %v1140 = vpop.f32.mrb[0].mxu0
      %v1141 = vadd.f32 %v944, %v1140
      %v1142 = vpop.f32.mrb[0].mxu0
      %1143 = vmatprep.mubr.f32.mxu0 0.0
      %v1144 = vand.u32 %v216, 4294901760
      %1145 = vmatmul.mubr.f32.gmra.mrb[0].mxu0 %v1144
      %v1146 = vpop.f32.mrb[0].mxu0
      %v1147 = vadd.f32 %v952, %v1146
      %v1148 = vpop.f32.mrb[0].mxu0
      %1149 = vmatprep.mubr.f32.mxu0 0.0
      %v1150 = vand.u32 %v219, 4294901760
      %1151 = vmatmul.mubr.f32.gmra.mrb[0].mxu0 %v1150
      %v1152 = vpop.f32.mrb[0].mxu0
      %v1153 = vadd.f32 %v960, %v1152
      %v1154 = vpop.f32.mrb[0].mxu0
      %1155 = vmatprep.mubr.f32.mxu0 0.0
      %v1156 = vand.u32 %v222, 4294901760
      %1157 = vmatmul.mubr.f32.gmra.mrb[0].mxu0 %v1156
      %v1158 = vpop.f32.mrb[0].mxu0
      %v1159 = vadd.f32 %v968, %v1158
      %v1160 = vpop.f32.mrb[0].mxu0
      %1161 = vmatprep.mubr.f32.mxu0 0.0
      %v1162 = vand.u32 %v225, 4294901760
      %1163 = vmatmul.mubr.f32.gmra.mrb[0].mxu0 %v1162
      %v1164 = vpop.f32.mrb[0].mxu0
      %v1165 = vadd.f32 %v976, %v1164
      %v1166 = vpop.f32.mrb[0].mxu0
      %1167 = vmatprep.mubr.f32.mxu0 0.0
      %v1168 = vand.u32 %v228, 4294901760
      %1169 = vmatmul.mubr.f32.gmra.mrb[0].mxu0 %v1168
      %v1170 = vpop.f32.mrb[0].mxu0
      %v1171 = vadd.f32 %v984, %v1170
      %v1172 = vpop.f32.mrb[0].mxu0
      %1173 = vmatprep.mubr.f32.mxu0 0.0
      %v1174 = vand.u32 %v231, 4294901760
      %1175 = vmatmul.mubr.f32.gmra.mrb[0].mxu0 %v1174
      %v1176 = vpop.f32.mrb[0].mxu0
      %v1177 = vadd.f32 %v992, %v1176
      %v1178 = vpop.f32.mrb[0].mxu0
      %1179 = vmatprep.mubr.f32.mxu0 0.0
      %v1180 = vand.u32 %v234, 4294901760
      %1181 = vmatmul.mubr.f32.gmra.mrb[0].mxu0 %v1180
      %v1182 = vpop.f32.mrb[0].mxu0
      %v1183 = vadd.f32 %v1000, %v1182
      %v1184 = vpop.f32.mrb[0].mxu0
      %1185 = vmatprep.mubr.f32.mxu0 0.0
      %v1186 = vand.u32 %v237, 4294901760
      %1187 = vmatmul.mubr.f32.gmra.mrb[0].mxu0 %v1186
      %v1188 = vpop.f32.mrb[0].mxu0
      %v1189 = vadd.f32 %v1008, %v1188
      %v1190 = vpop.f32.mrb[0].mxu0
      %1191 = vmatprep.mubr.f32.mxu0 0.0
      %v1192 = vand.u32 %v240, 4294901760
      %1193 = vmatmul.mubr.f32.gmra.mrb[0].mxu0 %v1192
      %v1194 = vpop.f32.mrb[0].mxu0
      %v1195 = vadd.f32 %v1016, %v1194
      %v1196 = vpop.f32.mrb[0].mxu0
      %1197 = vmatprep.mubr.f32.mxu0 0.0
      %v1198 = vand.u32 %v243, 4294901760
      %1199 = vmatmul.mubr.f32.gmra.mrb[0].mxu0 %v1198
      %v1200 = vpop.f32.mrb[0].mxu0
      %v1201 = vadd.f32 %v1024, %v1200
      %v1202 = vpop.f32.mrb[0].mxu0
      %1203 = vmatprep.mubr.f32.mxu0 0.0
      %v1204 = vand.u32 %v246, 4294901760
      %1205 = vmatmul.mubr.f32.gmra.mrb[0].mxu0 %v1204
      %v1206 = vpop.f32.mrb[0].mxu0
      %v1207 = vadd.f32 %v1032, %v1206
      %v1208 = vpop.f32.mrb[0].mxu0
      %1209 = vmatprep.mubr.f32.mxu0 0.0
      %v1210 = vand.u32 %v249, 4294901760
      %1211 = vmatmul.mubr.f32.gmra.mrb[0].mxu0 %v1210
      %v1212 = vpop.f32.mrb[0].mxu0
      %v1213 = vadd.f32 %v1040, %v1212
      %v1214 = vpop.f32.mrb[0].mxu0
      %1215 = vdwg.mxu0
      %1216 = vmatprep.subr.mxu0 0.0
      %v1217 = vand.u32 %v187, 4294901760
      %1218 = vmatpush1.msra.mxu0 %v1217
      %1219 = vmatprep.subr.mxu0 0.0
      %v1220 = vand.u32 %v188, 4294901760
      %1221 = vmatpush1.msra.mxu0 %v1220
      %1222 = vmatprep.subr.mxu0 0.0
      %v1223 = vand.u32 %v189, 4294901760
      %1224 = vmatpush1.msra.mxu0 %v1223
      %1225 = vmatprep.subr.mxu0 0.0
      %v1226 = vand.u32 %v190, 4294901760
      %1227 = vmatpush1.msra.mxu0 %v1226
      %1228 = vmatprep.subr.mxu0 0.0
      %1229 = vmatpush1.msra.mxu0 0.0
      %1230 = vmatprep.subr.mxu0 0.0
      %1231 = vmatpush1.msra.mxu0 0.0
      %1232 = vmatprep.subr.mxu0 0.0
      %1233 = vmatpush1.msra.mxu0 0.0
      %1234 = vmatprep.subr.mxu0 0.0
      %1235 = vmatpush1.msra.mxu0 0.0
      %1236 = vmatprep.subr.mxu0 0.0
      %1237 = vmatpush1.msra.mxu0 0.0
      %1238 = vmatprep.subr.mxu0 0.0
      %1239 = vmatpush1.msra.mxu0 0.0
      %1240 = vmatprep.subr.mxu0 0.0
      %1241 = vmatpush1.msra.mxu0 0.0
      %1242 = vmatprep.subr.mxu0 0.0
      %1243 = vmatpush1.msra.mxu0 0.0
      %1244 = vmatprep.subr.mxu0 0.0
      %1245 = vmatpush1.msra.mxu0 0.0
      %1246 = vmatprep.subr.mxu0 0.0
      %1247 = vmatpush1.msra.mxu0 0.0
      %1248 = vmatprep.subr.mxu0 0.0
      %1249 = vmatpush1.msra.mxu0 0.0
      %1250 = vmatprep.subr.mxu0 0.0
      %1251 = vmatpush1.msra.mxu0 0.0
      %1252 = vmatprep.subr.mxu0 0.0
      %1253 = vmatpush1.msra.mxu0 0.0
      %1254 = vmatprep.subr.mxu0 0.0
      %1255 = vmatpush1.msra.mxu0 0.0
      %1256 = vmatprep.subr.mxu0 0.0
      %1257 = vmatpush1.msra.mxu0 0.0
      %1258 = vmatprep.subr.mxu0 0.0
      %1259 = vmatpush1.msra.mxu0 0.0
      %1260 = vmatprep.subr.mxu0 0.0
      %1261 = vmatpush1.msra.mxu0 0.0
      %1262 = vmatprep.subr.mxu0 0.0
      %1263 = vmatpush1.msra.mxu0 0.0
      %1264 = vmatprep.subr.mxu0 0.0
      %1265 = vmatpush1.msra.mxu0 0.0
      %1266 = vmatprep.subr.mxu0 0.0
      %1267 = vmatpush1.msra.mxu0 0.0
      %1268 = vmatprep.subr.mxu0 0.0
      %1269 = vmatpush1.msra.mxu0 0.0
      %1270 = vmatprep.subr.mxu0 0.0
      %1271 = vmatpush1.msra.mxu0 0.0
      %1272 = vmatprep.subr.mxu0 0.0
      %1273 = vmatpush1.msra.mxu0 0.0
      %1274 = vmatprep.subr.mxu0 0.0
      %1275 = vmatpush1.msra.mxu0 0.0
      %1276 = vmatprep.subr.mxu0 0.0
      %1277 = vmatpush1.msra.mxu0 0.0
      %1278 = vmatprep.subr.mxu0 0.0
      %1279 = vmatpush1.msra.mxu0 0.0
      %1280 = vmatprep.subr.mxu0 0.0
      %1281 = vmatpush1.msra.mxu0 0.0
      %1282 = vmatprep.subr.mxu0 0.0
      %1283 = vmatpush1.msra.mxu0 0.0
      %1284 = vmatprep.mubr.f32.mxu0 0.0
      %v1285 = vand.u32 %v204, 4294901760
      %1286 = vmatmul.mubr.f32.gmra.mrb[0].mxu0 %v1285
      %v1287 = vpop.f32.mrb[0].mxu0
      %v1288 = vadd.f32 %v1123, %v1287
      %v1289 = vpop.f32.mrb[0].mxu0
      %1290 = vmatprep.mubr.f32.mxu0 0.0
      %v1291 = vand.u32 %v207, 4294901760
      %1292 = vmatmul.mubr.f32.gmra.mrb[0].mxu0 %v1291
      %v1293 = vpop.f32.mrb[0].mxu0
      %v1294 = vadd.f32 %v1129, %v1293
      %v1295 = vpop.f32.mrb[0].mxu0
      %1296 = vmatprep.mubr.f32.mxu0 0.0
      %v1297 = vand.u32 %v210, 4294901760
      %1298 = vmatmul.mubr.f32.gmra.mrb[0].mxu0 %v1297
      %v1299 = vpop.f32.mrb[0].mxu0
      %v1300 = vadd.f32 %v1135, %v1299
      %v1301 = vpop.f32.mrb[0].mxu0
      %1302 = vmatprep.mubr.f32.mxu0 0.0
      %v1303 = vand.u32 %v213, 4294901760
      %1304 = vmatmul.mubr.f32.gmra.mrb[0].mxu0 %v1303
      %v1305 = vpop.f32.mrb[0].mxu0
      %v1306 = vadd.f32 %v1141, %v1305
      %v1307 = vpop.f32.mrb[0].mxu0
      %1308 = vmatprep.mubr.f32.mxu0 0.0
      %v1309 = vand.u32 %v216, 4294901760
      %1310 = vmatmul.mubr.f32.gmra.mrb[0].mxu0 %v1309
      %v1311 = vpop.f32.mrb[0].mxu0
      %v1312 = vadd.f32 %v1147, %v1311
      %v1313 = vpop.f32.mrb[0].mxu0
      %1314 = vmatprep.mubr.f32.mxu0 0.0
      %v1315 = vand.u32 %v219, 4294901760
      %1316 = vmatmul.mubr.f32.gmra.mrb[0].mxu0 %v1315
      %v1317 = vpop.f32.mrb[0].mxu0
      %v1318 = vadd.f32 %v1153, %v1317
      %v1319 = vpop.f32.mrb[0].mxu0
      %1320 = vmatprep.mubr.f32.mxu0 0.0
      %v1321 = vand.u32 %v222, 4294901760
      %1322 = vmatmul.mubr.f32.gmra.mrb[0].mxu0 %v1321
      %v1323 = vpop.f32.mrb[0].mxu0
      %v1324 = vadd.f32 %v1159, %v1323
      %v1325 = vpop.f32.mrb[0].mxu0
      %1326 = vmatprep.mubr.f32.mxu0 0.0
      %v1327 = vand.u32 %v225, 4294901760
      %1328 = vmatmul.mubr.f32.gmra.mrb[0].mxu0 %v1327
      %v1329 = vpop.f32.mrb[0].mxu0
      %v1330 = vadd.f32 %v1165, %v1329
      %v1331 = vpop.f32.mrb[0].mxu0
      %1332 = vmatprep.mubr.f32.mxu0 0.0
      %v1333 = vand.u32 %v228, 4294901760
      %1334 = vmatmul.mubr.f32.gmra.mrb[0].mxu0 %v1333
      %v1335 = vpop.f32.mrb[0].mxu0
      %v1336 = vadd.f32 %v1171, %v1335
      %v1337 = vpop.f32.mrb[0].mxu0
      %1338 = vmatprep.mubr.f32.mxu0 0.0
      %v1339 = vand.u32 %v231, 4294901760
      %1340 = vmatmul.mubr.f32.gmra.mrb[0].mxu0 %v1339
      %v1341 = vpop.f32.mrb[0].mxu0
      %v1342 = vadd.f32 %v1177, %v1341
      %v1343 = vpop.f32.mrb[0].mxu0
      %1344 = vmatprep.mubr.f32.mxu0 0.0
      %v1345 = vand.u32 %v234, 4294901760
      %1346 = vmatmul.mubr.f32.gmra.mrb[0].mxu0 %v1345
      %v1347 = vpop.f32.mrb[0].mxu0
      %v1348 = vadd.f32 %v1183, %v1347
      %v1349 = vpop.f32.mrb[0].mxu0
      %1350 = vmatprep.mubr.f32.mxu0 0.0
      %v1351 = vand.u32 %v237, 4294901760
      %1352 = vmatmul.mubr.f32.gmra.mrb[0].mxu0 %v1351
      %v1353 = vpop.f32.mrb[0].mxu0
      %v1354 = vadd.f32 %v1189, %v1353
      %v1355 = vpop.f32.mrb[0].mxu0
      %1356 = vmatprep.mubr.f32.mxu0 0.0
      %v1357 = vand.u32 %v240, 4294901760
      %1358 = vmatmul.mubr.f32.gmra.mrb[0].mxu0 %v1357
      %v1359 = vpop.f32.mrb[0].mxu0
      %v1360 = vadd.f32 %v1195, %v1359
      %v1361 = vpop.f32.mrb[0].mxu0
      %1362 = vmatprep.mubr.f32.mxu0 0.0
      %v1363 = vand.u32 %v243, 4294901760
      %1364 = vmatmul.mubr.f32.gmra.mrb[0].mxu0 %v1363
      %v1365 = vpop.f32.mrb[0].mxu0
      %v1366 = vadd.f32 %v1201, %v1365
      %v1367 = vpop.f32.mrb[0].mxu0
      %1368 = vmatprep.mubr.f32.mxu0 0.0
      %v1369 = vand.u32 %v246, 4294901760
      %1370 = vmatmul.mubr.f32.gmra.mrb[0].mxu0 %v1369
      %v1371 = vpop.f32.mrb[0].mxu0
      %v1372 = vadd.f32 %v1207, %v1371
      %v1373 = vpop.f32.mrb[0].mxu0
      %1374 = vmatprep.mubr.f32.mxu0 0.0
      %v1375 = vand.u32 %v249, 4294901760
      %1376 = vmatmul.mubr.f32.gmra.mrb[0].mxu0 %v1375
      %v1377 = vpop.f32.mrb[0].mxu0
      %v1378 = vadd.f32 %v1213, %v1377
      %v1379 = vpop.f32.mrb[0].mxu0
      %1380 = vdwg.mxu0
      %v1381 = vmax.f32 %v1288, 0.0
      %v1382 = vmax.f32 %v1294, 0.0
      %v1383 = vmax.f32 %v1300, 0.0
      %v1384 = vmax.f32 %v1306, 0.0
      %v1385 = vmax.f32 %v1312, 0.0
      %v1386 = vmax.f32 %v1318, 0.0
      %v1387 = vmax.f32 %v1324, 0.0
      %v1388 = vmax.f32 %v1330, 0.0
      %v1389 = vmax.f32 %v1336, 0.0
      %v1390 = vmax.f32 %v1342, 0.0
      %v1391 = vmax.f32 %v1348, 0.0
      %v1392 = vmax.f32 %v1354, 0.0
      %v1393 = vmax.f32 %v1360, 0.0
      %v1394 = vmax.f32 %v1366, 0.0
      %v1395 = vmax.f32 %v1372, 0.0
      %v1396 = vmax.f32 %v1378, 0.0
      %vm1397 = vcmp.ne.f32.partialorder %v1288, %v1288
      %vm1398 = vcmp.ne.f32.partialorder %v1294, %v1294
      %vm1399 = vcmp.ne.f32.partialorder %v1300, %v1300
      %vm1400 = vcmp.ne.f32.partialorder %v1306, %v1306
      %vm1401 = vcmp.ne.f32.partialorder %v1312, %v1312
      %vm1402 = vcmp.ne.f32.partialorder %v1318, %v1318
      %vm1403 = vcmp.ne.f32.partialorder %v1324, %v1324
      %vm1404 = vcmp.ne.f32.partialorder %v1330, %v1330
      %vm1405 = vcmp.ne.f32.partialorder %v1336, %v1336
      %vm1406 = vcmp.ne.f32.partialorder %v1342, %v1342
      %vm1407 = vcmp.ne.f32.partialorder %v1348, %v1348
      %vm1408 = vcmp.ne.f32.partialorder %v1354, %v1354
      %vm1409 = vcmp.ne.f32.partialorder %v1360, %v1360
      %vm1410 = vcmp.ne.f32.partialorder %v1366, %v1366
      %vm1411 = vcmp.ne.f32.partialorder %v1372, %v1372
      %vm1412 = vcmp.ne.f32.partialorder %v1378, %v1378
      %v1413 = vadd.f32 %v1288, 0.0
      %v1414 = vadd.f32 %v1294, 0.0
      %v1415 = vadd.f32 %v1300, 0.0
      %v1416 = vadd.f32 %v1306, 0.0
      %v1417 = vadd.f32 %v1312, 0.0
      %v1418 = vadd.f32 %v1318, 0.0
      %v1419 = vadd.f32 %v1324, 0.0
      %v1420 = vadd.f32 %v1330, 0.0
      %v1421 = vadd.f32 %v1336, 0.0
      %v1422 = vadd.f32 %v1342, 0.0
      %v1423 = vadd.f32 %v1348, 0.0
      %v1424 = vadd.f32 %v1354, 0.0
      %v1425 = vadd.f32 %v1360, 0.0
      %v1426 = vadd.f32 %v1366, 0.0
      %v1427 = vadd.f32 %v1372, 0.0
      %v1428 = vadd.f32 %v1378, 0.0
      %v1429 = vand.u32 2147483647, %v1288
      %v1430 = vand.u32 2147483647, %v1294
      %v1431 = vand.u32 2147483647, %v1300
      %v1432 = vand.u32 2147483647, %v1306
      %v1433 = vand.u32 2147483647, %v1312
      %v1434 = vand.u32 2147483647, %v1318
      %v1435 = vand.u32 2147483647, %v1324
      %v1436 = vand.u32 2147483647, %v1330
      %v1437 = vand.u32 2147483647, %v1336
      %v1438 = vand.u32 2147483647, %v1342
      %v1439 = vand.u32 2147483647, %v1348
      %v1440 = vand.u32 2147483647, %v1354
      %v1441 = vand.u32 2147483647, %v1360
      %v1442 = vand.u32 2147483647, %v1366
      %v1443 = vand.u32 2147483647, %v1372
      %v1444 = vand.u32 2147483647, %v1378
      %v1445 = vsub.f32 0.0, %v1429
      %v1446 = vsub.f32 0.0, %v1430
      %v1447 = vsub.f32 0.0, %v1431
      %v1448 = vsub.f32 0.0, %v1432
      %v1449 = vsub.f32 0.0, %v1433
      %v1450 = vsub.f32 0.0, %v1434
      %v1451 = vsub.f32 0.0, %v1435
      %v1452 = vsub.f32 0.0, %v1436
      %v1453 = vsub.f32 0.0, %v1437
      %v1454 = vsub.f32 0.0, %v1438
      %v1455 = vsub.f32 0.0, %v1439
      %v1456 = vsub.f32 0.0, %v1440
      %v1457 = vsub.f32 0.0, %v1441
      %v1458 = vsub.f32 0.0, %v1442
      %v1459 = vsub.f32 0.0, %v1443
      %v1460 = vsub.f32 0.0, %v1444
      %v1461 = vmul.f32 %v1445, 1.442695
      %v1462 = vpow.pop %v1461
      %v1463 = vmul.f32 %v1446, 1.442695
      %v1464 = vpow.pop %v1463
      %v1465 = vmul.f32 %v1447, 1.442695
      %v1466 = vpow.pop %v1465
      %v1467 = vmul.f32 %v1448, 1.442695
      %v1468 = vpow.pop %v1467
      %v1469 = vmul.f32 %v1449, 1.442695
      %v1470 = vpow.pop %v1469
      %v1471 = vmul.f32 %v1450, 1.442695
      %v1472 = vpow.pop %v1471
      %v1473 = vmul.f32 %v1451, 1.442695
      %v1474 = vpow.pop %v1473
      %v1475 = vmul.f32 %v1452, 1.442695
      %v1476 = vpow.pop %v1475
      %v1477 = vmul.f32 %v1453, 1.442695
      %v1478 = vpow.pop %v1477
      %v1479 = vmul.f32 %v1454, 1.442695
      %v1480 = vpow.pop %v1479
      %v1481 = vmul.f32 %v1455, 1.442695
      %v1482 = vpow.pop %v1481
      %v1483 = vmul.f32 %v1456, 1.442695
      %v1484 = vpow.pop %v1483
      %v1485 = vmul.f32 %v1457, 1.442695
      %v1486 = vpow.pop %v1485
      %v1487 = vmul.f32 %v1458, 1.442695
      %v1488 = vpow.pop %v1487
      %v1489 = vmul.f32 %v1459, 1.442695
      %v1490 = vpow.pop %v1489
      %v1491 = vmul.f32 %v1460, 1.442695
      %v1492 = vpow.pop %v1491
      %v1493 = vadd.f32 %v1462, 1.0
      %v1494 = vlog2.pop %v1493
      %v1495 = vmul.f32 %v1494, 0.6931472
      %v1496 = vmul.f32 -0.5, %v1462
      %v1497 = vadd.f32 %v1496, 1.0
      %v1498 = vmul.f32 %v1497, %v1462
      %v1499 = vand.u32 2147483647, %v1462
      %vm1500 = vcmp.lt.f32.partialorder %v1499, 0.0004427343
      %v1501 = vsel %vm1500, %v1498, %v1495
      %v1502 = vadd.f32 %v1464, 1.0
      %v1503 = vlog2.pop %v1502
      %v1504 = vmul.f32 %v1503, 0.6931472
      %v1505 = vmul.f32 -0.5, %v1464
      %v1506 = vadd.f32 %v1505, 1.0
      %v1507 = vmul.f32 %v1506, %v1464
      %v1508 = vand.u32 2147483647, %v1464
      %vm1509 = vcmp.lt.f32.partialorder %v1508, 0.0004427343
      %v1510 = vsel %vm1509, %v1507, %v1504
      %v1511 = vadd.f32 %v1466, 1.0
      %v1512 = vlog2.pop %v1511
      %v1513 = vmul.f32 %v1512, 0.6931472
      %v1514 = vmul.f32 -0.5, %v1466
      %v1515 = vadd.f32 %v1514, 1.0
      %v1516 = vmul.f32 %v1515, %v1466
      %v1517 = vand.u32 2147483647, %v1466
      %vm1518 = vcmp.lt.f32.partialorder %v1517, 0.0004427343
      %v1519 = vsel %vm1518, %v1516, %v1513
      %v1520 = vadd.f32 %v1468, 1.0
      %v1521 = vlog2.pop %v1520
      %v1522 = vmul.f32 %v1521, 0.6931472
      %v1523 = vmul.f32 -0.5, %v1468
      %v1524 = vadd.f32 %v1523, 1.0
      %v1525 = vmul.f32 %v1524, %v1468
      %v1526 = vand.u32 2147483647, %v1468
      %vm1527 = vcmp.lt.f32.partialorder %v1526, 0.0004427343
      %v1528 = vsel %vm1527, %v1525, %v1522
      %v1529 = vadd.f32 %v1470, 1.0
      %v1530 = vlog2.pop %v1529
      %v1531 = vmul.f32 %v1530, 0.6931472
      %v1532 = vmul.f32 -0.5, %v1470
      %v1533 = vadd.f32 %v1532, 1.0
      %v1534 = vmul.f32 %v1533, %v1470
      %v1535 = vand.u32 2147483647, %v1470
      %vm1536 = vcmp.lt.f32.partialorder %v1535, 0.0004427343
      %v1537 = vsel %vm1536, %v1534, %v1531
      %v1538 = vadd.f32 %v1472, 1.0
      %v1539 = vlog2.pop %v1538
      %v1540 = vmul.f32 %v1539, 0.6931472
      %v1541 = vmul.f32 -0.5, %v1472
      %v1542 = vadd.f32 %v1541, 1.0
      %v1543 = vmul.f32 %v1542, %v1472
      %v1544 = vand.u32 2147483647, %v1472
      %vm1545 = vcmp.lt.f32.partialorder %v1544, 0.0004427343
      %v1546 = vsel %vm1545, %v1543, %v1540
      %v1547 = vadd.f32 %v1474, 1.0
      %v1548 = vlog2.pop %v1547
      %v1549 = vmul.f32 %v1548, 0.6931472
      %v1550 = vmul.f32 -0.5, %v1474
      %v1551 = vadd.f32 %v1550, 1.0
      %v1552 = vmul.f32 %v1551, %v1474
      %v1553 = vand.u32 2147483647, %v1474
      %vm1554 = vcmp.lt.f32.partialorder %v1553, 0.0004427343
      %v1555 = vsel %vm1554, %v1552, %v1549
      %v1556 = vadd.f32 %v1476, 1.0
      %v1557 = vlog2.pop %v1556
      %v1558 = vmul.f32 %v1557, 0.6931472
      %v1559 = vmul.f32 -0.5, %v1476
      %v1560 = vadd.f32 %v1559, 1.0
      %v1561 = vmul.f32 %v1560, %v1476
      %v1562 = vand.u32 2147483647, %v1476
      %vm1563 = vcmp.lt.f32.partialorder %v1562, 0.0004427343
      %v1564 = vsel %vm1563, %v1561, %v1558
      %v1565 = vadd.f32 %v1478, 1.0
      %v1566 = vlog2.pop %v1565
      %v1567 = vmul.f32 %v1566, 0.6931472
      %v1568 = vmul.f32 -0.5, %v1478
      %v1569 = vadd.f32 %v1568, 1.0
      %v1570 = vmul.f32 %v1569, %v1478
      %v1571 = vand.u32 2147483647, %v1478
      %vm1572 = vcmp.lt.f32.partialorder %v1571, 0.0004427343
      %v1573 = vsel %vm1572, %v1570, %v1567
      %v1574 = vadd.f32 %v1480, 1.0
      %v1575 = vlog2.pop %v1574
      %v1576 = vmul.f32 %v1575, 0.6931472
      %v1577 = vmul.f32 -0.5, %v1480
      %v1578 = vadd.f32 %v1577, 1.0
      %v1579 = vmul.f32 %v1578, %v1480
      %v1580 = vand.u32 2147483647, %v1480
      %vm1581 = vcmp.lt.f32.partialorder %v1580, 0.0004427343
      %v1582 = vsel %vm1581, %v1579, %v1576
      %v1583 = vadd.f32 %v1482, 1.0
      %v1584 = vlog2.pop %v1583
      %v1585 = vmul.f32 %v1584, 0.6931472
      %v1586 = vmul.f32 -0.5, %v1482
      %v1587 = vadd.f32 %v1586, 1.0
      %v1588 = vmul.f32 %v1587, %v1482
      %v1589 = vand.u32 2147483647, %v1482
      %vm1590 = vcmp.lt.f32.partialorder %v1589, 0.0004427343
      %v1591 = vsel %vm1590, %v1588, %v1585
      %v1592 = vadd.f32 %v1484, 1.0
      %v1593 = vlog2.pop %v1592
      %v1594 = vmul.f32 %v1593, 0.6931472
      %v1595 = vmul.f32 -0.5, %v1484
      %v1596 = vadd.f32 %v1595, 1.0
      %v1597 = vmul.f32 %v1596, %v1484
      %v1598 = vand.u32 2147483647, %v1484
      %vm1599 = vcmp.lt.f32.partialorder %v1598, 0.0004427343
      %v1600 = vsel %vm1599, %v1597, %v1594
      %v1601 = vadd.f32 %v1486, 1.0
      %v1602 = vlog2.pop %v1601
      %v1603 = vmul.f32 %v1602, 0.6931472
      %v1604 = vmul.f32 -0.5, %v1486
      %v1605 = vadd.f32 %v1604, 1.0
      %v1606 = vmul.f32 %v1605, %v1486
      %v1607 = vand.u32 2147483647, %v1486
      %vm1608 = vcmp.lt.f32.partialorder %v1607, 0.0004427343
      %v1609 = vsel %vm1608, %v1606, %v1603
      %v1610 = vadd.f32 %v1488, 1.0
      %v1611 = vlog2.pop %v1610
      %v1612 = vmul.f32 %v1611, 0.6931472
      %v1613 = vmul.f32 -0.5, %v1488
      %v1614 = vadd.f32 %v1613, 1.0
      %v1615 = vmul.f32 %v1614, %v1488
      %v1616 = vand.u32 2147483647, %v1488
      %vm1617 = vcmp.lt.f32.partialorder %v1616, 0.0004427343
      %v1618 = vsel %vm1617, %v1615, %v1612
      %v1619 = vadd.f32 %v1490, 1.0
      %v1620 = vlog2.pop %v1619
      %v1621 = vmul.f32 %v1620, 0.6931472
      %v1622 = vmul.f32 -0.5, %v1490
      %v1623 = vadd.f32 %v1622, 1.0
      %v1624 = vmul.f32 %v1623, %v1490
      %v1625 = vand.u32 2147483647, %v1490
      %vm1626 = vcmp.lt.f32.partialorder %v1625, 0.0004427343
      %v1627 = vsel %vm1626, %v1624, %v1621
      %v1628 = vadd.f32 %v1492, 1.0
      %v1629 = vlog2.pop %v1628
      %v1630 = vmul.f32 %v1629, 0.6931472
      %v1631 = vmul.f32 -0.5, %v1492
      %v1632 = vadd.f32 %v1631, 1.0
      %v1633 = vmul.f32 %v1632, %v1492
      %v1634 = vand.u32 2147483647, %v1492
      %vm1635 = vcmp.lt.f32.partialorder %v1634, 0.0004427343
      %v1636 = vsel %vm1635, %v1633, %v1630
      %v1637 = vadd.f32 %v1381, %v1501
      %v1638 = vadd.f32 %v1382, %v1510
      %v1639 = vadd.f32 %v1383, %v1519
      %v1640 = vadd.f32 %v1384, %v1528
      %v1641 = vadd.f32 %v1385, %v1537
      %v1642 = vadd.f32 %v1386, %v1546
      %v1643 = vadd.f32 %v1387, %v1555
      %v1644 = vadd.f32 %v1388, %v1564
      %v1645 = vadd.f32 %v1389, %v1573
      %v1646 = vadd.f32 %v1390, %v1582
      %v1647 = vadd.f32 %v1391, %v1591
      %v1648 = vadd.f32 %v1392, %v1600
      %v1649 = vadd.f32 %v1393, %v1609
      %v1650 = vadd.f32 %v1394, %v1618
      %v1651 = vadd.f32 %v1395, %v1627
      %v1652 = vadd.f32 %v1396, %v1636
      %v1653 = vsel %vm1397, %v1413, %v1637
      %v1654 = vsel %vm1398, %v1414, %v1638
      %v1655 = vsel %vm1399, %v1415, %v1639
      %v1656 = vsel %vm1400, %v1416, %v1640
      %v1657 = vsel %vm1401, %v1417, %v1641
      %v1658 = vsel %vm1402, %v1418, %v1642
      %v1659 = vsel %vm1403, %v1419, %v1643
      %v1660 = vsel %vm1404, %v1420, %v1644
      %v1661 = vsel %vm1405, %v1421, %v1645
      %v1662 = vsel %vm1406, %v1422, %v1646
      %v1663 = vsel %vm1407, %v1423, %v1647
      %v1664 = vsel %vm1408, %v1424, %v1648
      %v1665 = vsel %vm1409, %v1425, %v1649
      %v1666 = vsel %vm1410, %v1426, %v1650
      %v1667 = vsel %vm1411, %v1427, %v1651
      %v1668 = vsel %vm1412, %v1428, %v1652
      %1669 = vmatprep.subr.mxu0 0.0
      %v1670 = vand.u32 %v191, 4294901760
      %1671 = vmatpush1.msra.mxu0 %v1670
      %1672 = vmatprep.subr.mxu0 0.0
      %v1673 = vand.u32 %v192, 4294901760
      %1674 = vmatpush1.msra.mxu0 %v1673
      %1675 = vmatprep.subr.mxu0 0.0
      %v1676 = vand.u32 %v193, 4294901760
      %1677 = vmatpush1.msra.mxu0 %v1676
      %1678 = vmatprep.subr.mxu0 0.0
      %v1679 = vand.u32 %v194, 4294901760
      %1680 = vmatpush1.msra.mxu0 %v1679
      %1681 = vmatprep.subr.mxu0 0.0
      %1682 = vmatpush1.msra.mxu0 0.0
      %1683 = vmatprep.subr.mxu0 0.0
      %1684 = vmatpush1.msra.mxu0 0.0
      %1685 = vmatprep.subr.mxu0 0.0
      %1686 = vmatpush1.msra.mxu0 0.0
      %1687 = vmatprep.subr.mxu0 0.0
      %1688 = vmatpush1.msra.mxu0 0.0
      %1689 = vmatprep.subr.mxu0 0.0
      %1690 = vmatpush1.msra.mxu0 0.0
      %1691 = vmatprep.subr.mxu0 0.0
      %1692 = vmatpush1.msra.mxu0 0.0
      %1693 = vmatprep.subr.mxu0 0.0
      %1694 = vmatpush1.msra.mxu0 0.0
      %1695 = vmatprep.subr.mxu0 0.0
      %1696 = vmatpush1.msra.mxu0 0.0
      %1697 = vmatprep.subr.mxu0 0.0
      %1698 = vmatpush1.msra.mxu0 0.0
      %1699 = vmatprep.subr.mxu0 0.0
      %1700 = vmatpush1.msra.mxu0 0.0
      %1701 = vmatprep.subr.mxu0 0.0
      %1702 = vmatpush1.msra.mxu0 0.0
      %1703 = vmatprep.subr.mxu0 0.0
      %1704 = vmatpush1.msra.mxu0 0.0
      %1705 = vmatprep.subr.mxu0 0.0
      %1706 = vmatpush1.msra.mxu0 0.0
      %1707 = vmatprep.subr.mxu0 0.0
      %1708 = vmatpush1.msra.mxu0 0.0
      %1709 = vmatprep.subr.mxu0 0.0
      %1710 = vmatpush1.msra.mxu0 0.0
      %1711 = vmatprep.subr.mxu0 0.0
      %1712 = vmatpush1.msra.mxu0 0.0
      %1713 = vmatprep.subr.mxu0 0.0
      %1714 = vmatpush1.msra.mxu0 0.0
      %1715 = vmatprep.subr.mxu0 0.0
      %1716 = vmatpush1.msra.mxu0 0.0
      %1717 = vmatprep.subr.mxu0 0.0
      %1718 = vmatpush1.msra.mxu0 0.0
      %1719 = vmatprep.subr.mxu0 0.0
      %1720 = vmatpush1.msra.mxu0 0.0
      %1721 = vmatprep.subr.mxu0 0.0
      %1722 = vmatpush1.msra.mxu0 0.0
      %1723 = vmatprep.subr.mxu0 0.0
      %1724 = vmatpush1.msra.mxu0 0.0
      %1725 = vmatprep.subr.mxu0 0.0
      %1726 = vmatpush1.msra.mxu0 0.0
      %1727 = vmatprep.subr.mxu0 0.0
      %1728 = vmatpush1.msra.mxu0 0.0
      %1729 = vmatprep.subr.mxu0 0.0
      %1730 = vmatpush1.msra.mxu0 0.0
      %1731 = vmatprep.subr.mxu0 0.0
      %1732 = vmatpush1.msra.mxu0 0.0
      %1733 = vmatprep.subr.mxu0 0.0
      %1734 = vmatpush1.msra.mxu0 0.0
      %1735 = vmatprep.subr.mxu0 0.0
      %1736 = vmatpush1.msra.mxu0 0.0
      %1737 = vmatprep.mubr.f32.mxu0 0.0
      %v1738 = vand.u32 %v204, 4294901760
      %v1739 = vsub.f32 %v204, %v1738
      %v1740 = vand.u32 %v1739, 4294901760
      %v1741 = vsub.f32 %v1739, %v1740
      %v1742 = vand.u32 %v1741, 4294901760
      %1743 = vmatmul.mubr.f32.gmra.mrb[0].mxu0 %v1742
      %v1744 = vpop.f32.mrb[0].mxu0
      %v1745 = vadd.f32 0.0, %v1744
      %v1746 = vpop.f32.mrb[0].mxu0
      %1747 = vmatprep.mubr.f32.mxu0 0.0
      %v1748 = vand.u32 %v207, 4294901760
      %v1749 = vsub.f32 %v207, %v1748
      %v1750 = vand.u32 %v1749, 4294901760
      %v1751 = vsub.f32 %v1749, %v1750
      %v1752 = vand.u32 %v1751, 4294901760
      %1753 = vmatmul.mubr.f32.gmra.mrb[0].mxu0 %v1752
      %v1754 = vpop.f32.mrb[0].mxu0
      %v1755 = vadd.f32 0.0, %v1754
      %v1756 = vpop.f32.mrb[0].mxu0
      %1757 = vmatprep.mubr.f32.mxu0 0.0
      %v1758 = vand.u32 %v210, 4294901760
      %v1759 = vsub.f32 %v210, %v1758
      %v1760 = vand.u32 %v1759, 4294901760
      %v1761 = vsub.f32 %v1759, %v1760
      %v1762 = vand.u32 %v1761, 4294901760
      %1763 = vmatmul.mubr.f32.gmra.mrb[0].mxu0 %v1762
      %v1764 = vpop.f32.mrb[0].mxu0
      %v1765 = vadd.f32 0.0, %v1764
      %v1766 = vpop.f32.mrb[0].mxu0
      %1767 = vmatprep.mubr.f32.mxu0 0.0
      %v1768 = vand.u32 %v213, 4294901760
      %v1769 = vsub.f32 %v213, %v1768
      %v1770 = vand.u32 %v1769, 4294901760
      %v1771 = vsub.f32 %v1769, %v1770
      %v1772 = vand.u32 %v1771, 4294901760
      %1773 = vmatmul.mubr.f32.gmra.mrb[0].mxu0 %v1772
      %v1774 = vpop.f32.mrb[0].mxu0
      %v1775 = vadd.f32 0.0, %v1774
      %v1776 = vpop.f32.mrb[0].mxu0
      %1777 = vmatprep.mubr.f32.mxu0 0.0
      %v1778 = vand.u32 %v216, 4294901760
      %v1779 = vsub.f32 %v216, %v1778
      %v1780 = vand.u32 %v1779, 4294901760
      %v1781 = vsub.f32 %v1779, %v1780
      %v1782 = vand.u32 %v1781, 4294901760
      %1783 = vmatmul.mubr.f32.gmra.mrb[0].mxu0 %v1782
      %v1784 = vpop.f32.mrb[0].mxu0
      %v1785 = vadd.f32 0.0, %v1784
      %v1786 = vpop.f32.mrb[0].mxu0
      %1787 = vmatprep.mubr.f32.mxu0 0.0
      %v1788 = vand.u32 %v219, 4294901760
      %v1789 = vsub.f32 %v219, %v1788
      %v1790 = vand.u32 %v1789, 4294901760
      %v1791 = vsub.f32 %v1789, %v1790
      %v1792 = vand.u32 %v1791, 4294901760
      %1793 = vmatmul.mubr.f32.gmra.mrb[0].mxu0 %v1792
      %v1794 = vpop.f32.mrb[0].mxu0
      %v1795 = vadd.f32 0.0, %v1794
      %v1796 = vpop.f32.mrb[0].mxu0
      %1797 = vmatprep.mubr.f32.mxu0 0.0
      %v1798 = vand.u32 %v222, 4294901760
      %v1799 = vsub.f32 %v222, %v1798
      %v1800 = vand.u32 %v1799, 4294901760
      %v1801 = vsub.f32 %v1799, %v1800
      %v1802 = vand.u32 %v1801, 4294901760
      %1803 = vmatmul.mubr.f32.gmra.mrb[0].mxu0 %v1802
      %v1804 = vpop.f32.mrb[0].mxu0
      %v1805 = vadd.f32 0.0, %v1804
      %v1806 = vpop.f32.mrb[0].mxu0
      %1807 = vmatprep.mubr.f32.mxu0 0.0
      %v1808 = vand.u32 %v225, 4294901760
      %v1809 = vsub.f32 %v225, %v1808
      %v1810 = vand.u32 %v1809, 4294901760
      %v1811 = vsub.f32 %v1809, %v1810
      %v1812 = vand.u32 %v1811, 4294901760
      %1813 = vmatmul.mubr.f32.gmra.mrb[0].mxu0 %v1812
      %v1814 = vpop.f32.mrb[0].mxu0
      %v1815 = vadd.f32 0.0, %v1814
      %v1816 = vpop.f32.mrb[0].mxu0
      %1817 = vmatprep.mubr.f32.mxu0 0.0
      %v1818 = vand.u32 %v228, 4294901760
      %v1819 = vsub.f32 %v228, %v1818
      %v1820 = vand.u32 %v1819, 4294901760
      %v1821 = vsub.f32 %v1819, %v1820
      %v1822 = vand.u32 %v1821, 4294901760
      %1823 = vmatmul.mubr.f32.gmra.mrb[0].mxu0 %v1822
      %v1824 = vpop.f32.mrb[0].mxu0
      %v1825 = vadd.f32 0.0, %v1824
      %v1826 = vpop.f32.mrb[0].mxu0
      %1827 = vmatprep.mubr.f32.mxu0 0.0
      %v1828 = vand.u32 %v231, 4294901760
      %v1829 = vsub.f32 %v231, %v1828
      %v1830 = vand.u32 %v1829, 4294901760
      %v1831 = vsub.f32 %v1829, %v1830
      %v1832 = vand.u32 %v1831, 4294901760
      %1833 = vmatmul.mubr.f32.gmra.mrb[0].mxu0 %v1832
      %v1834 = vpop.f32.mrb[0].mxu0
      %v1835 = vadd.f32 0.0, %v1834
      %v1836 = vpop.f32.mrb[0].mxu0
      %1837 = vmatprep.mubr.f32.mxu0 0.0
      %v1838 = vand.u32 %v234, 4294901760
      %v1839 = vsub.f32 %v234, %v1838
      %v1840 = vand.u32 %v1839, 4294901760
      %v1841 = vsub.f32 %v1839, %v1840
      %v1842 = vand.u32 %v1841, 4294901760
      %1843 = vmatmul.mubr.f32.gmra.mrb[0].mxu0 %v1842
      %v1844 = vpop.f32.mrb[0].mxu0
      %v1845 = vadd.f32 0.0, %v1844
      %v1846 = vpop.f32.mrb[0].mxu0
      %1847 = vmatprep.mubr.f32.mxu0 0.0
      %v1848 = vand.u32 %v237, 4294901760
      %v1849 = vsub.f32 %v237, %v1848
      %v1850 = vand.u32 %v1849, 4294901760
      %v1851 = vsub.f32 %v1849, %v1850
      %v1852 = vand.u32 %v1851, 4294901760
      %1853 = vmatmul.mubr.f32.gmra.mrb[0].mxu0 %v1852
      %v1854 = vpop.f32.mrb[0].mxu0
      %v1855 = vadd.f32 0.0, %v1854
      %v1856 = vpop.f32.mrb[0].mxu0
      %1857 = vmatprep.mubr.f32.mxu0 0.0
      %v1858 = vand.u32 %v240, 4294901760
      %v1859 = vsub.f32 %v240, %v1858
      %v1860 = vand.u32 %v1859, 4294901760
      %v1861 = vsub.f32 %v1859, %v1860
      %v1862 = vand.u32 %v1861, 4294901760
      %1863 = vmatmul.mubr.f32.gmra.mrb[0].mxu0 %v1862
      %v1864 = vpop.f32.mrb[0].mxu0
      %v1865 = vadd.f32 0.0, %v1864
      %v1866 = vpop.f32.mrb[0].mxu0
      %1867 = vmatprep.mubr.f32.mxu0 0.0
      %v1868 = vand.u32 %v243, 4294901760
      %v1869 = vsub.f32 %v243, %v1868
      %v1870 = vand.u32 %v1869, 4294901760
      %v1871 = vsub.f32 %v1869, %v1870
      %v1872 = vand.u32 %v1871, 4294901760
      %1873 = vmatmul.mubr.f32.gmra.mrb[0].mxu0 %v1872
      %v1874 = vpop.f32.mrb[0].mxu0
      %v1875 = vadd.f32 0.0, %v1874
      %v1876 = vpop.f32.mrb[0].mxu0
      %1877 = vmatprep.mubr.f32.mxu0 0.0
      %v1878 = vand.u32 %v246, 4294901760
      %v1879 = vsub.f32 %v246, %v1878
      %v1880 = vand.u32 %v1879, 4294901760
      %v1881 = vsub.f32 %v1879, %v1880
      %v1882 = vand.u32 %v1881, 4294901760
      %1883 = vmatmul.mubr.f32.gmra.mrb[0].mxu0 %v1882
      %v1884 = vpop.f32.mrb[0].mxu0
      %v1885 = vadd.f32 0.0, %v1884
      %v1886 = vpop.f32.mrb[0].mxu0
      %1887 = vmatprep.mubr.f32.mxu0 0.0
      %v1888 = vand.u32 %v249, 4294901760
      %v1889 = vsub.f32 %v249, %v1888
      %v1890 = vand.u32 %v1889, 4294901760
      %v1891 = vsub.f32 %v1889, %v1890
      %v1892 = vand.u32 %v1891, 4294901760
      %1893 = vmatmul.mubr.f32.gmra.mrb[0].mxu0 %v1892
      %v1894 = vpop.f32.mrb[0].mxu0
      %v1895 = vadd.f32 0.0, %v1894
      %v1896 = vpop.f32.mrb[0].mxu0
      %1897 = vdwg.mxu0
      %1898 = vmatprep.subr.mxu0 0.0
      %v1899 = vand.u32 %v191, 4294901760
      %v1900 = vsub.f32 %v191, %v1899
      %v1901 = vand.u32 %v1900, 4294901760
      %v1902 = vsub.f32 %v1900, %v1901
      %v1903 = vand.u32 %v1902, 4294901760
      %1904 = vmatpush1.msra.mxu0 %v1903
      %1905 = vmatprep.subr.mxu0 0.0
      %v1906 = vand.u32 %v192, 4294901760
      %v1907 = vsub.f32 %v192, %v1906
      %v1908 = vand.u32 %v1907, 4294901760
      %v1909 = vsub.f32 %v1907, %v1908
      %v1910 = vand.u32 %v1909, 4294901760
      %1911 = vmatpush1.msra.mxu0 %v1910
      %1912 = vmatprep.subr.mxu0 0.0
      %v1913 = vand.u32 %v193, 4294901760
      %v1914 = vsub.f32 %v193, %v1913
      %v1915 = vand.u32 %v1914, 4294901760
      %v1916 = vsub.f32 %v1914, %v1915
      %v1917 = vand.u32 %v1916, 4294901760
      %1918 = vmatpush1.msra.mxu0 %v1917
      %1919 = vmatprep.subr.mxu0 0.0
      %v1920 = vand.u32 %v194, 4294901760
      %v1921 = vsub.f32 %v194, %v1920
      %v1922 = vand.u32 %v1921, 4294901760
      %v1923 = vsub.f32 %v1921, %v1922
      %v1924 = vand.u32 %v1923, 4294901760
      %1925 = vmatpush1.msra.mxu0 %v1924
      %1926 = vmatprep.subr.mxu0 0.0
      %1927 = vmatpush1.msra.mxu0 0.0
      %1928 = vmatprep.subr.mxu0 0.0
      %1929 = vmatpush1.msra.mxu0 0.0
      %1930 = vmatprep.subr.mxu0 0.0
      %1931 = vmatpush1.msra.mxu0 0.0
      %1932 = vmatprep.subr.mxu0 0.0
      %1933 = vmatpush1.msra.mxu0 0.0
      %1934 = vmatprep.subr.mxu0 0.0
      %1935 = vmatpush1.msra.mxu0 0.0
      %1936 = vmatprep.subr.mxu0 0.0
      %1937 = vmatpush1.msra.mxu0 0.0
      %1938 = vmatprep.subr.mxu0 0.0
      %1939 = vmatpush1.msra.mxu0 0.0
      %1940 = vmatprep.subr.mxu0 0.0
      %1941 = vmatpush1.msra.mxu0 0.0
      %1942 = vmatprep.subr.mxu0 0.0
      %1943 = vmatpush1.msra.mxu0 0.0
      %1944 = vmatprep.subr.mxu0 0.0
      %1945 = vmatpush1.msra.mxu0 0.0
      %1946 = vmatprep.subr.mxu0 0.0
      %1947 = vmatpush1.msra.mxu0 0.0
      %1948 = vmatprep.subr.mxu0 0.0
      %1949 = vmatpush1.msra.mxu0 0.0
      %1950 = vmatprep.subr.mxu0 0.0
      %1951 = vmatpush1.msra.mxu0 0.0
      %1952 = vmatprep.subr.mxu0 0.0
      %1953 = vmatpush1.msra.mxu0 0.0
      %1954 = vmatprep.subr.mxu0 0.0
      %1955 = vmatpush1.msra.mxu0 0.0
      %1956 = vmatprep.subr.mxu0 0.0
      %1957 = vmatpush1.msra.mxu0 0.0
      %1958 = vmatprep.subr.mxu0 0.0
      %1959 = vmatpush1.msra.mxu0 0.0
      %1960 = vmatprep.subr.mxu0 0.0
      %1961 = vmatpush1.msra.mxu0 0.0
      %1962 = vmatprep.subr.mxu0 0.0
      %1963 = vmatpush1.msra.mxu0 0.0
      %1964 = vmatprep.subr.mxu0 0.0
      %1965 = vmatpush1.msra.mxu0 0.0
      %1966 = vmatprep.subr.mxu0 0.0
      %1967 = vmatpush1.msra.mxu0 0.0
      %1968 = vmatprep.subr.mxu0 0.0
      %1969 = vmatpush1.msra.mxu0 0.0
      %1970 = vmatprep.subr.mxu0 0.0
      %1971 = vmatpush1.msra.mxu0 0.0
      %1972 = vmatprep.subr.mxu0 0.0
      %1973 = vmatpush1.msra.mxu0 0.0
      %1974 = vmatprep.subr.mxu0 0.0
      %1975 = vmatpush1.msra.mxu0 0.0
      %1976 = vmatprep.subr.mxu0 0.0
      %1977 = vmatpush1.msra.mxu0 0.0
      %1978 = vmatprep.subr.mxu0 0.0
      %1979 = vmatpush1.msra.mxu0 0.0
      %1980 = vmatprep.subr.mxu0 0.0
      %1981 = vmatpush1.msra.mxu0 0.0
      %1982 = vmatprep.mubr.f32.mxu0 0.0
      %v1983 = vand.u32 %v204, 4294901760
      %1984 = vmatmul.mubr.f32.gmra.mrb[0].mxu0 %v1983
      %v1985 = vpop.f32.mrb[0].mxu0
      %v1986 = vadd.f32 %v1745, %v1985
      %v1987 = vpop.f32.mrb[0].mxu0
      %1988 = vmatprep.mubr.f32.mxu0 0.0
      %v1989 = vand.u32 %v207, 4294901760
      %1990 = vmatmul.mubr.f32.gmra.mrb[0].mxu0 %v1989
      %v1991 = vpop.f32.mrb[0].mxu0
      %v1992 = vadd.f32 %v1755, %v1991
      %v1993 = vpop.f32.mrb[0].mxu0
      %1994 = vmatprep.mubr.f32.mxu0 0.0
      %v1995 = vand.u32 %v210, 4294901760
      %1996 = vmatmul.mubr.f32.gmra.mrb[0].mxu0 %v1995
      %v1997 = vpop.f32.mrb[0].mxu0
      %v1998 = vadd.f32 %v1765, %v1997
      %v1999 = vpop.f32.mrb[0].mxu0
      %2000 = vmatprep.mubr.f32.mxu0 0.0
      %v2001 = vand.u32 %v213, 4294901760
      %2002 = vmatmul.mubr.f32.gmra.mrb[0].mxu0 %v2001
      %v2003 = vpop.f32.mrb[0].mxu0
      %v2004 = vadd.f32 %v1775, %v2003
      %v2005 = vpop.f32.mrb[0].mxu0
      %2006 = vmatprep.mubr.f32.mxu0 0.0
      %v2007 = vand.u32 %v216, 4294901760
      %2008 = vmatmul.mubr.f32.gmra.mrb[0].mxu0 %v2007
      %v2009 = vpop.f32.mrb[0].mxu0
      %v2010 = vadd.f32 %v1785, %v2009
      %v2011 = vpop.f32.mrb[0].mxu0
      %2012 = vmatprep.mubr.f32.mxu0 0.0
      %v2013 = vand.u32 %v219, 4294901760
      %2014 = vmatmul.mubr.f32.gmra.mrb[0].mxu0 %v2013
      %v2015 = vpop.f32.mrb[0].mxu0
      %v2016 = vadd.f32 %v1795, %v2015
      %v2017 = vpop.f32.mrb[0].mxu0
      %2018 = vmatprep.mubr.f32.mxu0 0.0
      %v2019 = vand.u32 %v222, 4294901760
      %2020 = vmatmul.mubr.f32.gmra.mrb[0].mxu0 %v2019
      %v2021 = vpop.f32.mrb[0].mxu0
      %v2022 = vadd.f32 %v1805, %v2021
      %v2023 = vpop.f32.mrb[0].mxu0
      %2024 = vmatprep.mubr.f32.mxu0 0.0
      %v2025 = vand.u32 %v225, 4294901760
      %2026 = vmatmul.mubr.f32.gmra.mrb[0].mxu0 %v2025
      %v2027 = vpop.f32.mrb[0].mxu0
      %v2028 = vadd.f32 %v1815, %v2027
      %v2029 = vpop.f32.mrb[0].mxu0
      %2030 = vmatprep.mubr.f32.mxu0 0.0
      %v2031 = vand.u32 %v228, 4294901760
      %2032 = vmatmul.mubr.f32.gmra.mrb[0].mxu0 %v2031
      %v2033 = vpop.f32.mrb[0].mxu0
      %v2034 = vadd.f32 %v1825, %v2033
      %v2035 = vpop.f32.mrb[0].mxu0
      %2036 = vmatprep.mubr.f32.mxu0 0.0
      %v2037 = vand.u32 %v231, 4294901760
      %2038 = vmatmul.mubr.f32.gmra.mrb[0].mxu0 %v2037
      %v2039 = vpop.f32.mrb[0].mxu0
      %v2040 = vadd.f32 %v1835, %v2039
      %v2041 = vpop.f32.mrb[0].mxu0
      %2042 = vmatprep.mubr.f32.mxu0 0.0
      %v2043 = vand.u32 %v234, 4294901760
      %2044 = vmatmul.mubr.f32.gmra.mrb[0].mxu0 %v2043
      %v2045 = vpop.f32.mrb[0].mxu0
      %v2046 = vadd.f32 %v1845, %v2045
      %v2047 = vpop.f32.mrb[0].mxu0
      %2048 = vmatprep.mubr.f32.mxu0 0.0
      %v2049 = vand.u32 %v237, 4294901760
      %2050 = vmatmul.mubr.f32.gmra.mrb[0].mxu0 %v2049
      %v2051 = vpop.f32.mrb[0].mxu0
      %v2052 = vadd.f32 %v1855, %v2051
      %v2053 = vpop.f32.mrb[0].mxu0
      %2054 = vmatprep.mubr.f32.mxu0 0.0
      %v2055 = vand.u32 %v240, 4294901760
      %2056 = vmatmul.mubr.f32.gmra.mrb[0].mxu0 %v2055
      %v2057 = vpop.f32.mrb[0].mxu0
      %v2058 = vadd.f32 %v1865, %v2057
      %v2059 = vpop.f32.mrb[0].mxu0
      %2060 = vmatprep.mubr.f32.mxu0 0.0
      %v2061 = vand.u32 %v243, 4294901760
      %2062 = vmatmul.mubr.f32.gmra.mrb[0].mxu0 %v2061
      %v2063 = vpop.f32.mrb[0].mxu0
      %v2064 = vadd.f32 %v1875, %v2063
      %v2065 = vpop.f32.mrb[0].mxu0
      %2066 = vmatprep.mubr.f32.mxu0 0.0
      %v2067 = vand.u32 %v246, 4294901760
      %2068 = vmatmul.mubr.f32.gmra.mrb[0].mxu0 %v2067
      %v2069 = vpop.f32.mrb[0].mxu0
      %v2070 = vadd.f32 %v1885, %v2069
      %v2071 = vpop.f32.mrb[0].mxu0
      %2072 = vmatprep.mubr.f32.mxu0 0.0
      %v2073 = vand.u32 %v249, 4294901760
      %2074 = vmatmul.mubr.f32.gmra.mrb[0].mxu0 %v2073
      %v2075 = vpop.f32.mrb[0].mxu0
      %v2076 = vadd.f32 %v1895, %v2075
      %v2077 = vpop.f32.mrb[0].mxu0
      %2078 = vdwg.mxu0
      %2079 = vmatprep.subr.mxu0 0.0
      %v2080 = vand.u32 %v191, 4294901760
      %v2081 = vsub.f32 %v191, %v2080
      %2082 = vmatpush1.msra.mxu0 %v2081
      %2083 = vmatprep.subr.mxu0 0.0
      %v2084 = vand.u32 %v192, 4294901760
      %v2085 = vsub.f32 %v192, %v2084
      %2086 = vmatpush1.msra.mxu0 %v2085
      %2087 = vmatprep.subr.mxu0 0.0
      %v2088 = vand.u32 %v193, 4294901760
      %v2089 = vsub.f32 %v193, %v2088
      %2090 = vmatpush1.msra.mxu0 %v2089
      %2091 = vmatprep.subr.mxu0 0.0
      %v2092 = vand.u32 %v194, 4294901760
      %v2093 = vsub.f32 %v194, %v2092
      %2094 = vmatpush1.msra.mxu0 %v2093
      %2095 = vmatprep.subr.mxu0 0.0
      %2096 = vmatpush1.msra.mxu0 0.0
      %2097 = vmatprep.subr.mxu0 0.0
      %2098 = vmatpush1.msra.mxu0 0.0
      %2099 = vmatprep.subr.mxu0 0.0
      %2100 = vmatpush1.msra.mxu0 0.0
      %2101 = vmatprep.subr.mxu0 0.0
      %2102 = vmatpush1.msra.mxu0 0.0
      %2103 = vmatprep.subr.mxu0 0.0
      %2104 = vmatpush1.msra.mxu0 0.0
      %2105 = vmatprep.subr.mxu0 0.0
      %2106 = vmatpush1.msra.mxu0 0.0
      %2107 = vmatprep.subr.mxu0 0.0
      %2108 = vmatpush1.msra.mxu0 0.0
      %2109 = vmatprep.subr.mxu0 0.0
      %2110 = vmatpush1.msra.mxu0 0.0
      %2111 = vmatprep.subr.mxu0 0.0
      %2112 = vmatpush1.msra.mxu0 0.0
      %2113 = vmatprep.subr.mxu0 0.0
      %2114 = vmatpush1.msra.mxu0 0.0
      %2115 = vmatprep.subr.mxu0 0.0
      %2116 = vmatpush1.msra.mxu0 0.0
      %2117 = vmatprep.subr.mxu0 0.0
      %2118 = vmatpush1.msra.mxu0 0.0
      %2119 = vmatprep.subr.mxu0 0.0
      %2120 = vmatpush1.msra.mxu0 0.0
      %2121 = vmatprep.subr.mxu0 0.0
      %2122 = vmatpush1.msra.mxu0 0.0
      %2123 = vmatprep.subr.mxu0 0.0
      %2124 = vmatpush1.msra.mxu0 0.0
      %2125 = vmatprep.subr.mxu0 0.0
      %2126 = vmatpush1.msra.mxu0 0.0
      %2127 = vmatprep.subr.mxu0 0.0
      %2128 = vmatpush1.msra.mxu0 0.0
      %2129 = vmatprep.subr.mxu0 0.0
      %2130 = vmatpush1.msra.mxu0 0.0
      %2131 = vmatprep.subr.mxu0 0.0
      %2132 = vmatpush1.msra.mxu0 0.0
      %2133 = vmatprep.subr.mxu0 0.0
      %2134 = vmatpush1.msra.mxu0 0.0
      %2135 = vmatprep.subr.mxu0 0.0
      %2136 = vmatpush1.msra.mxu0 0.0
      %2137 = vmatprep.subr.mxu0 0.0
      %2138 = vmatpush1.msra.mxu0 0.0
      %2139 = vmatprep.subr.mxu0 0.0
      %2140 = vmatpush1.msra.mxu0 0.0
      %2141 = vmatprep.subr.mxu0 0.0
      %2142 = vmatpush1.msra.mxu0 0.0
      %2143 = vmatprep.subr.mxu0 0.0
      %2144 = vmatpush1.msra.mxu0 0.0
      %2145 = vmatprep.subr.mxu0 0.0
      %2146 = vmatpush1.msra.mxu0 0.0
      %2147 = vmatprep.subr.mxu0 0.0
      %2148 = vmatpush1.msra.mxu0 0.0
      %2149 = vmatprep.subr.mxu0 0.0
      %2150 = vmatpush1.msra.mxu0 0.0
      %2151 = vmatprep.mubr.f32.mxu0 0.0
      %v2152 = vand.u32 %v204, 4294901760
      %v2153 = vsub.f32 %v204, %v2152
      %2154 = vmatmul.mubr.f32.gmra.mrb[0].mxu0 %v2153
      %v2155 = vpop.f32.mrb[0].mxu0
      %v2156 = vadd.f32 %v1986, %v2155
      %v2157 = vpop.f32.mrb[0].mxu0
      %2158 = vmatprep.mubr.f32.mxu0 0.0
      %v2159 = vand.u32 %v207, 4294901760
      %v2160 = vsub.f32 %v207, %v2159
      %2161 = vmatmul.mubr.f32.gmra.mrb[0].mxu0 %v2160
      %v2162 = vpop.f32.mrb[0].mxu0
      %v2163 = vadd.f32 %v1992, %v2162
      %v2164 = vpop.f32.mrb[0].mxu0
      %2165 = vmatprep.mubr.f32.mxu0 0.0
      %v2166 = vand.u32 %v210, 4294901760
      %v2167 = vsub.f32 %v210, %v2166
      %2168 = vmatmul.mubr.f32.gmra.mrb[0].mxu0 %v2167
      %v2169 = vpop.f32.mrb[0].mxu0
      %v2170 = vadd.f32 %v1998, %v2169
      %v2171 = vpop.f32.mrb[0].mxu0
      %2172 = vmatprep.mubr.f32.mxu0 0.0
      %v2173 = vand.u32 %v213, 4294901760
      %v2174 = vsub.f32 %v213, %v2173
      %2175 = vmatmul.mubr.f32.gmra.mrb[0].mxu0 %v2174
      %v2176 = vpop.f32.mrb[0].mxu0
      %v2177 = vadd.f32 %v2004, %v2176
      %v2178 = vpop.f32.mrb[0].mxu0
      %2179 = vmatprep.mubr.f32.mxu0 0.0
      %v2180 = vand.u32 %v216, 4294901760
      %v2181 = vsub.f32 %v216, %v2180
      %2182 = vmatmul.mubr.f32.gmra.mrb[0].mxu0 %v2181
      %v2183 = vpop.f32.mrb[0].mxu0
      %v2184 = vadd.f32 %v2010, %v2183
      %v2185 = vpop.f32.mrb[0].mxu0
      %2186 = vmatprep.mubr.f32.mxu0 0.0
      %v2187 = vand.u32 %v219, 4294901760
      %v2188 = vsub.f32 %v219, %v2187
      %2189 = vmatmul.mubr.f32.gmra.mrb[0].mxu0 %v2188
      %v2190 = vpop.f32.mrb[0].mxu0
      %v2191 = vadd.f32 %v2016, %v2190
      %v2192 = vpop.f32.mrb[0].mxu0
      %2193 = vmatprep.mubr.f32.mxu0 0.0
      %v2194 = vand.u32 %v222, 4294901760
      %v2195 = vsub.f32 %v222, %v2194
      %2196 = vmatmul.mubr.f32.gmra.mrb[0].mxu0 %v2195
      %v2197 = vpop.f32.mrb[0].mxu0
      %v2198 = vadd.f32 %v2022, %v2197
      %v2199 = vpop.f32.mrb[0].mxu0
      %2200 = vmatprep.mubr.f32.mxu0 0.0
      %v2201 = vand.u32 %v225, 4294901760
      %v2202 = vsub.f32 %v225, %v2201
      %2203 = vmatmul.mubr.f32.gmra.mrb[0].mxu0 %v2202
      %v2204 = vpop.f32.mrb[0].mxu0
      %v2205 = vadd.f32 %v2028, %v2204
      %v2206 = vpop.f32.mrb[0].mxu0
      %2207 = vmatprep.mubr.f32.mxu0 0.0
      %v2208 = vand.u32 %v228, 4294901760
      %v2209 = vsub.f32 %v228, %v2208
      %2210 = vmatmul.mubr.f32.gmra.mrb[0].mxu0 %v2209
      %v2211 = vpop.f32.mrb[0].mxu0
      %v2212 = vadd.f32 %v2034, %v2211
      %v2213 = vpop.f32.mrb[0].mxu0
      %2214 = vmatprep.mubr.f32.mxu0 0.0
      %v2215 = vand.u32 %v231, 4294901760
      %v2216 = vsub.f32 %v231, %v2215
      %2217 = vmatmul.mubr.f32.gmra.mrb[0].mxu0 %v2216
      %v2218 = vpop.f32.mrb[0].mxu0
      %v2219 = vadd.f32 %v2040, %v2218
      %v2220 = vpop.f32.mrb[0].mxu0
      %2221 = vmatprep.mubr.f32.mxu0 0.0
      %v2222 = vand.u32 %v234, 4294901760
      %v2223 = vsub.f32 %v234, %v2222
      %2224 = vmatmul.mubr.f32.gmra.mrb[0].mxu0 %v2223
      %v2225 = vpop.f32.mrb[0].mxu0
      %v2226 = vadd.f32 %v2046, %v2225
      %v2227 = vpop.f32.mrb[0].mxu0
      %2228 = vmatprep.mubr.f32.mxu0 0.0
      %v2229 = vand.u32 %v237, 4294901760
      %v2230 = vsub.f32 %v237, %v2229
      %2231 = vmatmul.mubr.f32.gmra.mrb[0].mxu0 %v2230
      %v2232 = vpop.f32.mrb[0].mxu0
      %v2233 = vadd.f32 %v2052, %v2232
      %v2234 = vpop.f32.mrb[0].mxu0
      %2235 = vmatprep.mubr.f32.mxu0 0.0
      %v2236 = vand.u32 %v240, 4294901760
      %v2237 = vsub.f32 %v240, %v2236
      %2238 = vmatmul.mubr.f32.gmra.mrb[0].mxu0 %v2237
      %v2239 = vpop.f32.mrb[0].mxu0
      %v2240 = vadd.f32 %v2058, %v2239
      %v2241 = vpop.f32.mrb[0].mxu0
      %2242 = vmatprep.mubr.f32.mxu0 0.0
      %v2243 = vand.u32 %v243, 4294901760
      %v2244 = vsub.f32 %v243, %v2243
      %2245 = vmatmul.mubr.f32.gmra.mrb[0].mxu0 %v2244
      %v2246 = vpop.f32.mrb[0].mxu0
      %v2247 = vadd.f32 %v2064, %v2246
      %v2248 = vpop.f32.mrb[0].mxu0
      %2249 = vmatprep.mubr.f32.mxu0 0.0
      %v2250 = vand.u32 %v246, 4294901760
      %v2251 = vsub.f32 %v246, %v2250
      %2252 = vmatmul.mubr.f32.gmra.mrb[0].mxu0 %v2251
      %v2253 = vpop.f32.mrb[0].mxu0
      %v2254 = vadd.f32 %v2070, %v2253
      %v2255 = vpop.f32.mrb[0].mxu0
      %2256 = vmatprep.mubr.f32.mxu0 0.0
      %v2257 = vand.u32 %v249, 4294901760
      %v2258 = vsub.f32 %v249, %v2257
      %2259 = vmatmul.mubr.f32.gmra.mrb[0].mxu0 %v2258
      %v2260 = vpop.f32.mrb[0].mxu0
      %v2261 = vadd.f32 %v2076, %v2260
      %v2262 = vpop.f32.mrb[0].mxu0
      %2263 = vdwg.mxu0
      %2264 = vmatprep.subr.mxu0 0.0
      %v2265 = vand.u32 %v191, 4294901760
      %2266 = vmatpush1.msra.mxu0 %v2265
      %2267 = vmatprep.subr.mxu0 0.0
      %v2268 = vand.u32 %v192, 4294901760
      %2269 = vmatpush1.msra.mxu0 %v2268
      %2270 = vmatprep.subr.mxu0 0.0
      %v2271 = vand.u32 %v193, 4294901760
      %2272 = vmatpush1.msra.mxu0 %v2271
      %2273 = vmatprep.subr.mxu0 0.0
      %v2274 = vand.u32 %v194, 4294901760
      %2275 = vmatpush1.msra.mxu0 %v2274
      %2276 = vmatprep.subr.mxu0 0.0
      %2277 = vmatpush1.msra.mxu0 0.0
      %2278 = vmatprep.subr.mxu0 0.0
      %2279 = vmatpush1.msra.mxu0 0.0
      %2280 = vmatprep.subr.mxu0 0.0
      %2281 = vmatpush1.msra.mxu0 0.0
      %2282 = vmatprep.subr.mxu0 0.0
      %2283 = vmatpush1.msra.mxu0 0.0
      %2284 = vmatprep.subr.mxu0 0.0
      %2285 = vmatpush1.msra.mxu0 0.0
      %2286 = vmatprep.subr.mxu0 0.0
      %2287 = vmatpush1.msra.mxu0 0.0
      %2288 = vmatprep.subr.mxu0 0.0
      %2289 = vmatpush1.msra.mxu0 0.0
      %2290 = vmatprep.subr.mxu0 0.0
      %2291 = vmatpush1.msra.mxu0 0.0
      %2292 = vmatprep.subr.mxu0 0.0
      %2293 = vmatpush1.msra.mxu0 0.0
      %2294 = vmatprep.subr.mxu0 0.0
      %2295 = vmatpush1.msra.mxu0 0.0
      %2296 = vmatprep.subr.mxu0 0.0
      %2297 = vmatpush1.msra.mxu0 0.0
      %2298 = vmatprep.subr.mxu0 0.0
      %2299 = vmatpush1.msra.mxu0 0.0
      %2300 = vmatprep.subr.mxu0 0.0
      %2301 = vmatpush1.msra.mxu0 0.0
      %2302 = vmatprep.subr.mxu0 0.0
      %2303 = vmatpush1.msra.mxu0 0.0
      %2304 = vmatprep.subr.mxu0 0.0
      %2305 = vmatpush1.msra.mxu0 0.0
      %2306 = vmatprep.subr.mxu0 0.0
      %2307 = vmatpush1.msra.mxu0 0.0
      %2308 = vmatprep.subr.mxu0 0.0
      %2309 = vmatpush1.msra.mxu0 0.0
      %2310 = vmatprep.subr.mxu0 0.0
      %2311 = vmatpush1.msra.mxu0 0.0
      %2312 = vmatprep.subr.mxu0 0.0
      %2313 = vmatpush1.msra.mxu0 0.0
      %2314 = vmatprep.subr.mxu0 0.0
      %2315 = vmatpush1.msra.mxu0 0.0
      %2316 = vmatprep.subr.mxu0 0.0
      %2317 = vmatpush1.msra.mxu0 0.0
      %2318 = vmatprep.subr.mxu0 0.0
      %2319 = vmatpush1.msra.mxu0 0.0
      %2320 = vmatprep.subr.mxu0 0.0
      %2321 = vmatpush1.msra.mxu0 0.0
      %2322 = vmatprep.subr.mxu0 0.0
      %2323 = vmatpush1.msra.mxu0 0.0
      %2324 = vmatprep.subr.mxu0 0.0
      %2325 = vmatpush1.msra.mxu0 0.0
      %2326 = vmatprep.subr.mxu0 0.0
      %2327 = vmatpush1.msra.mxu0 0.0
      %2328 = vmatprep.subr.mxu0 0.0
      %2329 = vmatpush1.msra.mxu0 0.0
      %2330 = vmatprep.subr.mxu0 0.0
      %2331 = vmatpush1.msra.mxu0 0.0
      %2332 = vmatprep.mubr.f32.mxu0 0.0
      %v2333 = vand.u32 %v204, 4294901760
      %v2334 = vsub.f32 %v204, %v2333
      %v2335 = vand.u32 %v2334, 4294901760
      %2336 = vmatmul.mubr.f32.gmra.mrb[0].mxu0 %v2335
      %v2337 = vpop.f32.mrb[0].mxu0
      %v2338 = vadd.f32 %v2156, %v2337
      %v2339 = vpop.f32.mrb[0].mxu0
      %2340 = vmatprep.mubr.f32.mxu0 0.0
      %v2341 = vand.u32 %v207, 4294901760
      %v2342 = vsub.f32 %v207, %v2341
      %v2343 = vand.u32 %v2342, 4294901760
      %2344 = vmatmul.mubr.f32.gmra.mrb[0].mxu0 %v2343
      %v2345 = vpop.f32.mrb[0].mxu0
      %v2346 = vadd.f32 %v2163, %v2345
      %v2347 = vpop.f32.mrb[0].mxu0
      %2348 = vmatprep.mubr.f32.mxu0 0.0
      %v2349 = vand.u32 %v210, 4294901760
      %v2350 = vsub.f32 %v210, %v2349
      %v2351 = vand.u32 %v2350, 4294901760
      %2352 = vmatmul.mubr.f32.gmra.mrb[0].mxu0 %v2351
      %v2353 = vpop.f32.mrb[0].mxu0
      %v2354 = vadd.f32 %v2170, %v2353
      %v2355 = vpop.f32.mrb[0].mxu0
      %2356 = vmatprep.mubr.f32.mxu0 0.0
      %v2357 = vand.u32 %v213, 4294901760
      %v2358 = vsub.f32 %v213, %v2357
      %v2359 = vand.u32 %v2358, 4294901760
      %2360 = vmatmul.mubr.f32.gmra.mrb[0].mxu0 %v2359
      %v2361 = vpop.f32.mrb[0].mxu0
      %v2362 = vadd.f32 %v2177, %v2361
      %v2363 = vpop.f32.mrb[0].mxu0
      %2364 = vmatprep.mubr.f32.mxu0 0.0
      %v2365 = vand.u32 %v216, 4294901760
      %v2366 = vsub.f32 %v216, %v2365
      %v2367 = vand.u32 %v2366, 4294901760
      %2368 = vmatmul.mubr.f32.gmra.mrb[0].mxu0 %v2367
      %v2369 = vpop.f32.mrb[0].mxu0
      %v2370 = vadd.f32 %v2184, %v2369
      %v2371 = vpop.f32.mrb[0].mxu0
      %2372 = vmatprep.mubr.f32.mxu0 0.0
      %v2373 = vand.u32 %v219, 4294901760
      %v2374 = vsub.f32 %v219, %v2373
      %v2375 = vand.u32 %v2374, 4294901760
      %2376 = vmatmul.mubr.f32.gmra.mrb[0].mxu0 %v2375
      %v2377 = vpop.f32.mrb[0].mxu0
      %v2378 = vadd.f32 %v2191, %v2377
      %v2379 = vpop.f32.mrb[0].mxu0
      %2380 = vmatprep.mubr.f32.mxu0 0.0
      %v2381 = vand.u32 %v222, 4294901760
      %v2382 = vsub.f32 %v222, %v2381
      %v2383 = vand.u32 %v2382, 4294901760
      %2384 = vmatmul.mubr.f32.gmra.mrb[0].mxu0 %v2383
      %v2385 = vpop.f32.mrb[0].mxu0
      %v2386 = vadd.f32 %v2198, %v2385
      %v2387 = vpop.f32.mrb[0].mxu0
      %2388 = vmatprep.mubr.f32.mxu0 0.0
      %v2389 = vand.u32 %v225, 4294901760
      %v2390 = vsub.f32 %v225, %v2389
      %v2391 = vand.u32 %v2390, 4294901760
      %2392 = vmatmul.mubr.f32.gmra.mrb[0].mxu0 %v2391
      %v2393 = vpop.f32.mrb[0].mxu0
      %v2394 = vadd.f32 %v2205, %v2393
      %v2395 = vpop.f32.mrb[0].mxu0
      %2396 = vmatprep.mubr.f32.mxu0 0.0
      %v2397 = vand.u32 %v228, 4294901760
      %v2398 = vsub.f32 %v228, %v2397
      %v2399 = vand.u32 %v2398, 4294901760
      %2400 = vmatmul.mubr.f32.gmra.mrb[0].mxu0 %v2399
      %v2401 = vpop.f32.mrb[0].mxu0
      %v2402 = vadd.f32 %v2212, %v2401
      %v2403 = vpop.f32.mrb[0].mxu0
      %2404 = vmatprep.mubr.f32.mxu0 0.0
      %v2405 = vand.u32 %v231, 4294901760
      %v2406 = vsub.f32 %v231, %v2405
      %v2407 = vand.u32 %v2406, 4294901760
      %2408 = vmatmul.mubr.f32.gmra.mrb[0].mxu0 %v2407
      %v2409 = vpop.f32.mrb[0].mxu0
      %v2410 = vadd.f32 %v2219, %v2409
      %v2411 = vpop.f32.mrb[0].mxu0
      %2412 = vmatprep.mubr.f32.mxu0 0.0
      %v2413 = vand.u32 %v234, 4294901760
      %v2414 = vsub.f32 %v234, %v2413
      %v2415 = vand.u32 %v2414, 4294901760
      %2416 = vmatmul.mubr.f32.gmra.mrb[0].mxu0 %v2415
      %v2417 = vpop.f32.mrb[0].mxu0
      %v2418 = vadd.f32 %v2226, %v2417
      %v2419 = vpop.f32.mrb[0].mxu0
      %2420 = vmatprep.mubr.f32.mxu0 0.0
      %v2421 = vand.u32 %v237, 4294901760
      %v2422 = vsub.f32 %v237, %v2421
      %v2423 = vand.u32 %v2422, 4294901760
      %2424 = vmatmul.mubr.f32.gmra.mrb[0].mxu0 %v2423
      %v2425 = vpop.f32.mrb[0].mxu0
      %v2426 = vadd.f32 %v2233, %v2425
      %v2427 = vpop.f32.mrb[0].mxu0
      %2428 = vmatprep.mubr.f32.mxu0 0.0
      %v2429 = vand.u32 %v240, 4294901760
      %v2430 = vsub.f32 %v240, %v2429
      %v2431 = vand.u32 %v2430, 4294901760
      %2432 = vmatmul.mubr.f32.gmra.mrb[0].mxu0 %v2431
      %v2433 = vpop.f32.mrb[0].mxu0
      %v2434 = vadd.f32 %v2240, %v2433
      %v2435 = vpop.f32.mrb[0].mxu0
      %2436 = vmatprep.mubr.f32.mxu0 0.0
      %v2437 = vand.u32 %v243, 4294901760
      %v2438 = vsub.f32 %v243, %v2437
      %v2439 = vand.u32 %v2438, 4294901760
      %2440 = vmatmul.mubr.f32.gmra.mrb[0].mxu0 %v2439
      %v2441 = vpop.f32.mrb[0].mxu0
      %v2442 = vadd.f32 %v2247, %v2441
      %v2443 = vpop.f32.mrb[0].mxu0
      %2444 = vmatprep.mubr.f32.mxu0 0.0
      %v2445 = vand.u32 %v246, 4294901760
      %v2446 = vsub.f32 %v246, %v2445
      %v2447 = vand.u32 %v2446, 4294901760
      %2448 = vmatmul.mubr.f32.gmra.mrb[0].mxu0 %v2447
      %v2449 = vpop.f32.mrb[0].mxu0
      %v2450 = vadd.f32 %v2254, %v2449
      %v2451 = vpop.f32.mrb[0].mxu0
      %2452 = vmatprep.mubr.f32.mxu0 0.0
      %v2453 = vand.u32 %v249, 4294901760
      %v2454 = vsub.f32 %v249, %v2453
      %v2455 = vand.u32 %v2454, 4294901760
      %2456 = vmatmul.mubr.f32.gmra.mrb[0].mxu0 %v2455
      %v2457 = vpop.f32.mrb[0].mxu0
      %v2458 = vadd.f32 %v2261, %v2457
      %v2459 = vpop.f32.mrb[0].mxu0
      %2460 = vdwg.mxu0
      %2461 = vmatprep.subr.mxu0 0.0
      %v2462 = vand.u32 %v191, 4294901760
      %v2463 = vsub.f32 %v191, %v2462
      %v2464 = vand.u32 %v2463, 4294901760
      %2465 = vmatpush1.msra.mxu0 %v2464
      %2466 = vmatprep.subr.mxu0 0.0
      %v2467 = vand.u32 %v192, 4294901760
      %v2468 = vsub.f32 %v192, %v2467
      %v2469 = vand.u32 %v2468, 4294901760
      %2470 = vmatpush1.msra.mxu0 %v2469
      %2471 = vmatprep.subr.mxu0 0.0
      %v2472 = vand.u32 %v193, 4294901760
      %v2473 = vsub.f32 %v193, %v2472
      %v2474 = vand.u32 %v2473, 4294901760
      %2475 = vmatpush1.msra.mxu0 %v2474
      %2476 = vmatprep.subr.mxu0 0.0
      %v2477 = vand.u32 %v194, 4294901760
      %v2478 = vsub.f32 %v194, %v2477
      %v2479 = vand.u32 %v2478, 4294901760
      %2480 = vmatpush1.msra.mxu0 %v2479
      %2481 = vmatprep.subr.mxu0 0.0
      %2482 = vmatpush1.msra.mxu0 0.0
      %2483 = vmatprep.subr.mxu0 0.0
      %2484 = vmatpush1.msra.mxu0 0.0
      %2485 = vmatprep.subr.mxu0 0.0
      %2486 = vmatpush1.msra.mxu0 0.0
      %2487 = vmatprep.subr.mxu0 0.0
      %2488 = vmatpush1.msra.mxu0 0.0
      %2489 = vmatprep.subr.mxu0 0.0
      %2490 = vmatpush1.msra.mxu0 0.0
      %2491 = vmatprep.subr.mxu0 0.0
      %2492 = vmatpush1.msra.mxu0 0.0
      %2493 = vmatprep.subr.mxu0 0.0
      %2494 = vmatpush1.msra.mxu0 0.0
      %2495 = vmatprep.subr.mxu0 0.0
      %2496 = vmatpush1.msra.mxu0 0.0
      %2497 = vmatprep.subr.mxu0 0.0
      %2498 = vmatpush1.msra.mxu0 0.0
      %2499 = vmatprep.subr.mxu0 0.0
      %2500 = vmatpush1.msra.mxu0 0.0
      %2501 = vmatprep.subr.mxu0 0.0
      %2502 = vmatpush1.msra.mxu0 0.0
      %2503 = vmatprep.subr.mxu0 0.0
      %2504 = vmatpush1.msra.mxu0 0.0
      %2505 = vmatprep.subr.mxu0 0.0
      %2506 = vmatpush1.msra.mxu0 0.0
      %2507 = vmatprep.subr.mxu0 0.0
      %2508 = vmatpush1.msra.mxu0 0.0
      %2509 = vmatprep.subr.mxu0 0.0
      %2510 = vmatpush1.msra.mxu0 0.0
      %2511 = vmatprep.subr.mxu0 0.0
      %2512 = vmatpush1.msra.mxu0 0.0
      %2513 = vmatprep.subr.mxu0 0.0
      %2514 = vmatpush1.msra.mxu0 0.0
      %2515 = vmatprep.subr.mxu0 0.0
      %2516 = vmatpush1.msra.mxu0 0.0
      %2517 = vmatprep.subr.mxu0 0.0
      %2518 = vmatpush1.msra.mxu0 0.0
      %2519 = vmatprep.subr.mxu0 0.0
      %2520 = vmatpush1.msra.mxu0 0.0
      %2521 = vmatprep.subr.mxu0 0.0
      %2522 = vmatpush1.msra.mxu0 0.0
      %2523 = vmatprep.subr.mxu0 0.0
      %2524 = vmatpush1.msra.mxu0 0.0
      %2525 = vmatprep.subr.mxu0 0.0
      %2526 = vmatpush1.msra.mxu0 0.0
      %2527 = vmatprep.subr.mxu0 0.0
      %2528 = vmatpush1.msra.mxu0 0.0
      %2529 = vmatprep.subr.mxu0 0.0
      %2530 = vmatpush1.msra.mxu0 0.0
      %2531 = vmatprep.subr.mxu0 0.0
      %2532 = vmatpush1.msra.mxu0 0.0
      %2533 = vmatprep.subr.mxu0 0.0
      %2534 = vmatpush1.msra.mxu0 0.0
      %2535 = vmatprep.subr.mxu0 0.0
      %2536 = vmatpush1.msra.mxu0 0.0
      %2537 = vmatprep.mubr.f32.mxu0 0.0
      %v2538 = vand.u32 %v204, 4294901760
      %2539 = vmatmul.mubr.f32.gmra.mrb[0].mxu0 %v2538
      %v2540 = vpop.f32.mrb[0].mxu0
      %v2541 = vadd.f32 %v2338, %v2540
      %v2542 = vpop.f32.mrb[0].mxu0
      %2543 = vmatprep.mubr.f32.mxu0 0.0
      %v2544 = vand.u32 %v207, 4294901760
      %2545 = vmatmul.mubr.f32.gmra.mrb[0].mxu0 %v2544
      %v2546 = vpop.f32.mrb[0].mxu0
      %v2547 = vadd.f32 %v2346, %v2546
      %v2548 = vpop.f32.mrb[0].mxu0
      %2549 = vmatprep.mubr.f32.mxu0 0.0
      %v2550 = vand.u32 %v210, 4294901760
      %2551 = vmatmul.mubr.f32.gmra.mrb[0].mxu0 %v2550
      %v2552 = vpop.f32.mrb[0].mxu0
      %v2553 = vadd.f32 %v2354, %v2552
      %v2554 = vpop.f32.mrb[0].mxu0
      %2555 = vmatprep.mubr.f32.mxu0 0.0
      %v2556 = vand.u32 %v213, 4294901760
      %2557 = vmatmul.mubr.f32.gmra.mrb[0].mxu0 %v2556
      %v2558 = vpop.f32.mrb[0].mxu0
      %v2559 = vadd.f32 %v2362, %v2558
      %v2560 = vpop.f32.mrb[0].mxu0
      %2561 = vmatprep.mubr.f32.mxu0 0.0
      %v2562 = vand.u32 %v216, 4294901760
      %2563 = vmatmul.mubr.f32.gmra.mrb[0].mxu0 %v2562
      %v2564 = vpop.f32.mrb[0].mxu0
      %v2565 = vadd.f32 %v2370, %v2564
      %v2566 = vpop.f32.mrb[0].mxu0
      %2567 = vmatprep.mubr.f32.mxu0 0.0
      %v2568 = vand.u32 %v219, 4294901760
      %2569 = vmatmul.mubr.f32.gmra.mrb[0].mxu0 %v2568
      %v2570 = vpop.f32.mrb[0].mxu0
      %v2571 = vadd.f32 %v2378, %v2570
      %v2572 = vpop.f32.mrb[0].mxu0
      %2573 = vmatprep.mubr.f32.mxu0 0.0
      %v2574 = vand.u32 %v222, 4294901760
      %2575 = vmatmul.mubr.f32.gmra.mrb[0].mxu0 %v2574
      %v2576 = vpop.f32.mrb[0].mxu0
      %v2577 = vadd.f32 %v2386, %v2576
      %v2578 = vpop.f32.mrb[0].mxu0
      %2579 = vmatprep.mubr.f32.mxu0 0.0
      %v2580 = vand.u32 %v225, 4294901760
      %2581 = vmatmul.mubr.f32.gmra.mrb[0].mxu0 %v2580
      %v2582 = vpop.f32.mrb[0].mxu0
      %v2583 = vadd.f32 %v2394, %v2582
      %v2584 = vpop.f32.mrb[0].mxu0
      %2585 = vmatprep.mubr.f32.mxu0 0.0
      %v2586 = vand.u32 %v228, 4294901760
      %2587 = vmatmul.mubr.f32.gmra.mrb[0].mxu0 %v2586
      %v2588 = vpop.f32.mrb[0].mxu0
      %v2589 = vadd.f32 %v2402, %v2588
      %v2590 = vpop.f32.mrb[0].mxu0
      %2591 = vmatprep.mubr.f32.mxu0 0.0
      %v2592 = vand.u32 %v231, 4294901760
      %2593 = vmatmul.mubr.f32.gmra.mrb[0].mxu0 %v2592
      %v2594 = vpop.f32.mrb[0].mxu0
      %v2595 = vadd.f32 %v2410, %v2594
      %v2596 = vpop.f32.mrb[0].mxu0
      %2597 = vmatprep.mubr.f32.mxu0 0.0
      %v2598 = vand.u32 %v234, 4294901760
      %2599 = vmatmul.mubr.f32.gmra.mrb[0].mxu0 %v2598
      %v2600 = vpop.f32.mrb[0].mxu0
      %v2601 = vadd.f32 %v2418, %v2600
      %v2602 = vpop.f32.mrb[0].mxu0
      %2603 = vmatprep.mubr.f32.mxu0 0.0
      %v2604 = vand.u32 %v237, 4294901760
      %2605 = vmatmul.mubr.f32.gmra.mrb[0].mxu0 %v2604
      %v2606 = vpop.f32.mrb[0].mxu0
      %v2607 = vadd.f32 %v2426, %v2606
      %v2608 = vpop.f32.mrb[0].mxu0
      %2609 = vmatprep.mubr.f32.mxu0 0.0
      %v2610 = vand.u32 %v240, 4294901760
      %2611 = vmatmul.mubr.f32.gmra.mrb[0].mxu0 %v2610
      %v2612 = vpop.f32.mrb[0].mxu0
      %v2613 = vadd.f32 %v2434, %v2612
      %v2614 = vpop.f32.mrb[0].mxu0
      %2615 = vmatprep.mubr.f32.mxu0 0.0
      %v2616 = vand.u32 %v243, 4294901760
      %2617 = vmatmul.mubr.f32.gmra.mrb[0].mxu0 %v2616
      %v2618 = vpop.f32.mrb[0].mxu0
      %v2619 = vadd.f32 %v2442, %v2618
      %v2620 = vpop.f32.mrb[0].mxu0
      %2621 = vmatprep.mubr.f32.mxu0 0.0
      %v2622 = vand.u32 %v246, 4294901760
      %2623 = vmatmul.mubr.f32.gmra.mrb[0].mxu0 %v2622
      %v2624 = vpop.f32.mrb[0].mxu0
      %v2625 = vadd.f32 %v2450, %v2624
      %v2626 = vpop.f32.mrb[0].mxu0
      %2627 = vmatprep.mubr.f32.mxu0 0.0
      %v2628 = vand.u32 %v249, 4294901760
      %2629 = vmatmul.mubr.f32.gmra.mrb[0].mxu0 %v2628
      %v2630 = vpop.f32.mrb[0].mxu0
      %v2631 = vadd.f32 %v2458, %v2630
      %v2632 = vpop.f32.mrb[0].mxu0
      %2633 = vdwg.mxu0
      %2634 = vmatprep.subr.mxu0 0.0
      %v2635 = vand.u32 %v191, 4294901760
      %2636 = vmatpush1.msra.mxu0 %v2635
      %2637 = vmatprep.subr.mxu0 0.0
      %v2638 = vand.u32 %v192, 4294901760
      %2639 = vmatpush1.msra.mxu0 %v2638
      %2640 = vmatprep.subr.mxu0 0.0
      %v2641 = vand.u32 %v193, 4294901760
      %2642 = vmatpush1.msra.mxu0 %v2641
      %2643 = vmatprep.subr.mxu0 0.0
      %v2644 = vand.u32 %v194, 4294901760
      %2645 = vmatpush1.msra.mxu0 %v2644
      %2646 = vmatprep.subr.mxu0 0.0
      %2647 = vmatpush1.msra.mxu0 0.0
      %2648 = vmatprep.subr.mxu0 0.0
      %2649 = vmatpush1.msra.mxu0 0.0
      %2650 = vmatprep.subr.mxu0 0.0
      %2651 = vmatpush1.msra.mxu0 0.0
      %2652 = vmatprep.subr.mxu0 0.0
      %2653 = vmatpush1.msra.mxu0 0.0
      %2654 = vmatprep.subr.mxu0 0.0
      %2655 = vmatpush1.msra.mxu0 0.0
      %2656 = vmatprep.subr.mxu0 0.0
      %2657 = vmatpush1.msra.mxu0 0.0
      %2658 = vmatprep.subr.mxu0 0.0
      %2659 = vmatpush1.msra.mxu0 0.0
      %2660 = vmatprep.subr.mxu0 0.0
      %2661 = vmatpush1.msra.mxu0 0.0
      %2662 = vmatprep.subr.mxu0 0.0
      %2663 = vmatpush1.msra.mxu0 0.0
      %2664 = vmatprep.subr.mxu0 0.0
      %2665 = vmatpush1.msra.mxu0 0.0
      %2666 = vmatprep.subr.mxu0 0.0
      %2667 = vmatpush1.msra.mxu0 0.0
      %2668 = vmatprep.subr.mxu0 0.0
      %2669 = vmatpush1.msra.mxu0 0.0
      %2670 = vmatprep.subr.mxu0 0.0
      %2671 = vmatpush1.msra.mxu0 0.0
      %2672 = vmatprep.subr.mxu0 0.0
      %2673 = vmatpush1.msra.mxu0 0.0
      %2674 = vmatprep.subr.mxu0 0.0
      %2675 = vmatpush1.msra.mxu0 0.0
      %2676 = vmatprep.subr.mxu0 0.0
      %2677 = vmatpush1.msra.mxu0 0.0
      %2678 = vmatprep.subr.mxu0 0.0
      %2679 = vmatpush1.msra.mxu0 0.0
      %2680 = vmatprep.subr.mxu0 0.0
      %2681 = vmatpush1.msra.mxu0 0.0
      %2682 = vmatprep.subr.mxu0 0.0
      %2683 = vmatpush1.msra.mxu0 0.0
      %2684 = vmatprep.subr.mxu0 0.0
      %2685 = vmatpush1.msra.mxu0 0.0
      %2686 = vmatprep.subr.mxu0 0.0
      %2687 = vmatpush1.msra.mxu0 0.0
      %2688 = vmatprep.subr.mxu0 0.0
      %2689 = vmatpush1.msra.mxu0 0.0
      %2690 = vmatprep.subr.mxu0 0.0
      %2691 = vmatpush1.msra.mxu0 0.0
      %2692 = vmatprep.subr.mxu0 0.0
      %2693 = vmatpush1.msra.mxu0 0.0
      %2694 = vmatprep.subr.mxu0 0.0
      %2695 = vmatpush1.msra.mxu0 0.0
      %2696 = vmatprep.subr.mxu0 0.0
      %2697 = vmatpush1.msra.mxu0 0.0
      %2698 = vmatprep.subr.mxu0 0.0
      %2699 = vmatpush1.msra.mxu0 0.0
      %2700 = vmatprep.subr.mxu0 0.0
      %2701 = vmatpush1.msra.mxu0 0.0
      %2702 = vmatprep.mubr.f32.mxu0 0.0
      %v2703 = vand.u32 %v204, 4294901760
      %2704 = vmatmul.mubr.f32.gmra.mrb[0].mxu0 %v2703
      %v2705 = vpop.f32.mrb[0].mxu0
      %v2706 = vadd.f32 %v2541, %v2705
      %v2707 = vpop.f32.mrb[0].mxu0
      %2708 = vmatprep.mubr.f32.mxu0 0.0
      %v2709 = vand.u32 %v207, 4294901760
      %2710 = vmatmul.mubr.f32.gmra.mrb[0].mxu0 %v2709
      %v2711 = vpop.f32.mrb[0].mxu0
      %v2712 = vadd.f32 %v2547, %v2711
      %v2713 = vpop.f32.mrb[0].mxu0
      %2714 = vmatprep.mubr.f32.mxu0 0.0
      %v2715 = vand.u32 %v210, 4294901760
      %2716 = vmatmul.mubr.f32.gmra.mrb[0].mxu0 %v2715
      %v2717 = vpop.f32.mrb[0].mxu0
      %v2718 = vadd.f32 %v2553, %v2717
      %v2719 = vpop.f32.mrb[0].mxu0
      %2720 = vmatprep.mubr.f32.mxu0 0.0
      %v2721 = vand.u32 %v213, 4294901760
      %2722 = vmatmul.mubr.f32.gmra.mrb[0].mxu0 %v2721
      %v2723 = vpop.f32.mrb[0].mxu0
      %v2724 = vadd.f32 %v2559, %v2723
      %v2725 = vpop.f32.mrb[0].mxu0
      %2726 = vmatprep.mubr.f32.mxu0 0.0
      %v2727 = vand.u32 %v216, 4294901760
      %2728 = vmatmul.mubr.f32.gmra.mrb[0].mxu0 %v2727
      %v2729 = vpop.f32.mrb[0].mxu0
      %v2730 = vadd.f32 %v2565, %v2729
      %v2731 = vpop.f32.mrb[0].mxu0
      %2732 = vmatprep.mubr.f32.mxu0 0.0
      %v2733 = vand.u32 %v219, 4294901760
      %2734 = vmatmul.mubr.f32.gmra.mrb[0].mxu0 %v2733
      %v2735 = vpop.f32.mrb[0].mxu0
      %v2736 = vadd.f32 %v2571, %v2735
      %v2737 = vpop.f32.mrb[0].mxu0
      %2738 = vmatprep.mubr.f32.mxu0 0.0
      %v2739 = vand.u32 %v222, 4294901760
      %2740 = vmatmul.mubr.f32.gmra.mrb[0].mxu0 %v2739
      %v2741 = vpop.f32.mrb[0].mxu0
      %v2742 = vadd.f32 %v2577, %v2741
      %v2743 = vpop.f32.mrb[0].mxu0
      %2744 = vmatprep.mubr.f32.mxu0 0.0
      %v2745 = vand.u32 %v225, 4294901760
      %2746 = vmatmul.mubr.f32.gmra.mrb[0].mxu0 %v2745
      %v2747 = vpop.f32.mrb[0].mxu0
      %v2748 = vadd.f32 %v2583, %v2747
      %v2749 = vpop.f32.mrb[0].mxu0
      %2750 = vmatprep.mubr.f32.mxu0 0.0
      %v2751 = vand.u32 %v228, 4294901760
      %2752 = vmatmul.mubr.f32.gmra.mrb[0].mxu0 %v2751
      %v2753 = vpop.f32.mrb[0].mxu0
      %v2754 = vadd.f32 %v2589, %v2753
      %v2755 = vpop.f32.mrb[0].mxu0
      %2756 = vmatprep.mubr.f32.mxu0 0.0
      %v2757 = vand.u32 %v231, 4294901760
      %2758 = vmatmul.mubr.f32.gmra.mrb[0].mxu0 %v2757
      %v2759 = vpop.f32.mrb[0].mxu0
      %v2760 = vadd.f32 %v2595, %v2759
      %v2761 = vpop.f32.mrb[0].mxu0
      %2762 = vmatprep.mubr.f32.mxu0 0.0
      %v2763 = vand.u32 %v234, 4294901760
      %2764 = vmatmul.mubr.f32.gmra.mrb[0].mxu0 %v2763
      %v2765 = vpop.f32.mrb[0].mxu0
      %v2766 = vadd.f32 %v2601, %v2765
      %v2767 = vpop.f32.mrb[0].mxu0
      %2768 = vmatprep.mubr.f32.mxu0 0.0
      %v2769 = vand.u32 %v237, 4294901760
      %2770 = vmatmul.mubr.f32.gmra.mrb[0].mxu0 %v2769
      %v2771 = vpop.f32.mrb[0].mxu0
      %v2772 = vadd.f32 %v2607, %v2771
      %v2773 = vpop.f32.mrb[0].mxu0
      %2774 = vmatprep.mubr.f32.mxu0 0.0
      %v2775 = vand.u32 %v240, 4294901760
      %2776 = vmatmul.mubr.f32.gmra.mrb[0].mxu0 %v2775
      %v2777 = vpop.f32.mrb[0].mxu0
      %v2778 = vadd.f32 %v2613, %v2777
      %v2779 = vpop.f32.mrb[0].mxu0
      %2780 = vmatprep.mubr.f32.mxu0 0.0
      %v2781 = vand.u32 %v243, 4294901760
      %2782 = vmatmul.mubr.f32.gmra.mrb[0].mxu0 %v2781
      %v2783 = vpop.f32.mrb[0].mxu0
      %v2784 = vadd.f32 %v2619, %v2783
      %v2785 = vpop.f32.mrb[0].mxu0
      %2786 = vmatprep.mubr.f32.mxu0 0.0
      %v2787 = vand.u32 %v246, 4294901760
      %2788 = vmatmul.mubr.f32.gmra.mrb[0].mxu0 %v2787
      %v2789 = vpop.f32.mrb[0].mxu0
      %v2790 = vadd.f32 %v2625, %v2789
      %v2791 = vpop.f32.mrb[0].mxu0
      %2792 = vmatprep.mubr.f32.mxu0 0.0
      %v2793 = vand.u32 %v249, 4294901760
      %2794 = vmatmul.mubr.f32.gmra.mrb[0].mxu0 %v2793
      %v2795 = vpop.f32.mrb[0].mxu0
      %v2796 = vadd.f32 %v2631, %v2795
      %v2797 = vpop.f32.mrb[0].mxu0
      %2798 = vdwg.mxu0
      %v2799 = vxor.u32 %v2706, 2147483648
      %v2800 = vxor.u32 %v2712, 2147483648
      %v2801 = vxor.u32 %v2718, 2147483648
      %v2802 = vxor.u32 %v2724, 2147483648
      %v2803 = vxor.u32 %v2730, 2147483648
      %v2804 = vxor.u32 %v2736, 2147483648
      %v2805 = vxor.u32 %v2742, 2147483648
      %v2806 = vxor.u32 %v2748, 2147483648
      %v2807 = vxor.u32 %v2754, 2147483648
      %v2808 = vxor.u32 %v2760, 2147483648
      %v2809 = vxor.u32 %v2766, 2147483648
      %v2810 = vxor.u32 %v2772, 2147483648
      %v2811 = vxor.u32 %v2778, 2147483648
      %v2812 = vxor.u32 %v2784, 2147483648
      %v2813 = vxor.u32 %v2790, 2147483648
      %v2814 = vxor.u32 %v2796, 2147483648
      %v2815 = vmul.f32 %v2799, 1.442695
      %v2816 = vpow.pop %v2815
      %v2817 = vmul.f32 %v2800, 1.442695
      %v2818 = vpow.pop %v2817
      %v2819 = vmul.f32 %v2801, 1.442695
      %v2820 = vpow.pop %v2819
      %v2821 = vmul.f32 %v2802, 1.442695
      %v2822 = vpow.pop %v2821
      %v2823 = vmul.f32 %v2803, 1.442695
      %v2824 = vpow.pop %v2823
      %v2825 = vmul.f32 %v2804, 1.442695
      %v2826 = vpow.pop %v2825
      %v2827 = vmul.f32 %v2805, 1.442695
      %v2828 = vpow.pop %v2827
      %v2829 = vmul.f32 %v2806, 1.442695
      %v2830 = vpow.pop %v2829
      %v2831 = vmul.f32 %v2807, 1.442695
      %v2832 = vpow.pop %v2831
      %v2833 = vmul.f32 %v2808, 1.442695
      %v2834 = vpow.pop %v2833
      %v2835 = vmul.f32 %v2809, 1.442695
      %v2836 = vpow.pop %v2835
      %v2837 = vmul.f32 %v2810, 1.442695
      %v2838 = vpow.pop %v2837
      %v2839 = vmul.f32 %v2811, 1.442695
      %v2840 = vpow.pop %v2839
      %v2841 = vmul.f32 %v2812, 1.442695
      %v2842 = vpow.pop %v2841
      %v2843 = vmul.f32 %v2813, 1.442695
      %v2844 = vpow.pop %v2843
      %v2845 = vmul.f32 %v2814, 1.442695
      %v2846 = vpow.pop %v2845
      %v2847 = vadd.f32 %v2816, 1.0
      %v2848 = vadd.f32 %v2818, 1.0
      %v2849 = vadd.f32 %v2820, 1.0
      %v2850 = vadd.f32 %v2822, 1.0
      %v2851 = vadd.f32 %v2824, 1.0
      %v2852 = vadd.f32 %v2826, 1.0
      %v2853 = vadd.f32 %v2828, 1.0
      %v2854 = vadd.f32 %v2830, 1.0
      %v2855 = vadd.f32 %v2832, 1.0
      %v2856 = vadd.f32 %v2834, 1.0
      %v2857 = vadd.f32 %v2836, 1.0
      %v2858 = vadd.f32 %v2838, 1.0
      %v2859 = vadd.f32 %v2840, 1.0
      %v2860 = vadd.f32 %v2842, 1.0
      %v2861 = vadd.f32 %v2844, 1.0
      %v2862 = vadd.f32 %v2846, 1.0
      %v2863 = vrcp.pop %v2847
      %v2864 = vmul.f32 1.0, %v2863
      %v2865 = vrcp.pop %v2848
      %v2866 = vmul.f32 1.0, %v2865
      %v2867 = vrcp.pop %v2849
      %v2868 = vmul.f32 1.0, %v2867
      %v2869 = vrcp.pop %v2850
      %v2870 = vmul.f32 1.0, %v2869
      %v2871 = vrcp.pop %v2851
      %v2872 = vmul.f32 1.0, %v2871
      %v2873 = vrcp.pop %v2852
      %v2874 = vmul.f32 1.0, %v2873
      %v2875 = vrcp.pop %v2853
      %v2876 = vmul.f32 1.0, %v2875
      %v2877 = vrcp.pop %v2854
      %v2878 = vmul.f32 1.0, %v2877
      %v2879 = vrcp.pop %v2855
      %v2880 = vmul.f32 1.0, %v2879
      %v2881 = vrcp.pop %v2856
      %v2882 = vmul.f32 1.0, %v2881
      %v2883 = vrcp.pop %v2857
      %v2884 = vmul.f32 1.0, %v2883
      %v2885 = vrcp.pop %v2858
      %v2886 = vmul.f32 1.0, %v2885
      %v2887 = vrcp.pop %v2859
      %v2888 = vmul.f32 1.0, %v2887
      %v2889 = vrcp.pop %v2860
      %v2890 = vmul.f32 1.0, %v2889
      %v2891 = vrcp.pop %v2861
      %v2892 = vmul.f32 1.0, %v2891
      %v2893 = vrcp.pop %v2862
      %v2894 = vmul.f32 1.0, %v2893
      %v2895 = vlaneseq
      %v2896 = vshrl.u32 %v2895, 7
      %v2897 = vsub.s32 0, %v2896
      %v2898 = vrot.slane %v196, %v2897
      %v2899 = vmul.f32 %v1653, %v2898
      %v2900 = vmul.f32 %v1654, %v2898
      %v2901 = vmul.f32 %v1655, %v2898
      %v2902 = vmul.f32 %v1656, %v2898
      %v2903 = vmul.f32 %v1657, %v2898
      %v2904 = vmul.f32 %v1658, %v2898
      %v2905 = vmul.f32 %v1659, %v2898
      %v2906 = vmul.f32 %v1660, %v2898
      %v2907 = vmul.f32 %v1661, %v2898
      %v2908 = vmul.f32 %v1662, %v2898
      %v2909 = vmul.f32 %v1663, %v2898
      %v2910 = vmul.f32 %v1664, %v2898
      %v2911 = vmul.f32 %v1665, %v2898
      %v2912 = vmul.f32 %v1666, %v2898
      %v2913 = vmul.f32 %v1667, %v2898
      %v2914 = vmul.f32 %v1668, %v2898
      %v2915 = vmul.f32 %v2899, 1.442695
      %v2916 = vpow.pop %v2915
      %v2917 = vmul.f32 %v2900, 1.442695
      %v2918 = vpow.pop %v2917
      %v2919 = vmul.f32 %v2901, 1.442695
      %v2920 = vpow.pop %v2919
      %v2921 = vmul.f32 %v2902, 1.442695
      %v2922 = vpow.pop %v2921
      %v2923 = vmul.f32 %v2903, 1.442695
      %v2924 = vpow.pop %v2923
      %v2925 = vmul.f32 %v2904, 1.442695
      %v2926 = vpow.pop %v2925
      %v2927 = vmul.f32 %v2905, 1.442695
      %v2928 = vpow.pop %v2927
      %v2929 = vmul.f32 %v2906, 1.442695
      %v2930 = vpow.pop %v2929
      %v2931 = vmul.f32 %v2907, 1.442695
      %v2932 = vpow.pop %v2931
      %v2933 = vmul.f32 %v2908, 1.442695
      %v2934 = vpow.pop %v2933
      %v2935 = vmul.f32 %v2909, 1.442695
      %v2936 = vpow.pop %v2935
      %v2937 = vmul.f32 %v2910, 1.442695
      %v2938 = vpow.pop %v2937
      %v2939 = vmul.f32 %v2911, 1.442695
      %v2940 = vpow.pop %v2939
      %v2941 = vmul.f32 %v2912, 1.442695
      %v2942 = vpow.pop %v2941
      %v2943 = vmul.f32 %v2913, 1.442695
      %v2944 = vpow.pop %v2943
      %v2945 = vmul.f32 %v2914, 1.442695
      %v2946 = vpow.pop %v2945
      %v2947 = vmul.f32 %v1653, %v171
      %v2948 = vmul.f32 %v1654, %v172
      %v2949 = vmul.f32 %v1655, %v173
      %v2950 = vmul.f32 %v1656, %v174
      %v2951 = vmul.f32 %v1657, %v175
      %v2952 = vmul.f32 %v1658, %v176
      %v2953 = vmul.f32 %v1659, %v177
      %v2954 = vmul.f32 %v1660, %v178
      %v2955 = vmul.f32 %v1661, %v179
      %v2956 = vmul.f32 %v1662, %v180
      %v2957 = vmul.f32 %v1663, %v181
      %v2958 = vmul.f32 %v1664, %v182
      %v2959 = vmul.f32 %v1665, %v183
      %v2960 = vmul.f32 %v1666, %v184
      %v2961 = vmul.f32 %v1667, %v185
      %v2962 = vmul.f32 %v1668, %v186
      %v2963 = vmul.f32 %v2916, 0.0
      %v2964 = vadd.f32 %v2963, %v2947
      %v2965 = vmul.f32 %v2918, %v2964
      %v2966 = vadd.f32 %v2965, %v2948
      %v2967 = vmul.f32 %v2920, %v2966
      %v2968 = vadd.f32 %v2967, %v2949
      %v2969 = vmul.f32 %v2922, %v2968
      %v2970 = vadd.f32 %v2969, %v2950
      %v2971 = vmul.f32 %v2924, %v2970
      %v2972 = vadd.f32 %v2971, %v2951
      %v2973 = vmul.f32 %v2926, %v2972
      %v2974 = vadd.f32 %v2973, %v2952
      %v2975 = vmul.f32 %v2928, %v2974
      %v2976 = vadd.f32 %v2975, %v2953
      %v2977 = vmul.f32 %v2930, %v2976
      %v2978 = vadd.f32 %v2977, %v2954
      %v2979 = vmul.f32 %v2932, %v2978
      %v2980 = vadd.f32 %v2979, %v2955
      %v2981 = vmul.f32 %v2934, %v2980
      %v2982 = vadd.f32 %v2981, %v2956
      %v2983 = vmul.f32 %v2936, %v2982
      %v2984 = vadd.f32 %v2983, %v2957
      %v2985 = vmul.f32 %v2938, %v2984
      %v2986 = vadd.f32 %v2985, %v2958
      %v2987 = vmul.f32 %v2940, %v2986
      %v2988 = vadd.f32 %v2987, %v2959
      %v2989 = vmul.f32 %v2942, %v2988
      %v2990 = vadd.f32 %v2989, %v2960
      %v2991 = vmul.f32 %v2944, %v2990
      %v2992 = vadd.f32 %v2991, %v2961
      %v2993 = vmul.f32 %v2946, %v2992
      %v2994 = vadd.f32 %v2993, %v2962
      %v2995 = vmul.f32 %v2964, %v2864
      %v2996 = vmul.f32 %v2966, %v2866
      %v2997 = vmul.f32 %v2968, %v2868
      %v2998 = vmul.f32 %v2970, %v2870
      %v2999 = vmul.f32 %v2972, %v2872
      %v3000 = vmul.f32 %v2974, %v2874
      %v3001 = vmul.f32 %v2976, %v2876
      %v3002 = vmul.f32 %v2978, %v2878
      %v3003 = vmul.f32 %v2980, %v2880
      %v3004 = vmul.f32 %v2982, %v2882
      %v3005 = vmul.f32 %v2984, %v2884
      %v3006 = vmul.f32 %v2986, %v2886
      %v3007 = vmul.f32 %v2988, %v2888
      %v3008 = vmul.f32 %v2990, %v2890
      %v3009 = vmul.f32 %v2992, %v2892
      %v3010 = vmul.f32 %v2994, %v2894
      %v3011 = vlaneseq
      %v3012 = vshrl.u32 %v3011, 7
      %v3013 = vsub.s32 0, %v3012
      %v3014 = vrot.slane %v197, %v3013
      %v3015 = vmul.f32 %v2995, %v3014
      %v3016 = vmul.f32 %v2996, %v3014
      %v3017 = vmul.f32 %v2997, %v3014
      %v3018 = vmul.f32 %v2998, %v3014
      %v3019 = vmul.f32 %v2999, %v3014
      %v3020 = vmul.f32 %v3000, %v3014
      %v3021 = vmul.f32 %v3001, %v3014
      %v3022 = vmul.f32 %v3002, %v3014
      %v3023 = vmul.f32 %v3003, %v3014
      %v3024 = vmul.f32 %v3004, %v3014
      %v3025 = vmul.f32 %v3005, %v3014
      %v3026 = vmul.f32 %v3006, %v3014
      %v3027 = vmul.f32 %v3007, %v3014
      %v3028 = vmul.f32 %v3008, %v3014
      %v3029 = vmul.f32 %v3009, %v3014
      %v3030 = vmul.f32 %v3010, %v3014
      %v3031 = vsel %vm202, %v3015, 0.0
      %3032 = vadd.xlane.f32.xlu0 %v3031
      %v3033 = vpop.xlane.xlu0 %3032
      %v3034 = vsel %vm202, %v3016, 0.0
      %3035 = vadd.xlane.f32.xlu0 %v3034
      %v3036 = vpop.xlane.xlu0 %3035
      %v3037 = vsel %vm202, %v3017, 0.0
      %3038 = vadd.xlane.f32.xlu0 %v3037
      %v3039 = vpop.xlane.xlu0 %3038
      %v3040 = vsel %vm202, %v3018, 0.0
      %3041 = vadd.xlane.f32.xlu0 %v3040
      %v3042 = vpop.xlane.xlu0 %3041
      %v3043 = vsel %vm202, %v3019, 0.0
      %3044 = vadd.xlane.f32.xlu0 %v3043
      %v3045 = vpop.xlane.xlu0 %3044
      %v3046 = vsel %vm202, %v3020, 0.0
      %3047 = vadd.xlane.f32.xlu0 %v3046
      %v3048 = vpop.xlane.xlu0 %3047
      %v3049 = vsel %vm202, %v3021, 0.0
      %3050 = vadd.xlane.f32.xlu0 %v3049
      %v3051 = vpop.xlane.xlu0 %3050
      %v3052 = vsel %vm202, %v3022, 0.0
      %3053 = vadd.xlane.f32.xlu0 %v3052
      %v3054 = vpop.xlane.xlu0 %3053
      %v3055 = vsel %vm202, %v3023, 0.0
      %3056 = vadd.xlane.f32.xlu0 %v3055
      %v3057 = vpop.xlane.xlu0 %3056
      %v3058 = vsel %vm202, %v3024, 0.0
      %3059 = vadd.xlane.f32.xlu0 %v3058
      %v3060 = vpop.xlane.xlu0 %3059
      %v3061 = vsel %vm202, %v3025, 0.0
      %3062 = vadd.xlane.f32.xlu0 %v3061
      %v3063 = vpop.xlane.xlu0 %3062
      %v3064 = vsel %vm202, %v3026, 0.0
      %3065 = vadd.xlane.f32.xlu0 %v3064
      %v3066 = vpop.xlane.xlu0 %3065
      %v3067 = vsel %vm202, %v3027, 0.0
      %3068 = vadd.xlane.f32.xlu0 %v3067
      %v3069 = vpop.xlane.xlu0 %3068
      %v3070 = vsel %vm202, %v3028, 0.0
      %3071 = vadd.xlane.f32.xlu0 %v3070
      %v3072 = vpop.xlane.xlu0 %3071
      %v3073 = vsel %vm202, %v3029, 0.0
      %3074 = vadd.xlane.f32.xlu0 %v3073
      %v3075 = vpop.xlane.xlu0 %3074
      %v3076 = vsel %vm202, %v3030, 0.0
      %3077 = vadd.xlane.f32.xlu0 %v3076
      %v3078 = vpop.xlane.xlu0 %3077
      %v3095 = vlaneseq
      %v3096 = vand.u32 %v3095, 127
      %v3097 = vlaneseq
      %v3098 = vshrl.u32 %v3097, 7
      %v3099 = vsub.s32 %v3096, %v3098
      %v3100 = vrot.slane %v3033, %v3099
      %v3101 = vlaneseq
      %v3102 = vshrl.u32 %v3101, 7
      %v3103 = vsub.s32 %v3096, %v3102
      %v3104 = vrot.slane %v3036, %v3103
      %v3105 = vlaneseq
      %v3106 = vshrl.u32 %v3105, 7
      %v3107 = vsub.s32 %v3096, %v3106
      %v3108 = vrot.slane %v3039, %v3107
      %v3109 = vlaneseq
      %v3110 = vshrl.u32 %v3109, 7
      %v3111 = vsub.s32 %v3096, %v3110
      %v3112 = vrot.slane %v3042, %v3111
      %v3113 = vlaneseq
      %v3114 = vshrl.u32 %v3113, 7
      %v3115 = vsub.s32 %v3096, %v3114
      %v3116 = vrot.slane %v3045, %v3115
      %v3117 = vlaneseq
      %v3118 = vshrl.u32 %v3117, 7
      %v3119 = vsub.s32 %v3096, %v3118
      %v3120 = vrot.slane %v3048, %v3119
      %v3121 = vlaneseq
      %v3122 = vshrl.u32 %v3121, 7
      %v3123 = vsub.s32 %v3096, %v3122
      %v3124 = vrot.slane %v3051, %v3123
      %v3125 = vlaneseq
      %v3126 = vshrl.u32 %v3125, 7
      %v3127 = vsub.s32 %v3096, %v3126
      %v3128 = vrot.slane %v3054, %v3127
      %v3129 = vlaneseq
      %v3130 = vshrl.u32 %v3129, 7
      %v3131 = vsub.s32 %v3096, %v3130
      %v3132 = vrot.slane %v3057, %v3131
      %v3133 = vlaneseq
      %v3134 = vshrl.u32 %v3133, 7
      %v3135 = vsub.s32 %v3096, %v3134
      %v3136 = vrot.slane %v3060, %v3135
      %v3137 = vlaneseq
      %v3138 = vshrl.u32 %v3137, 7
      %v3139 = vsub.s32 %v3096, %v3138
      %v3140 = vrot.slane %v3063, %v3139
      %v3141 = vlaneseq
      %v3142 = vshrl.u32 %v3141, 7
      %v3143 = vsub.s32 %v3096, %v3142
      %v3144 = vrot.slane %v3066, %v3143
      %v3145 = vlaneseq
      %v3146 = vshrl.u32 %v3145, 7
      %v3147 = vsub.s32 %v3096, %v3146
      %v3148 = vrot.slane %v3069, %v3147
      %v3149 = vlaneseq
      %v3150 = vshrl.u32 %v3149, 7
      %v3151 = vsub.s32 %v3096, %v3150
      %v3152 = vrot.slane %v3072, %v3151
      %v3153 = vlaneseq
      %v3154 = vshrl.u32 %v3153, 7
      %v3155 = vsub.s32 %v3096, %v3154
      %v3156 = vrot.slane %v3075, %v3155
      %v3157 = vlaneseq
      %v3158 = vshrl.u32 %v3157, 7
      %v3159 = vsub.s32 %v3096, %v3158
      %v3160 = vrot.slane %v3078, %v3159
      %vm3161 = vcmask 1041409
      %v3162 = vsel %vm3161, %v3104, %v3100
      %vm3163 = vcmask 1042434
      %v3164 = vsel %vm3163, %v3108, %v3162
      %vm3165 = vcmask 1043459
      %v3166 = vsel %vm3165, %v3112, %v3164
      %vm3167 = vcmask 1044484
      %v3168 = vsel %vm3167, %v3116, %v3166
      %vm3169 = vcmask 1045509
      %v3170 = vsel %vm3169, %v3120, %v3168
      %vm3171 = vcmask 1046534
      %v3172 = vsel %vm3171, %v3124, %v3170
      %vm3173 = vcmask 1047559
      %v3174 = vsel %vm3173, %v3128, %v3172
      %v3175 = vsel %vm3161, %v3136, %v3132
      %v3176 = vsel %vm3163, %v3140, %v3175
      %v3177 = vsel %vm3165, %v3144, %v3176
      %v3178 = vsel %vm3167, %v3148, %v3177
      %v3179 = vsel %vm3169, %v3152, %v3178
      %v3180 = vsel %vm3171, %v3156, %v3179
      %v3181 = vsel %vm3173, %v3160, %v3180
      %3184 = vxpose.xlu0.b32.start [1/16] %v3174, 128
      %3185 = vxpose.xlu0.b32.cont [2/16] %v3181, 128
      %3186 = vxpose.xlu0.b32.cont [3/16] 0.0, 128
      %3187 = vxpose.xlu0.b32.cont [4/16] 0.0, 128
      %3188 = vxpose.xlu0.b32.cont [5/16] 0.0, 128
      %3189 = vxpose.xlu0.b32.cont [6/16] 0.0, 128
      %3190 = vxpose.xlu0.b32.cont [7/16] 0.0, 128
      %3191 = vxpose.xlu0.b32.cont [8/16] 0.0, 128
      %3192 = vxpose.xlu0.b32.cont [9/16] 0.0, 128
      %3193 = vxpose.xlu0.b32.cont [10/16] 0.0, 128
      %3194 = vxpose.xlu0.b32.cont [11/16] 0.0, 128
      %3195 = vxpose.xlu0.b32.cont [12/16] 0.0, 128
      %3196 = vxpose.xlu0.b32.cont [13/16] 0.0, 128
      %3197 = vxpose.xlu0.b32.cont [14/16] 0.0, 128
      %3198 = vxpose.xlu0.b32.cont [15/16] 0.0, 128
      %3199 = vxpose.xlu0.b32.end [16/16] 0.0, 128
      %v3200 = vpop.trf.xlu0
      %v3201 = vpop.trf.xlu0
      %v3202 = vpop.trf.xlu0
      %v3203 = vpop.trf.xlu0
      %v3204 = vpop.trf.xlu0
      %v3205 = vpop.trf.xlu0
      %v3206 = vpop.trf.xlu0
      %v3207 = vpop.trf.xlu0
      %v3208 = vpop.trf.xlu0
      %v3209 = vpop.trf.xlu0
      %v3210 = vpop.trf.xlu0
      %v3211 = vpop.trf.xlu0
      %v3212 = vpop.trf.xlu0
      %v3213 = vpop.trf.xlu0
      %v3214 = vpop.trf.xlu0
      %v3215 = vpop.trf.xlu0
      %vm3216 = vcmask 130048
      %v3217 = vsel %vm3216, %v3200, 0.0
      %3218 = vadd.xlane.f32.xlu0 %v3217
      %v3219 = vpop.xlane.xlu0 %3218
      %v3220 = vrcp.pop 16.0
      %v3221 = vmul.f32 %v3219, %v3220
      %v3222 = vsub.f32 %v3200, %v3221
      %v3223 = vld [vmem:[%s2] sm:$0xff]
      %v3224 = vld [vmem:[%s2 + $0x8] sm:$0xff]
      %v3226 = vsel %vm3216, %v3222, 0
      %3228 = vmatprep.subr.mxu0 0.0
      %v3229 = vand.u32 %v3223, 4294901760
      %3230 = vmatpush1.msra.mxu0 %v3229
      %3231 = vmatprep.subr.mxu0 0.0
      %v3232 = vand.u32 %v3224, 4294901760
      %3233 = vmatpush1.msra.mxu0 %v3232
      %3234 = vmatprep.subr.mxu0 0.0
      %3235 = vmatpush1.msra.mxu0 0.0
      %3236 = vmatprep.subr.mxu0 0.0
      %3237 = vmatpush1.msra.mxu0 0.0
      %3238 = vmatprep.subr.mxu0 0.0
      %3239 = vmatpush1.msra.mxu0 0.0
      %3240 = vmatprep.subr.mxu0 0.0
      %3241 = vmatpush1.msra.mxu0 0.0
      %3242 = vmatprep.subr.mxu0 0.0
      %3243 = vmatpush1.msra.mxu0 0.0
      %3244 = vmatprep.subr.mxu0 0.0
      %3245 = vmatpush1.msra.mxu0 0.0
      %3246 = vmatprep.subr.mxu0 0.0
      %3247 = vmatpush1.msra.mxu0 0.0
      %3248 = vmatprep.subr.mxu0 0.0
      %3249 = vmatpush1.msra.mxu0 0.0
      %3250 = vmatprep.subr.mxu0 0.0
      %3251 = vmatpush1.msra.mxu0 0.0
      %3252 = vmatprep.subr.mxu0 0.0
      %3253 = vmatpush1.msra.mxu0 0.0
      %3254 = vmatprep.subr.mxu0 0.0
      %3255 = vmatpush1.msra.mxu0 0.0
      %3256 = vmatprep.subr.mxu0 0.0
      %3257 = vmatpush1.msra.mxu0 0.0
      %3258 = vmatprep.subr.mxu0 0.0
      %3259 = vmatpush1.msra.mxu0 0.0
      %3260 = vmatprep.subr.mxu0 0.0
      %3261 = vmatpush1.msra.mxu0 0.0
      %3262 = vmatprep.subr.mxu0 0.0
      %3263 = vmatpush1.msra.mxu0 0.0
      %3264 = vmatprep.subr.mxu0 0.0
      %3265 = vmatpush1.msra.mxu0 0.0
      %3266 = vmatprep.subr.mxu0 0.0
      %3267 = vmatpush1.msra.mxu0 0.0
      %3268 = vmatprep.subr.mxu0 0.0
      %3269 = vmatpush1.msra.mxu0 0.0
      %3270 = vmatprep.subr.mxu0 0.0
      %3271 = vmatpush1.msra.mxu0 0.0
      %3272 = vmatprep.subr.mxu0 0.0
      %3273 = vmatpush1.msra.mxu0 0.0
      %3274 = vmatprep.subr.mxu0 0.0
      %3275 = vmatpush1.msra.mxu0 0.0
      %3276 = vmatprep.subr.mxu0 0.0
      %3277 = vmatpush1.msra.mxu0 0.0
      %3278 = vmatprep.subr.mxu0 0.0
      %3279 = vmatpush1.msra.mxu0 0.0
      %3280 = vmatprep.subr.mxu0 0.0
      %3281 = vmatpush1.msra.mxu0 0.0
      %3282 = vmatprep.subr.mxu0 0.0
      %3283 = vmatpush1.msra.mxu0 0.0
      %3284 = vmatprep.subr.mxu0 0.0
      %3285 = vmatpush1.msra.mxu0 0.0
      %3286 = vmatprep.subr.mxu0 0.0
      %3287 = vmatpush1.msra.mxu0 0.0
      %3288 = vmatprep.subr.mxu0 0.0
      %3289 = vmatpush1.msra.mxu0 0.0
      %3290 = vmatprep.subr.mxu0 0.0
      %3291 = vmatpush1.msra.mxu0 0.0
      %3292 = vmatprep.subr.mxu0 0.0
      %3293 = vmatpush1.msra.mxu0 0.0
      %3294 = vmatprep.mubr.f32.mxu0 0.0
      %v3295 = vand.u32 %v3226, 4294901760
      %v3296 = vsub.f32 %v3226, %v3295
      %v3297 = vand.u32 %v3296, 4294901760
      %v3298 = vsub.f32 %v3296, %v3297
      %v3299 = vand.u32 %v3298, 4294901760
      %3300 = vmatmul.mubr.f32.gmra.mrb[0].mxu0 %v3299
      %v3301 = vpop.f32.mrb[0].mxu0
      %v3302 = vadd.f32 0.0, %v3301
      %v3303 = vpop.f32.mrb[0].mxu0
      %3304 = vdwg.mxu0
      %3305 = vmatprep.subr.mxu0 0.0
      %v3306 = vand.u32 %v3223, 4294901760
      %v3307 = vsub.f32 %v3223, %v3306
      %v3308 = vand.u32 %v3307, 4294901760
      %v3309 = vsub.f32 %v3307, %v3308
      %v3310 = vand.u32 %v3309, 4294901760
      %3311 = vmatpush1.msra.mxu0 %v3310
      %3312 = vmatprep.subr.mxu0 0.0
      %v3313 = vand.u32 %v3224, 4294901760
      %v3314 = vsub.f32 %v3224, %v3313
      %v3315 = vand.u32 %v3314, 4294901760
      %v3316 = vsub.f32 %v3314, %v3315
      %v3317 = vand.u32 %v3316, 4294901760
      %3318 = vmatpush1.msra.mxu0 %v3317
      %3319 = vmatprep.subr.mxu0 0.0
      %3320 = vmatpush1.msra.mxu0 0.0
      %3321 = vmatprep.subr.mxu0 0.0
      %3322 = vmatpush1.msra.mxu0 0.0
      %3323 = vmatprep.subr.mxu0 0.0
      %3324 = vmatpush1.msra.mxu0 0.0
      %3325 = vmatprep.subr.mxu0 0.0
      %3326 = vmatpush1.msra.mxu0 0.0
      %3327 = vmatprep.subr.mxu0 0.0
      %3328 = vmatpush1.msra.mxu0 0.0
      %3329 = vmatprep.subr.mxu0 0.0
      %3330 = vmatpush1.msra.mxu0 0.0
      %3331 = vmatprep.subr.mxu0 0.0
      %3332 = vmatpush1.msra.mxu0 0.0
      %3333 = vmatprep.subr.mxu0 0.0
      %3334 = vmatpush1.msra.mxu0 0.0
      %3335 = vmatprep.subr.mxu0 0.0
      %3336 = vmatpush1.msra.mxu0 0.0
      %3337 = vmatprep.subr.mxu0 0.0
      %3338 = vmatpush1.msra.mxu0 0.0
      %3339 = vmatprep.subr.mxu0 0.0
      %3340 = vmatpush1.msra.mxu0 0.0
      %3341 = vmatprep.subr.mxu0 0.0
      %3342 = vmatpush1.msra.mxu0 0.0
      %3343 = vmatprep.subr.mxu0 0.0
      %3344 = vmatpush1.msra.mxu0 0.0
      %3345 = vmatprep.subr.mxu0 0.0
      %3346 = vmatpush1.msra.mxu0 0.0
      %3347 = vmatprep.subr.mxu0 0.0
      %3348 = vmatpush1.msra.mxu0 0.0
      %3349 = vmatprep.subr.mxu0 0.0
      %3350 = vmatpush1.msra.mxu0 0.0
      %3351 = vmatprep.subr.mxu0 0.0
      %3352 = vmatpush1.msra.mxu0 0.0
      %3353 = vmatprep.subr.mxu0 0.0
      %3354 = vmatpush1.msra.mxu0 0.0
      %3355 = vmatprep.subr.mxu0 0.0
      %3356 = vmatpush1.msra.mxu0 0.0
      %3357 = vmatprep.subr.mxu0 0.0
      %3358 = vmatpush1.msra.mxu0 0.0
      %3359 = vmatprep.subr.mxu0 0.0
      %3360 = vmatpush1.msra.mxu0 0.0
      %3361 = vmatprep.subr.mxu0 0.0
      %3362 = vmatpush1.msra.mxu0 0.0
      %3363 = vmatprep.subr.mxu0 0.0
      %3364 = vmatpush1.msra.mxu0 0.0
      %3365 = vmatprep.subr.mxu0 0.0
      %3366 = vmatpush1.msra.mxu0 0.0
      %3367 = vmatprep.subr.mxu0 0.0
      %3368 = vmatpush1.msra.mxu0 0.0
      %3369 = vmatprep.subr.mxu0 0.0
      %3370 = vmatpush1.msra.mxu0 0.0
      %3371 = vmatprep.subr.mxu0 0.0
      %3372 = vmatpush1.msra.mxu0 0.0
      %3373 = vmatprep.subr.mxu0 0.0
      %3374 = vmatpush1.msra.mxu0 0.0
      %3375 = vmatprep.subr.mxu0 0.0
      %3376 = vmatpush1.msra.mxu0 0.0
      %3377 = vmatprep.subr.mxu0 0.0
      %3378 = vmatpush1.msra.mxu0 0.0
      %3379 = vmatprep.mubr.f32.mxu0 0.0
      %v3380 = vand.u32 %v3226, 4294901760
      %3381 = vmatmul.mubr.f32.gmra.mrb[0].mxu0 %v3380
      %v3382 = vpop.f32.mrb[0].mxu0
      %v3383 = vadd.f32 %v3302, %v3382
      %v3384 = vpop.f32.mrb[0].mxu0
      %3385 = vdwg.mxu0
      %3386 = vmatprep.subr.mxu0 0.0
      %v3387 = vand.u32 %v3223, 4294901760
      %v3388 = vsub.f32 %v3223, %v3387
      %3389 = vmatpush1.msra.mxu0 %v3388
      %3390 = vmatprep.subr.mxu0 0.0
      %v3391 = vand.u32 %v3224, 4294901760
      %v3392 = vsub.f32 %v3224, %v3391
      %3393 = vmatpush1.msra.mxu0 %v3392
      %3394 = vmatprep.subr.mxu0 0.0
      %3395 = vmatpush1.msra.mxu0 0.0
      %3396 = vmatprep.subr.mxu0 0.0
      %3397 = vmatpush1.msra.mxu0 0.0
      %3398 = vmatprep.subr.mxu0 0.0
      %3399 = vmatpush1.msra.mxu0 0.0
      %3400 = vmatprep.subr.mxu0 0.0
      %3401 = vmatpush1.msra.mxu0 0.0
      %3402 = vmatprep.subr.mxu0 0.0
      %3403 = vmatpush1.msra.mxu0 0.0
      %3404 = vmatprep.subr.mxu0 0.0
      %3405 = vmatpush1.msra.mxu0 0.0
      %3406 = vmatprep.subr.mxu0 0.0
      %3407 = vmatpush1.msra.mxu0 0.0
      %3408 = vmatprep.subr.mxu0 0.0
      %3409 = vmatpush1.msra.mxu0 0.0
      %3410 = vmatprep.subr.mxu0 0.0
      %3411 = vmatpush1.msra.mxu0 0.0
      %3412 = vmatprep.subr.mxu0 0.0
      %3413 = vmatpush1.msra.mxu0 0.0
      %3414 = vmatprep.subr.mxu0 0.0
      %3415 = vmatpush1.msra.mxu0 0.0
      %3416 = vmatprep.subr.mxu0 0.0
      %3417 = vmatpush1.msra.mxu0 0.0
      %3418 = vmatprep.subr.mxu0 0.0
      %3419 = vmatpush1.msra.mxu0 0.0
      %3420 = vmatprep.subr.mxu0 0.0
      %3421 = vmatpush1.msra.mxu0 0.0
      %3422 = vmatprep.subr.mxu0 0.0
      %3423 = vmatpush1.msra.mxu0 0.0
      %3424 = vmatprep.subr.mxu0 0.0
      %3425 = vmatpush1.msra.mxu0 0.0
      %3426 = vmatprep.subr.mxu0 0.0
      %3427 = vmatpush1.msra.mxu0 0.0
      %3428 = vmatprep.subr.mxu0 0.0
      %3429 = vmatpush1.msra.mxu0 0.0
      %3430 = vmatprep.subr.mxu0 0.0
      %3431 = vmatpush1.msra.mxu0 0.0
      %3432 = vmatprep.subr.mxu0 0.0
      %3433 = vmatpush1.msra.mxu0 0.0
      %3434 = vmatprep.subr.mxu0 0.0
      %3435 = vmatpush1.msra.mxu0 0.0
      %3436 = vmatprep.subr.mxu0 0.0
      %3437 = vmatpush1.msra.mxu0 0.0
      %3438 = vmatprep.subr.mxu0 0.0
      %3439 = vmatpush1.msra.mxu0 0.0
      %3440 = vmatprep.subr.mxu0 0.0
      %3441 = vmatpush1.msra.mxu0 0.0
      %3442 = vmatprep.subr.mxu0 0.0
      %3443 = vmatpush1.msra.mxu0 0.0
      %3444 = vmatprep.subr.mxu0 0.0
      %3445 = vmatpush1.msra.mxu0 0.0
      %3446 = vmatprep.subr.mxu0 0.0
      %3447 = vmatpush1.msra.mxu0 0.0
      %3448 = vmatprep.subr.mxu0 0.0
      %3449 = vmatpush1.msra.mxu0 0.0
      %3450 = vmatprep.subr.mxu0 0.0
      %3451 = vmatpush1.msra.mxu0 0.0
      %3452 = vmatprep.subr.mxu0 0.0
      %3453 = vmatpush1.msra.mxu0 0.0
      %3454 = vmatprep.mubr.f32.mxu0 0.0
      %v3455 = vand.u32 %v3226, 4294901760
      %v3456 = vsub.f32 %v3226, %v3455
      %3457 = vmatmul.mubr.f32.gmra.mrb[0].mxu0 %v3456
      %v3458 = vpop.f32.mrb[0].mxu0
      %v3459 = vadd.f32 %v3383, %v3458
      %v3460 = vpop.f32.mrb[0].mxu0
      %3461 = vdwg.mxu0
      %3462 = vmatprep.subr.mxu0 0.0
      %v3463 = vand.u32 %v3223, 4294901760
      %3464 = vmatpush1.msra.mxu0 %v3463
      %3465 = vmatprep.subr.mxu0 0.0
      %v3466 = vand.u32 %v3224, 4294901760
      %3467 = vmatpush1.msra.mxu0 %v3466
      %3468 = vmatprep.subr.mxu0 0.0
      %3469 = vmatpush1.msra.mxu0 0.0
      %3470 = vmatprep.subr.mxu0 0.0
      %3471 = vmatpush1.msra.mxu0 0.0
      %3472 = vmatprep.subr.mxu0 0.0
      %3473 = vmatpush1.msra.mxu0 0.0
      %3474 = vmatprep.subr.mxu0 0.0
      %3475 = vmatpush1.msra.mxu0 0.0
      %3476 = vmatprep.subr.mxu0 0.0
      %3477 = vmatpush1.msra.mxu0 0.0
      %3478 = vmatprep.subr.mxu0 0.0
      %3479 = vmatpush1.msra.mxu0 0.0
      %3480 = vmatprep.subr.mxu0 0.0
      %3481 = vmatpush1.msra.mxu0 0.0
      %3482 = vmatprep.subr.mxu0 0.0
      %3483 = vmatpush1.msra.mxu0 0.0
      %3484 = vmatprep.subr.mxu0 0.0
      %3485 = vmatpush1.msra.mxu0 0.0
      %3486 = vmatprep.subr.mxu0 0.0
      %3487 = vmatpush1.msra.mxu0 0.0
      %3488 = vmatprep.subr.mxu0 0.0
      %3489 = vmatpush1.msra.mxu0 0.0
      %3490 = vmatprep.subr.mxu0 0.0
      %3491 = vmatpush1.msra.mxu0 0.0
      %3492 = vmatprep.subr.mxu0 0.0
      %3493 = vmatpush1.msra.mxu0 0.0
      %3494 = vmatprep.subr.mxu0 0.0
      %3495 = vmatpush1.msra.mxu0 0.0
      %3496 = vmatprep.subr.mxu0 0.0
      %3497 = vmatpush1.msra.mxu0 0.0
      %3498 = vmatprep.subr.mxu0 0.0
      %3499 = vmatpush1.msra.mxu0 0.0
      %3500 = vmatprep.subr.mxu0 0.0
      %3501 = vmatpush1.msra.mxu0 0.0
      %3502 = vmatprep.subr.mxu0 0.0
      %3503 = vmatpush1.msra.mxu0 0.0
      %3504 = vmatprep.subr.mxu0 0.0
      %3505 = vmatpush1.msra.mxu0 0.0
      %3506 = vmatprep.subr.mxu0 0.0
      %3507 = vmatpush1.msra.mxu0 0.0
      %3508 = vmatprep.subr.mxu0 0.0
      %3509 = vmatpush1.msra.mxu0 0.0
      %3510 = vmatprep.subr.mxu0 0.0
      %3511 = vmatpush1.msra.mxu0 0.0
      %3512 = vmatprep.subr.mxu0 0.0
      %3513 = vmatpush1.msra.mxu0 0.0
      %3514 = vmatprep.subr.mxu0 0.0
      %3515 = vmatpush1.msra.mxu0 0.0
      %3516 = vmatprep.subr.mxu0 0.0
      %3517 = vmatpush1.msra.mxu0 0.0
      %3518 = vmatprep.subr.mxu0 0.0
      %3519 = vmatpush1.msra.mxu0 0.0
      %3520 = vmatprep.subr.mxu0 0.0
      %3521 = vmatpush1.msra.mxu0 0.0
      %3522 = vmatprep.subr.mxu0 0.0
      %3523 = vmatpush1.msra.mxu0 0.0
      %3524 = vmatprep.subr.mxu0 0.0
      %3525 = vmatpush1.msra.mxu0 0.0
      %3526 = vmatprep.subr.mxu0 0.0
      %3527 = vmatpush1.msra.mxu0 0.0
      %3528 = vmatprep.mubr.f32.mxu0 0.0
      %v3529 = vand.u32 %v3226, 4294901760
      %v3530 = vsub.f32 %v3226, %v3529
      %v3531 = vand.u32 %v3530, 4294901760
      %3532 = vmatmul.mubr.f32.gmra.mrb[0].mxu0 %v3531
      %v3533 = vpop.f32.mrb[0].mxu0
      %v3534 = vadd.f32 %v3459, %v3533
      %v3535 = vpop.f32.mrb[0].mxu0
      %3536 = vdwg.mxu0
      %3537 = vmatprep.subr.mxu0 0.0
      %v3538 = vand.u32 %v3223, 4294901760
      %v3539 = vsub.f32 %v3223, %v3538
      %v3540 = vand.u32 %v3539, 4294901760
      %3541 = vmatpush1.msra.mxu0 %v3540
      %3542 = vmatprep.subr.mxu0 0.0
      %v3543 = vand.u32 %v3224, 4294901760
      %v3544 = vsub.f32 %v3224, %v3543
      %v3545 = vand.u32 %v3544, 4294901760
      %3546 = vmatpush1.msra.mxu0 %v3545
      %3547 = vmatprep.subr.mxu0 0.0
      %3548 = vmatpush1.msra.mxu0 0.0
      %3549 = vmatprep.subr.mxu0 0.0
      %3550 = vmatpush1.msra.mxu0 0.0
      %3551 = vmatprep.subr.mxu0 0.0
      %3552 = vmatpush1.msra.mxu0 0.0
      %3553 = vmatprep.subr.mxu0 0.0
      %3554 = vmatpush1.msra.mxu0 0.0
      %3555 = vmatprep.subr.mxu0 0.0
      %3556 = vmatpush1.msra.mxu0 0.0
      %3557 = vmatprep.subr.mxu0 0.0
      %3558 = vmatpush1.msra.mxu0 0.0
      %3559 = vmatprep.subr.mxu0 0.0
      %3560 = vmatpush1.msra.mxu0 0.0
      %3561 = vmatprep.subr.mxu0 0.0
      %3562 = vmatpush1.msra.mxu0 0.0
      %3563 = vmatprep.subr.mxu0 0.0
      %3564 = vmatpush1.msra.mxu0 0.0
      %3565 = vmatprep.subr.mxu0 0.0
      %3566 = vmatpush1.msra.mxu0 0.0
      %3567 = vmatprep.subr.mxu0 0.0
      %3568 = vmatpush1.msra.mxu0 0.0
      %3569 = vmatprep.subr.mxu0 0.0
      %3570 = vmatpush1.msra.mxu0 0.0
      %3571 = vmatprep.subr.mxu0 0.0
      %3572 = vmatpush1.msra.mxu0 0.0
      %3573 = vmatprep.subr.mxu0 0.0
      %3574 = vmatpush1.msra.mxu0 0.0
      %3575 = vmatprep.subr.mxu0 0.0
      %3576 = vmatpush1.msra.mxu0 0.0
      %3577 = vmatprep.subr.mxu0 0.0
      %3578 = vmatpush1.msra.mxu0 0.0
      %3579 = vmatprep.subr.mxu0 0.0
      %3580 = vmatpush1.msra.mxu0 0.0
      %3581 = vmatprep.subr.mxu0 0.0
      %3582 = vmatpush1.msra.mxu0 0.0
      %3583 = vmatprep.subr.mxu0 0.0
      %3584 = vmatpush1.msra.mxu0 0.0
      %3585 = vmatprep.subr.mxu0 0.0
      %3586 = vmatpush1.msra.mxu0 0.0
      %3587 = vmatprep.subr.mxu0 0.0
      %3588 = vmatpush1.msra.mxu0 0.0
      %3589 = vmatprep.subr.mxu0 0.0
      %3590 = vmatpush1.msra.mxu0 0.0
      %3591 = vmatprep.subr.mxu0 0.0
      %3592 = vmatpush1.msra.mxu0 0.0
      %3593 = vmatprep.subr.mxu0 0.0
      %3594 = vmatpush1.msra.mxu0 0.0
      %3595 = vmatprep.subr.mxu0 0.0
      %3596 = vmatpush1.msra.mxu0 0.0
      %3597 = vmatprep.subr.mxu0 0.0
      %3598 = vmatpush1.msra.mxu0 0.0
      %3599 = vmatprep.subr.mxu0 0.0
      %3600 = vmatpush1.msra.mxu0 0.0
      %3601 = vmatprep.subr.mxu0 0.0
      %3602 = vmatpush1.msra.mxu0 0.0
      %3603 = vmatprep.subr.mxu0 0.0
      %3604 = vmatpush1.msra.mxu0 0.0
      %3605 = vmatprep.subr.mxu0 0.0
      %3606 = vmatpush1.msra.mxu0 0.0
      %3607 = vmatprep.mubr.f32.mxu0 0.0
      %v3608 = vand.u32 %v3226, 4294901760
      %3609 = vmatmul.mubr.f32.gmra.mrb[0].mxu0 %v3608
      %v3610 = vpop.f32.mrb[0].mxu0
      %v3611 = vadd.f32 %v3534, %v3610
      %v3612 = vpop.f32.mrb[0].mxu0
      %3613 = vdwg.mxu0
      %3614 = vmatprep.subr.mxu0 0.0
      %v3615 = vand.u32 %v3223, 4294901760
      %3616 = vmatpush1.msra.mxu0 %v3615
      %3617 = vmatprep.subr.mxu0 0.0
      %v3618 = vand.u32 %v3224, 4294901760
      %3619 = vmatpush1.msra.mxu0 %v3618
      %3620 = vmatprep.subr.mxu0 0.0
      %3621 = vmatpush1.msra.mxu0 0.0
      %3622 = vmatprep.subr.mxu0 0.0
      %3623 = vmatpush1.msra.mxu0 0.0
      %3624 = vmatprep.subr.mxu0 0.0
      %3625 = vmatpush1.msra.mxu0 0.0
      %3626 = vmatprep.subr.mxu0 0.0
      %3627 = vmatpush1.msra.mxu0 0.0
      %3628 = vmatprep.subr.mxu0 0.0
      %3629 = vmatpush1.msra.mxu0 0.0
      %3630 = vmatprep.subr.mxu0 0.0
      %3631 = vmatpush1.msra.mxu0 0.0
      %3632 = vmatprep.subr.mxu0 0.0
      %3633 = vmatpush1.msra.mxu0 0.0
      %3634 = vmatprep.subr.mxu0 0.0
      %3635 = vmatpush1.msra.mxu0 0.0
      %3636 = vmatprep.subr.mxu0 0.0
      %3637 = vmatpush1.msra.mxu0 0.0
      %3638 = vmatprep.subr.mxu0 0.0
      %3639 = vmatpush1.msra.mxu0 0.0
      %3640 = vmatprep.subr.mxu0 0.0
      %3641 = vmatpush1.msra.mxu0 0.0
      %3642 = vmatprep.subr.mxu0 0.0
      %3643 = vmatpush1.msra.mxu0 0.0
      %3644 = vmatprep.subr.mxu0 0.0
      %3645 = vmatpush1.msra.mxu0 0.0
      %3646 = vmatprep.subr.mxu0 0.0
      %3647 = vmatpush1.msra.mxu0 0.0
      %3648 = vmatprep.subr.mxu0 0.0
      %3649 = vmatpush1.msra.mxu0 0.0
      %3650 = vmatprep.subr.mxu0 0.0
      %3651 = vmatpush1.msra.mxu0 0.0
      %3652 = vmatprep.subr.mxu0 0.0
      %3653 = vmatpush1.msra.mxu0 0.0
      %3654 = vmatprep.subr.mxu0 0.0
      %3655 = vmatpush1.msra.mxu0 0.0
      %3656 = vmatprep.subr.mxu0 0.0
      %3657 = vmatpush1.msra.mxu0 0.0
      %3658 = vmatprep.subr.mxu0 0.0
      %3659 = vmatpush1.msra.mxu0 0.0
      %3660 = vmatprep.subr.mxu0 0.0
      %3661 = vmatpush1.msra.mxu0 0.0
      %3662 = vmatprep.subr.mxu0 0.0
      %3663 = vmatpush1.msra.mxu0 0.0
      %3664 = vmatprep.subr.mxu0 0.0
      %3665 = vmatpush1.msra.mxu0 0.0
      %3666 = vmatprep.subr.mxu0 0.0
      %3667 = vmatpush1.msra.mxu0 0.0
      %3668 = vmatprep.subr.mxu0 0.0
      %3669 = vmatpush1.msra.mxu0 0.0
      %3670 = vmatprep.subr.mxu0 0.0
      %3671 = vmatpush1.msra.mxu0 0.0
      %3672 = vmatprep.subr.mxu0 0.0
      %3673 = vmatpush1.msra.mxu0 0.0
      %3674 = vmatprep.subr.mxu0 0.0
      %3675 = vmatpush1.msra.mxu0 0.0
      %3676 = vmatprep.subr.mxu0 0.0
      %3677 = vmatpush1.msra.mxu0 0.0
      %3678 = vmatprep.subr.mxu0 0.0
      %3679 = vmatpush1.msra.mxu0 0.0
      %3680 = vmatprep.mubr.f32.mxu0 0.0
      %v3681 = vand.u32 %v3226, 4294901760
      %3682 = vmatmul.mubr.f32.gmra.mrb[0].mxu0 %v3681
      %v3683 = vpop.f32.mrb[0].mxu0
      %v3684 = vadd.f32 %v3611, %v3683
      %v3685 = vpop.f32.mrb[0].mxu0
      %3686 = vdwg.mxu0
      %v3687 = vmul.f32 %v3684, %v3684
      %3689 = vrot.lane.b32.xlu0 %v3687, 120
      %v3690 = vpop.permute.xlu0 %3689
      %v3692 = vadd.f32 %v3687, %v3690
      %vm3693 = vcmask 64512
      %v3694 = vsel %vm3693, %v3692, 0.0
      %3695 = vadd.xlane.f32.xlu0 %v3694
      %v3696 = vpop.xlane.xlu0 %3695
      %v3697 = vadd.f32 %v3696, 1e-06
      %v3698 = vrcp.pop %v3697
      %v3699 = vmul.f32 %v3692, %v3698
      %3701 = vrot.lane.b32.xlu0 %v3699, 16
      %v3702 = vpop.permute.xlu0 %3701
      %v3704 = vsel %vm3216, %v3222, %v3702
      %vm3705 = vcmask 195584
      %3706 = vst.msk [vmem:[%s170] sm:$0xff] %vm3705, %v3704
      %p3707 = scmp.lt.s32.totalorder %s14, 1
      %s3708 = scalar_select %p3707, %s14, 1
      %s3709 = smul.addr %s3708, 8
      %s3710 = scalar_lea.vmem %s3, %s3709
      // Predicated region
      $region33: #{_lambda_.1} parent=31 // pred_check
        %p3711 = pneg %p100
      $region34: #{_lambda_.1} parent=31 // pred_check_branch
        %3713 = sbr.rel (%p3711) target = $region36
      $region35: #{_lambda_.1} parent=31 // pred_region
        _
      $region36: #{_lambda_.1} parent=31 // pred_fallthru
        _
    $region32: #{_lambda_.1} parent=5 // pred_fallthru
      _
    %p3714 = scmp.le.s32.totalorder 2, %s9
    // Predicated region
    $region37: #{_lambda_.1} parent=5 // pred_check
      %p3715 = pneg %p3714
    $region38: #{_lambda_.1} parent=5 // pred_check_branch
      %3717 = sbr.rel (%p3715) target = $region40
    $region39: #{_lambda_.1} parent=5 // pred_region
      %s3718 = ssub.s32 %s9, 2
      // Predicated region
      $region41: #{_lambda_.1} parent=39 // pred_check
        %p3719 = pneg %p106
      $region42: #{_lambda_.1} parent=39 // pred_check_branch
        %3721 = sbr.rel (%p3719) target = $region44
      $region43: #{_lambda_.1} parent=39 // pred_region
        %p3722 = scmp.lt.s32.totalorder %s15, 1
        %s3723 = scalar_select %p3722, %s15, 1
        %s3724 = smul.addr %s3723, 8
        %s3725 = scalar_lea.vmem %s3, %s3724
      $region44: #{_lambda_.1} parent=39 // pred_fallthru
        _
    $region40: #{_lambda_.1} parent=5 // pred_fallthru
      _
  $region6: #{_lambda_.1} parent=0 // loop_footer
    %s13 = sadd.s32 1, %s9
  $region7: #{_lambda_.1} parent=0 // loop_footer_branch
    %8 = sbr.rel target = $region3
  $region8: #{_lambda_.1} parent=0 // loop_exit
    _

</llo_original>
